<compile_context>
chip_gen: v6e
topology: v6e:2x2x1
jax: 0.10.0
libtpu: 0.0.40
codegen_flags: <defaults>
</compile_context>

<pallas_src>
import jax
import jax.numpy as jnp
from jax import lax
from jax.experimental import pallas as pl
from jax.experimental.pallas import tpu as pltpu
import numpy as np


def cope_kernel(attn_ref, li_ref, rc_ref, out_ref):
    """One (batch, Tq-tile) block.

    attn_ref: (1, tq, Tk)   f32   raw attention logits
    li_ref:   (1, tq, npos) f32   query @ pos_emb (precomputed outside the kernel)
    rc_ref:   (Tk, Tk)      bf16  lower-triangular ones (reverse-cumsum matrix), resident
    out_ref:  (1, tq, Tk)   f32
    """
    qi = pl.program_id(1)

    attn = attn_ref[0]          # (tq, Tk)
    li = li_ref[0]              # (tq, npos)
    rc = rc_ref[...]            # (Tk, Tk) bf16

    tq, tk = attn.shape
    npos = li.shape[-1]

    # gates = tril(sigmoid(attn_logits)); row indices are global since Tq is tiled.
    gates = jax.nn.sigmoid(attn)
    row = lax.broadcasted_iota(jnp.int32, (tq, tk), 0) + qi * tq
    col = lax.broadcasted_iota(jnp.int32, (tq, tk), 1)
    gates = jnp.where(col <= row, gates, 0.0)

    # Reverse cumsum along the key axis on the MXU:
    #   pos[i, j] = sum_{k >= j} gates[i, k]
    # gates is split into three exact bf16 terms (g1+g2+g3 == gates in f32) so
    # the matmuls run with bf16 operands but reproduce f32 accuracy.
    g1 = gates.astype(jnp.bfloat16)
    r1 = gates - g1.astype(jnp.float32)
    g2 = r1.astype(jnp.bfloat16)
    g3 = (r1 - g2.astype(jnp.float32)).astype(jnp.bfloat16)
    pos = (jnp.dot(g1, rc, preferred_element_type=jnp.float32)
           + jnp.dot(g2, rc, preferred_element_type=jnp.float32)
           + jnp.dot(g3, rc, preferred_element_type=jnp.float32))
    pos = jnp.minimum(pos, float(npos - 1))   # clamp(max=npos-1); pos >= 0 already

    # Gather + linear interpolation of li at `pos` as a tent-weight sum over the
    # (small, static) npos axis.  Equals logits_ceil*w + logits_floor*(1-w).
    cope = jnp.zeros((tq, tk), jnp.float32)
    for n in range(npos):
        w = jnp.maximum(1.0 - jnp.abs(pos - float(n)), 0.0)
        cope = cope + w * li[:, n:n + 1]      # (tq,1) broadcast along lanes

    out_ref[0] = (attn + cope).astype(out_ref.dtype)


def _choose_tq(Tq, Tk, npos, budget_bytes=16 * 1024 * 1024):
    """Largest Tq tile (multiple of 8 dividing Tq) whose per-step VMEM footprint
    fits a conservative budget (sized for v7x's 64 MiB VMEM / 32 MiB scoped)."""
    def vmem_bytes(tq):
        io = (2 * tq * Tk + 2 * tq * npos + 2 * tq * Tk) * 4   # double-buffered in/out (f32)
        rc = 2 * Tk * Tk * 2                                   # resident bf16 reverse-cumsum matrix
        tmp = 8 * tq * Tk * 4                                  # in-kernel live temporaries
        return io + rc + tmp
    for cand in (512, 256, 128, 64, 32, 16, 8):
        if cand <= Tq and Tq % cand == 0 and vmem_bytes(cand) <= budget_bytes:
            return cand
    # Tiny Tq (or nothing fits): fall back to a whole-Tq block.
    # TODO(synk): for very long Tk, additionally tile Tk (scan-based reverse
    # cumsum) instead of keeping the (Tk, Tk) ones matrix resident.
    return Tq


def cope_forward(query, attn_logits, pos_emb, *, tq=None):
    """query: (B, Tq, D), attn_logits: (B, Tq, Tk), pos_emb: (D, npos)."""
    B, Tq, D = query.shape
    Ba, Tqa, Tk = attn_logits.shape
    Dp, npos = pos_emb.shape
    assert (B, Tq) == (Ba, Tqa) and Dp == D

    # One batched GEMM outside the kernel (near-peak MXU utilization in XLA;
    # shrinks the kernel's VMEM footprint and drops the K=12 in-kernel matmul).
    logits_int = jnp.einsum("btd,dn->btn", query, pos_emb).astype(jnp.float32)

    # Hoisted constant: lower-triangular ones matrix implementing the reverse
    # cumsum as a single matmul.  Exact in bf16; resident via constant index_map.
    rc_mat = jnp.tril(jnp.ones((Tk, Tk), dtype=jnp.bfloat16))

    if tq is None:
        tq = _choose_tq(Tq, Tk, npos)
    assert Tq % tq == 0, f"tq={tq} must divide Tq={Tq}"

    grid = (B, Tq // tq)
    return pl.pallas_call(
        cope_kernel,
        out_shape=jax.ShapeDtypeStruct((B, Tq, Tk), attn_logits.dtype),
        grid_spec=pltpu.PrefetchScalarGridSpec(
            num_scalar_prefetch=0,
            grid=grid,
            in_specs=[
                pl.BlockSpec((1, tq, Tk), lambda b, q: (b, q, 0)),
                pl.BlockSpec((1, tq, npos), lambda b, q: (b, q, 0)),
                pl.BlockSpec((Tk, Tk), lambda b, q: (0, 0)),
            ],
            out_specs=pl.BlockSpec((1, tq, Tk), lambda b, q: (b, q, 0)),
        ),
        compiler_params=pltpu.CompilerParams(
            dimension_semantics=("parallel", "parallel"),
            vmem_limit_bytes=32 * 1024 * 1024,   # safe on v5e/v6e/v7x
        ),
    )(attn_logits, logits_int, rc_mat)


def cope_reference(query, attn_logits, pos_emb):
    """Pure-JAX reference mirroring the PyTorch forward exactly."""
    npos = pos_emb.shape[-1]
    gates = jax.nn.sigmoid(attn_logits)
    gates = jnp.tril(gates)
    pos = jnp.flip(jnp.cumsum(jnp.flip(gates, -1), axis=-1), -1)
    pos = jnp.minimum(pos, npos - 1)          # clamp(max=npos - 1)
    pos_ceil = jnp.ceil(pos).astype(jnp.int32)
    pos_floor = jnp.floor(pos).astype(jnp.int32)
    logits_int = jnp.einsum("btd,dn->btn", query, pos_emb)
    logits_ceil = jnp.take_along_axis(logits_int, pos_ceil, axis=-1)
    logits_floor = jnp.take_along_axis(logits_int, pos_floor, axis=-1)
    w = pos - pos_floor
    return attn_logits + logits_ceil * w + logits_floor * (1.0 - w)


if __name__ == "__main__":
    # Module defaults: npos_max=64, head_dim=12.  Small but lane-dense shapes:
    # Tk = 128 keeps the output last dim a full lane width; tq = 64 exercises
    # the tiled-Tq grid path (grid = (B, Tq // tq) = (2, 2)).
    B, T, D, NPOS = 2, 128, 12, 64

    key = jax.random.PRNGKey(0)
    k_q, k_a, k_p = jax.random.split(key, 3)

    query = jax.random.normal(k_q, (B, T, D), dtype=jnp.float32)
    attn_logits = jax.random.normal(k_a, (B, T, T), dtype=jnp.float32)
    # nn.Parameter is zeros at init; use a deterministic nonzero init so the
    # kernel computes something meaningful.
    pos_emb = 0.02 * jax.random.normal(k_p, (D, NPOS), dtype=jnp.float32)

    out = cope_forward(query, attn_logits, pos_emb, tq=64)
    out = jax.block_until_ready(out)

    ref = cope_reference(query, attn_logits, pos_emb)
    # Small f32 transcendental + reduction-ordering differences between the MXU
    # reverse-cumsum and the reference flip-cumsum stay well inside these tols.
    np.testing.assert_allclose(np.asarray(out), np.asarray(ref), rtol=1e-5, atol=2e-5)

    print("KERNEL_OK")
</pallas_src>

<mosaic_0001>
module attributes {stable_mosaic.version = 11 : i64} {
  func.func @cope_kernel(%arg0: i32, %arg1: i32, %arg2: memref<1x64x128xf32, #tpu.memory_space<vmem>>, %arg3: memref<1x64x64xf32, #tpu.memory_space<vmem>>, %arg4: memref<128x128xbf16, #tpu.memory_space<vmem>>, %arg5: memref<1x64x128xf32, #tpu.memory_space<vmem>>) attributes {dimension_semantics = [#tpu.dimension_semantics<parallel>, #tpu.dimension_semantics<parallel>], iteration_bounds = array<i64: 2, 2>, scalar_prefetch = 0 : i64, scratch_operands = 0 : i64, tpu.core_type = #tpu.core_type<tc>, window_params = [{transform_indices = @transform_0, window_bounds = array<i64: 1, 64, 128>}, {transform_indices = @transform_1, window_bounds = array<i64: 1, 64, 64>}, {pipeline_mode = #tpu.pipeline_mode<synchronous>, transform_indices = @transform_2, window_bounds = array<i64: 128, 128>}, {transform_indices = @transform_3, window_bounds = array<i64: 1, 64, 128>}]} {
    %c0 = arith.constant 0 : index
    %c0_0 = arith.constant 0 : index
    %c0_1 = arith.constant 0 : index
    %0 = vector.load %arg2[%c0, %c0_0, %c0_1] : memref<1x64x128xf32, #tpu.memory_space<vmem>>, vector<1x64x128xf32>
    %1 = vector.shape_cast %0 : vector<1x64x128xf32> to vector<64x128xf32>
    %c0_2 = arith.constant 0 : index
    %c0_3 = arith.constant 0 : index
    %c0_4 = arith.constant 0 : index
    %2 = vector.load %arg3[%c0_2, %c0_3, %c0_4] : memref<1x64x64xf32, #tpu.memory_space<vmem>>, vector<1x64x64xf32>
    %3 = vector.shape_cast %2 : vector<1x64x64xf32> to vector<64x64xf32>
    %c0_5 = arith.constant 0 : index
    %c0_6 = arith.constant 0 : index
    %4 = vector.load %arg4[%c0_5, %c0_6] : memref<128x128xbf16, #tpu.memory_space<vmem>>, vector<128x128xbf16>
    %5 = arith.negf %1 : vector<64x128xf32>
    %6 = math.exp %5 : vector<64x128xf32>
    %cst = arith.constant 1.000000e+00 : f32
    %7 = vector.broadcast %cst : f32 to vector<64x128xf32>
    %8 = arith.addf %7, %6 : vector<64x128xf32>
    %9 = arith.divf %7, %8 : vector<64x128xf32>
    %10 = tpu.iota {dimensions = array<i32: 0>} : vector<64x128xi32>
    %c64_i32 = arith.constant 64 : i32
    %11 = arith.muli %arg1, %c64_i32 : i32
    %12 = vector.broadcast %11 : i32 to vector<64x128xi32>
    %13 = arith.addi %10, %12 : vector<64x128xi32>
    %14 = tpu.iota {dimensions = array<i32: 1>} : vector<64x128xi32>
    %15 = arith.cmpi sle, %14, %13 : vector<64x128xi32>
    %cst_7 = arith.constant 0.000000e+00 : f32
    %16 = vector.broadcast %cst_7 : f32 to vector<64x128xf32>
    %17 = arith.select %15, %9, %16 : vector<64x128xi1>, vector<64x128xf32>
    %18 = arith.truncf %17 : vector<64x128xf32> to vector<64x128xbf16>
    %19 = arith.extf %18 : vector<64x128xbf16> to vector<64x128xf32>
    %20 = arith.subf %17, %19 : vector<64x128xf32>
    %21 = arith.truncf %20 : vector<64x128xf32> to vector<64x128xbf16>
    %22 = arith.extf %21 : vector<64x128xbf16> to vector<64x128xf32>
    %23 = arith.subf %20, %22 : vector<64x128xf32>
    %24 = arith.truncf %23 : vector<64x128xf32> to vector<64x128xbf16>
    %cst_8 = arith.constant dense<0.000000e+00> : vector<64x128xf32>
    %25 = tpu.matmul %18, %4, %cst_8 {dimension_numbers = #tpu.dot_dimension_numbers<[1], [0], [0], [1], [0, 0, 1, 1], [], []>} : vector<64x128xbf16>, vector<128x128xbf16>, vector<64x128xf32> -> vector<64x128xf32>
    %cst_9 = arith.constant dense<0.000000e+00> : vector<64x128xf32>
    %26 = tpu.matmul %21, %4, %cst_9 {dimension_numbers = #tpu.dot_dimension_numbers<[1], [0], [0], [1], [0, 0, 1, 1], [], []>} : vector<64x128xbf16>, vector<128x128xbf16>, vector<64x128xf32> -> vector<64x128xf32>
    %27 = arith.addf %25, %26 : vector<64x128xf32>
    %cst_10 = arith.constant dense<0.000000e+00> : vector<64x128xf32>
    %28 = tpu.matmul %24, %4, %cst_10 {dimension_numbers = #tpu.dot_dimension_numbers<[1], [0], [0], [1], [0, 0, 1, 1], [], []>} : vector<64x128xbf16>, vector<128x128xbf16>, vector<64x128xf32> -> vector<64x128xf32>
    %29 = arith.addf %27, %28 : vector<64x128xf32>
    %cst_11 = arith.constant 6.300000e+01 : f32
    %30 = vector.broadcast %cst_11 : f32 to vector<64x128xf32>
    %31 = arith.minimumf %29, %30 : vector<64x128xf32>
    %cst_12 = arith.constant 0.000000e+00 : f32
    %32 = vector.broadcast %cst_12 : f32 to vector<64x128xf32>
    %cst_13 = arith.constant 0.000000e+00 : f32
    %33 = vector.broadcast %cst_13 : f32 to vector<64x128xf32>
    %34 = arith.subf %31, %33 : vector<64x128xf32>
    %35 = math.absf %34 : vector<64x128xf32>
    %cst_14 = arith.constant 1.000000e+00 : f32
    %36 = vector.broadcast %cst_14 : f32 to vector<64x128xf32>
    %37 = arith.subf %36, %35 : vector<64x128xf32>
    %cst_15 = arith.constant 0.000000e+00 : f32
    %38 = vector.broadcast %cst_15 : f32 to vector<64x128xf32>
    %39 = arith.maximumf %37, %38 : vector<64x128xf32>
    %40 = vector.extract_strided_slice %3 {offsets = [0, 0], sizes = [64, 1], strides = [1, 1]} : vector<64x64xf32> to vector<64x1xf32>
    %41 = vector.broadcast %40 : vector<64x1xf32> to vector<64x128xf32>
    %42 = arith.mulf %39, %41 : vector<64x128xf32>
    %43 = arith.addf %32, %42 : vector<64x128xf32>
    %cst_16 = arith.constant 1.000000e+00 : f32
    %44 = vector.broadcast %cst_16 : f32 to vector<64x128xf32>
    %45 = arith.subf %31, %44 : vector<64x128xf32>
    %46 = math.absf %45 : vector<64x128xf32>
    %cst_17 = arith.constant 1.000000e+00 : f32
    %47 = vector.broadcast %cst_17 : f32 to vector<64x128xf32>
    %48 = arith.subf %47, %46 : vector<64x128xf32>
    %cst_18 = arith.constant 0.000000e+00 : f32
    %49 = vector.broadcast %cst_18 : f32 to vector<64x128xf32>
    %50 = arith.maximumf %48, %49 : vector<64x128xf32>
    %51 = vector.extract_strided_slice %3 {offsets = [0, 1], sizes = [64, 1], strides = [1, 1]} : vector<64x64xf32> to vector<64x1xf32>
    %52 = vector.broadcast %51 : vector<64x1xf32> to vector<64x128xf32>
    %53 = arith.mulf %50, %52 : vector<64x128xf32>
    %54 = arith.addf %43, %53 : vector<64x128xf32>
    %cst_19 = arith.constant 2.000000e+00 : f32
    %55 = vector.broadcast %cst_19 : f32 to vector<64x128xf32>
    %56 = arith.subf %31, %55 : vector<64x128xf32>
    %57 = math.absf %56 : vector<64x128xf32>
    %cst_20 = arith.constant 1.000000e+00 : f32
    %58 = vector.broadcast %cst_20 : f32 to vector<64x128xf32>
    %59 = arith.subf %58, %57 : vector<64x128xf32>
    %cst_21 = arith.constant 0.000000e+00 : f32
    %60 = vector.broadcast %cst_21 : f32 to vector<64x128xf32>
    %61 = arith.maximumf %59, %60 : vector<64x128xf32>
    %62 = vector.extract_strided_slice %3 {offsets = [0, 2], sizes = [64, 1], strides = [1, 1]} : vector<64x64xf32> to vector<64x1xf32>
    %63 = vector.broadcast %62 : vector<64x1xf32> to vector<64x128xf32>
    %64 = arith.mulf %61, %63 : vector<64x128xf32>
    %65 = arith.addf %54, %64 : vector<64x128xf32>
    %cst_22 = arith.constant 3.000000e+00 : f32
    %66 = vector.broadcast %cst_22 : f32 to vector<64x128xf32>
    %67 = arith.subf %31, %66 : vector<64x128xf32>
    %68 = math.absf %67 : vector<64x128xf32>
    %cst_23 = arith.constant 1.000000e+00 : f32
    %69 = vector.broadcast %cst_23 : f32 to vector<64x128xf32>
    %70 = arith.subf %69, %68 : vector<64x128xf32>
    %cst_24 = arith.constant 0.000000e+00 : f32
    %71 = vector.broadcast %cst_24 : f32 to vector<64x128xf32>
    %72 = arith.maximumf %70, %71 : vector<64x128xf32>
    %73 = vector.extract_strided_slice %3 {offsets = [0, 3], sizes = [64, 1], strides = [1, 1]} : vector<64x64xf32> to vector<64x1xf32>
    %74 = vector.broadcast %73 : vector<64x1xf32> to vector<64x128xf32>
    %75 = arith.mulf %72, %74 : vector<64x128xf32>
    %76 = arith.addf %65, %75 : vector<64x128xf32>
    %cst_25 = arith.constant 4.000000e+00 : f32
    %77 = vector.broadcast %cst_25 : f32 to vector<64x128xf32>
    %78 = arith.subf %31, %77 : vector<64x128xf32>
    %79 = math.absf %78 : vector<64x128xf32>
    %cst_26 = arith.constant 1.000000e+00 : f32
    %80 = vector.broadcast %cst_26 : f32 to vector<64x128xf32>
    %81 = arith.subf %80, %79 : vector<64x128xf32>
    %cst_27 = arith.constant 0.000000e+00 : f32
    %82 = vector.broadcast %cst_27 : f32 to vector<64x128xf32>
    %83 = arith.maximumf %81, %82 : vector<64x128xf32>
    %84 = vector.extract_strided_slice %3 {offsets = [0, 4], sizes = [64, 1], strides = [1, 1]} : vector<64x64xf32> to vector<64x1xf32>
    %85 = vector.broadcast %84 : vector<64x1xf32> to vector<64x128xf32>
    %86 = arith.mulf %83, %85 : vector<64x128xf32>
    %87 = arith.addf %76, %86 : vector<64x128xf32>
    %cst_28 = arith.constant 5.000000e+00 : f32
    %88 = vector.broadcast %cst_28 : f32 to vector<64x128xf32>
    %89 = arith.subf %31, %88 : vector<64x128xf32>
    %90 = math.absf %89 : vector<64x128xf32>
    %cst_29 = arith.constant 1.000000e+00 : f32
    %91 = vector.broadcast %cst_29 : f32 to vector<64x128xf32>
    %92 = arith.subf %91, %90 : vector<64x128xf32>
    %cst_30 = arith.constant 0.000000e+00 : f32
    %93 = vector.broadcast %cst_30 : f32 to vector<64x128xf32>
    %94 = arith.maximumf %92, %93 : vector<64x128xf32>
    %95 = vector.extract_strided_slice %3 {offsets = [0, 5], sizes = [64, 1], strides = [1, 1]} : vector<64x64xf32> to vector<64x1xf32>
    %96 = vector.broadcast %95 : vector<64x1xf32> to vector<64x128xf32>
    %97 = arith.mulf %94, %96 : vector<64x128xf32>
    %98 = arith.addf %87, %97 : vector<64x128xf32>
    %cst_31 = arith.constant 6.000000e+00 : f32
    %99 = vector.broadcast %cst_31 : f32 to vector<64x128xf32>
    %100 = arith.subf %31, %99 : vector<64x128xf32>
    %101 = math.absf %100 : vector<64x128xf32>
    %cst_32 = arith.constant 1.000000e+00 : f32
    %102 = vector.broadcast %cst_32 : f32 to vector<64x128xf32>
    %103 = arith.subf %102, %101 : vector<64x128xf32>
    %cst_33 = arith.constant 0.000000e+00 : f32
    %104 = vector.broadcast %cst_33 : f32 to vector<64x128xf32>
    %105 = arith.maximumf %103, %104 : vector<64x128xf32>
    %106 = vector.extract_strided_slice %3 {offsets = [0, 6], sizes = [64, 1], strides = [1, 1]} : vector<64x64xf32> to vector<64x1xf32>
    %107 = vector.broadcast %106 : vector<64x1xf32> to vector<64x128xf32>
    %108 = arith.mulf %105, %107 : vector<64x128xf32>
    %109 = arith.addf %98, %108 : vector<64x128xf32>
    %cst_34 = arith.constant 7.000000e+00 : f32
    %110 = vector.broadcast %cst_34 : f32 to vector<64x128xf32>
    %111 = arith.subf %31, %110 : vector<64x128xf32>
    %112 = math.absf %111 : vector<64x128xf32>
    %cst_35 = arith.constant 1.000000e+00 : f32
    %113 = vector.broadcast %cst_35 : f32 to vector<64x128xf32>
    %114 = arith.subf %113, %112 : vector<64x128xf32>
    %cst_36 = arith.constant 0.000000e+00 : f32
    %115 = vector.broadcast %cst_36 : f32 to vector<64x128xf32>
    %116 = arith.maximumf %114, %115 : vector<64x128xf32>
    %117 = vector.extract_strided_slice %3 {offsets = [0, 7], sizes = [64, 1], strides = [1, 1]} : vector<64x64xf32> to vector<64x1xf32>
    %118 = vector.broadcast %117 : vector<64x1xf32> to vector<64x128xf32>
    %119 = arith.mulf %116, %118 : vector<64x128xf32>
    %120 = arith.addf %109, %119 : vector<64x128xf32>
    %cst_37 = arith.constant 8.000000e+00 : f32
    %121 = vector.broadcast %cst_37 : f32 to vector<64x128xf32>
    %122 = arith.subf %31, %121 : vector<64x128xf32>
    %123 = math.absf %122 : vector<64x128xf32>
    %cst_38 = arith.constant 1.000000e+00 : f32
    %124 = vector.broadcast %cst_38 : f32 to vector<64x128xf32>
    %125 = arith.subf %124, %123 : vector<64x128xf32>
    %cst_39 = arith.constant 0.000000e+00 : f32
    %126 = vector.broadcast %cst_39 : f32 to vector<64x128xf32>
    %127 = arith.maximumf %125, %126 : vector<64x128xf32>
    %128 = vector.extract_strided_slice %3 {offsets = [0, 8], sizes = [64, 1], strides = [1, 1]} : vector<64x64xf32> to vector<64x1xf32>
    %129 = vector.broadcast %128 : vector<64x1xf32> to vector<64x128xf32>
    %130 = arith.mulf %127, %129 : vector<64x128xf32>
    %131 = arith.addf %120, %130 : vector<64x128xf32>
    %cst_40 = arith.constant 9.000000e+00 : f32
    %132 = vector.broadcast %cst_40 : f32 to vector<64x128xf32>
    %133 = arith.subf %31, %132 : vector<64x128xf32>
    %134 = math.absf %133 : vector<64x128xf32>
    %cst_41 = arith.constant 1.000000e+00 : f32
    %135 = vector.broadcast %cst_41 : f32 to vector<64x128xf32>
    %136 = arith.subf %135, %134 : vector<64x128xf32>
    %cst_42 = arith.constant 0.000000e+00 : f32
    %137 = vector.broadcast %cst_42 : f32 to vector<64x128xf32>
    %138 = arith.maximumf %136, %137 : vector<64x128xf32>
    %139 = vector.extract_strided_slice %3 {offsets = [0, 9], sizes = [64, 1], strides = [1, 1]} : vector<64x64xf32> to vector<64x1xf32>
    %140 = vector.broadcast %139 : vector<64x1xf32> to vector<64x128xf32>
    %141 = arith.mulf %138, %140 : vector<64x128xf32>
    %142 = arith.addf %131, %141 : vector<64x128xf32>
    %cst_43 = arith.constant 1.000000e+01 : f32
    %143 = vector.broadcast %cst_43 : f32 to vector<64x128xf32>
    %144 = arith.subf %31, %143 : vector<64x128xf32>
    %145 = math.absf %144 : vector<64x128xf32>
    %cst_44 = arith.constant 1.000000e+00 : f32
    %146 = vector.broadcast %cst_44 : f32 to vector<64x128xf32>
    %147 = arith.subf %146, %145 : vector<64x128xf32>
    %cst_45 = arith.constant 0.000000e+00 : f32
    %148 = vector.broadcast %cst_45 : f32 to vector<64x128xf32>
    %149 = arith.maximumf %147, %148 : vector<64x128xf32>
    %150 = vector.extract_strided_slice %3 {offsets = [0, 10], sizes = [64, 1], strides = [1, 1]} : vector<64x64xf32> to vector<64x1xf32>
    %151 = vector.broadcast %150 : vector<64x1xf32> to vector<64x128xf32>
    %152 = arith.mulf %149, %151 : vector<64x128xf32>
    %153 = arith.addf %142, %152 : vector<64x128xf32>
    %cst_46 = arith.constant 1.100000e+01 : f32
    %154 = vector.broadcast %cst_46 : f32 to vector<64x128xf32>
    %155 = arith.subf %31, %154 : vector<64x128xf32>
    %156 = math.absf %155 : vector<64x128xf32>
    %cst_47 = arith.constant 1.000000e+00 : f32
    %157 = vector.broadcast %cst_47 : f32 to vector<64x128xf32>
    %158 = arith.subf %157, %156 : vector<64x128xf32>
    %cst_48 = arith.constant 0.000000e+00 : f32
    %159 = vector.broadcast %cst_48 : f32 to vector<64x128xf32>
    %160 = arith.maximumf %158, %159 : vector<64x128xf32>
    %161 = vector.extract_strided_slice %3 {offsets = [0, 11], sizes = [64, 1], strides = [1, 1]} : vector<64x64xf32> to vector<64x1xf32>
    %162 = vector.broadcast %161 : vector<64x1xf32> to vector<64x128xf32>
    %163 = arith.mulf %160, %162 : vector<64x128xf32>
    %164 = arith.addf %153, %163 : vector<64x128xf32>
    %cst_49 = arith.constant 1.200000e+01 : f32
    %165 = vector.broadcast %cst_49 : f32 to vector<64x128xf32>
    %166 = arith.subf %31, %165 : vector<64x128xf32>
    %167 = math.absf %166 : vector<64x128xf32>
    %cst_50 = arith.constant 1.000000e+00 : f32
    %168 = vector.broadcast %cst_50 : f32 to vector<64x128xf32>
    %169 = arith.subf %168, %167 : vector<64x128xf32>
    %cst_51 = arith.constant 0.000000e+00 : f32
    %170 = vector.broadcast %cst_51 : f32 to vector<64x128xf32>
    %171 = arith.maximumf %169, %170 : vector<64x128xf32>
    %172 = vector.extract_strided_slice %3 {offsets = [0, 12], sizes = [64, 1], strides = [1, 1]} : vector<64x64xf32> to vector<64x1xf32>
    %173 = vector.broadcast %172 : vector<64x1xf32> to vector<64x128xf32>
    %174 = arith.mulf %171, %173 : vector<64x128xf32>
    %175 = arith.addf %164, %174 : vector<64x128xf32>
    %cst_52 = arith.constant 1.300000e+01 : f32
    %176 = vector.broadcast %cst_52 : f32 to vector<64x128xf32>
    %177 = arith.subf %31, %176 : vector<64x128xf32>
    %178 = math.absf %177 : vector<64x128xf32>
    %cst_53 = arith.constant 1.000000e+00 : f32
    %179 = vector.broadcast %cst_53 : f32 to vector<64x128xf32>
    %180 = arith.subf %179, %178 : vector<64x128xf32>
    %cst_54 = arith.constant 0.000000e+00 : f32
    %181 = vector.broadcast %cst_54 : f32 to vector<64x128xf32>
    %182 = arith.maximumf %180, %181 : vector<64x128xf32>
    %183 = vector.extract_strided_slice %3 {offsets = [0, 13], sizes = [64, 1], strides = [1, 1]} : vector<64x64xf32> to vector<64x1xf32>
    %184 = vector.broadcast %183 : vector<64x1xf32> to vector<64x128xf32>
    %185 = arith.mulf %182, %184 : vector<64x128xf32>
    %186 = arith.addf %175, %185 : vector<64x128xf32>
    %cst_55 = arith.constant 1.400000e+01 : f32
    %187 = vector.broadcast %cst_55 : f32 to vector<64x128xf32>
    %188 = arith.subf %31, %187 : vector<64x128xf32>
    %189 = math.absf %188 : vector<64x128xf32>
    %cst_56 = arith.constant 1.000000e+00 : f32
    %190 = vector.broadcast %cst_56 : f32 to vector<64x128xf32>
    %191 = arith.subf %190, %189 : vector<64x128xf32>
    %cst_57 = arith.constant 0.000000e+00 : f32
    %192 = vector.broadcast %cst_57 : f32 to vector<64x128xf32>
    %193 = arith.maximumf %191, %192 : vector<64x128xf32>
    %194 = vector.extract_strided_slice %3 {offsets = [0, 14], sizes = [64, 1], strides = [1, 1]} : vector<64x64xf32> to vector<64x1xf32>
    %195 = vector.broadcast %194 : vector<64x1xf32> to vector<64x128xf32>
    %196 = arith.mulf %193, %195 : vector<64x128xf32>
    %197 = arith.addf %186, %196 : vector<64x128xf32>
    %cst_58 = arith.constant 1.500000e+01 : f32
    %198 = vector.broadcast %cst_58 : f32 to vector<64x128xf32>
    %199 = arith.subf %31, %198 : vector<64x128xf32>
    %200 = math.absf %199 : vector<64x128xf32>
    %cst_59 = arith.constant 1.000000e+00 : f32
    %201 = vector.broadcast %cst_59 : f32 to vector<64x128xf32>
    %202 = arith.subf %201, %200 : vector<64x128xf32>
    %cst_60 = arith.constant 0.000000e+00 : f32
    %203 = vector.broadcast %cst_60 : f32 to vector<64x128xf32>
    %204 = arith.maximumf %202, %203 : vector<64x128xf32>
    %205 = vector.extract_strided_slice %3 {offsets = [0, 15], sizes = [64, 1], strides = [1, 1]} : vector<64x64xf32> to vector<64x1xf32>
    %206 = vector.broadcast %205 : vector<64x1xf32> to vector<64x128xf32>
    %207 = arith.mulf %204, %206 : vector<64x128xf32>
    %208 = arith.addf %197, %207 : vector<64x128xf32>
    %cst_61 = arith.constant 1.600000e+01 : f32
    %209 = vector.broadcast %cst_61 : f32 to vector<64x128xf32>
    %210 = arith.subf %31, %209 : vector<64x128xf32>
    %211 = math.absf %210 : vector<64x128xf32>
    %cst_62 = arith.constant 1.000000e+00 : f32
    %212 = vector.broadcast %cst_62 : f32 to vector<64x128xf32>
    %213 = arith.subf %212, %211 : vector<64x128xf32>
    %cst_63 = arith.constant 0.000000e+00 : f32
    %214 = vector.broadcast %cst_63 : f32 to vector<64x128xf32>
    %215 = arith.maximumf %213, %214 : vector<64x128xf32>
    %216 = vector.extract_strided_slice %3 {offsets = [0, 16], sizes = [64, 1], strides = [1, 1]} : vector<64x64xf32> to vector<64x1xf32>
    %217 = vector.broadcast %216 : vector<64x1xf32> to vector<64x128xf32>
    %218 = arith.mulf %215, %217 : vector<64x128xf32>
    %219 = arith.addf %208, %218 : vector<64x128xf32>
    %cst_64 = arith.constant 1.700000e+01 : f32
    %220 = vector.broadcast %cst_64 : f32 to vector<64x128xf32>
    %221 = arith.subf %31, %220 : vector<64x128xf32>
    %222 = math.absf %221 : vector<64x128xf32>
    %cst_65 = arith.constant 1.000000e+00 : f32
    %223 = vector.broadcast %cst_65 : f32 to vector<64x128xf32>
    %224 = arith.subf %223, %222 : vector<64x128xf32>
    %cst_66 = arith.constant 0.000000e+00 : f32
    %225 = vector.broadcast %cst_66 : f32 to vector<64x128xf32>
    %226 = arith.maximumf %224, %225 : vector<64x128xf32>
    %227 = vector.extract_strided_slice %3 {offsets = [0, 17], sizes = [64, 1], strides = [1, 1]} : vector<64x64xf32> to vector<64x1xf32>
    %228 = vector.broadcast %227 : vector<64x1xf32> to vector<64x128xf32>
    %229 = arith.mulf %226, %228 : vector<64x128xf32>
    %230 = arith.addf %219, %229 : vector<64x128xf32>
    %cst_67 = arith.constant 1.800000e+01 : f32
    %231 = vector.broadcast %cst_67 : f32 to vector<64x128xf32>
    %232 = arith.subf %31, %231 : vector<64x128xf32>
    %233 = math.absf %232 : vector<64x128xf32>
    %cst_68 = arith.constant 1.000000e+00 : f32
    %234 = vector.broadcast %cst_68 : f32 to vector<64x128xf32>
    %235 = arith.subf %234, %233 : vector<64x128xf32>
    %cst_69 = arith.constant 0.000000e+00 : f32
    %236 = vector.broadcast %cst_69 : f32 to vector<64x128xf32>
    %237 = arith.maximumf %235, %236 : vector<64x128xf32>
    %238 = vector.extract_strided_slice %3 {offsets = [0, 18], sizes = [64, 1], strides = [1, 1]} : vector<64x64xf32> to vector<64x1xf32>
    %239 = vector.broadcast %238 : vector<64x1xf32> to vector<64x128xf32>
    %240 = arith.mulf %237, %239 : vector<64x128xf32>
    %241 = arith.addf %230, %240 : vector<64x128xf32>
    %cst_70 = arith.constant 1.900000e+01 : f32
    %242 = vector.broadcast %cst_70 : f32 to vector<64x128xf32>
    %243 = arith.subf %31, %242 : vector<64x128xf32>
    %244 = math.absf %243 : vector<64x128xf32>
    %cst_71 = arith.constant 1.000000e+00 : f32
    %245 = vector.broadcast %cst_71 : f32 to vector<64x128xf32>
    %246 = arith.subf %245, %244 : vector<64x128xf32>
    %cst_72 = arith.constant 0.000000e+00 : f32
    %247 = vector.broadcast %cst_72 : f32 to vector<64x128xf32>
    %248 = arith.maximumf %246, %247 : vector<64x128xf32>
    %249 = vector.extract_strided_slice %3 {offsets = [0, 19], sizes = [64, 1], strides = [1, 1]} : vector<64x64xf32> to vector<64x1xf32>
    %250 = vector.broadcast %249 : vector<64x1xf32> to vector<64x128xf32>
    %251 = arith.mulf %248, %250 : vector<64x128xf32>
    %252 = arith.addf %241, %251 : vector<64x128xf32>
    %cst_73 = arith.constant 2.000000e+01 : f32
    %253 = vector.broadcast %cst_73 : f32 to vector<64x128xf32>
    %254 = arith.subf %31, %253 : vector<64x128xf32>
    %255 = math.absf %254 : vector<64x128xf32>
    %cst_74 = arith.constant 1.000000e+00 : f32
    %256 = vector.broadcast %cst_74 : f32 to vector<64x128xf32>
    %257 = arith.subf %256, %255 : vector<64x128xf32>
    %cst_75 = arith.constant 0.000000e+00 : f32
    %258 = vector.broadcast %cst_75 : f32 to vector<64x128xf32>
    %259 = arith.maximumf %257, %258 : vector<64x128xf32>
    %260 = vector.extract_strided_slice %3 {offsets = [0, 20], sizes = [64, 1], strides = [1, 1]} : vector<64x64xf32> to vector<64x1xf32>
    %261 = vector.broadcast %260 : vector<64x1xf32> to vector<64x128xf32>
    %262 = arith.mulf %259, %261 : vector<64x128xf32>
    %263 = arith.addf %252, %262 : vector<64x128xf32>
    %cst_76 = arith.constant 2.100000e+01 : f32
    %264 = vector.broadcast %cst_76 : f32 to vector<64x128xf32>
    %265 = arith.subf %31, %264 : vector<64x128xf32>
    %266 = math.absf %265 : vector<64x128xf32>
    %cst_77 = arith.constant 1.000000e+00 : f32
    %267 = vector.broadcast %cst_77 : f32 to vector<64x128xf32>
    %268 = arith.subf %267, %266 : vector<64x128xf32>
    %cst_78 = arith.constant 0.000000e+00 : f32
    %269 = vector.broadcast %cst_78 : f32 to vector<64x128xf32>
    %270 = arith.maximumf %268, %269 : vector<64x128xf32>
    %271 = vector.extract_strided_slice %3 {offsets = [0, 21], sizes = [64, 1], strides = [1, 1]} : vector<64x64xf32> to vector<64x1xf32>
    %272 = vector.broadcast %271 : vector<64x1xf32> to vector<64x128xf32>
    %273 = arith.mulf %270, %272 : vector<64x128xf32>
    %274 = arith.addf %263, %273 : vector<64x128xf32>
    %cst_79 = arith.constant 2.200000e+01 : f32
    %275 = vector.broadcast %cst_79 : f32 to vector<64x128xf32>
    %276 = arith.subf %31, %275 : vector<64x128xf32>
    %277 = math.absf %276 : vector<64x128xf32>
    %cst_80 = arith.constant 1.000000e+00 : f32
    %278 = vector.broadcast %cst_80 : f32 to vector<64x128xf32>
    %279 = arith.subf %278, %277 : vector<64x128xf32>
    %cst_81 = arith.constant 0.000000e+00 : f32
    %280 = vector.broadcast %cst_81 : f32 to vector<64x128xf32>
    %281 = arith.maximumf %279, %280 : vector<64x128xf32>
    %282 = vector.extract_strided_slice %3 {offsets = [0, 22], sizes = [64, 1], strides = [1, 1]} : vector<64x64xf32> to vector<64x1xf32>
    %283 = vector.broadcast %282 : vector<64x1xf32> to vector<64x128xf32>
    %284 = arith.mulf %281, %283 : vector<64x128xf32>
    %285 = arith.addf %274, %284 : vector<64x128xf32>
    %cst_82 = arith.constant 2.300000e+01 : f32
    %286 = vector.broadcast %cst_82 : f32 to vector<64x128xf32>
    %287 = arith.subf %31, %286 : vector<64x128xf32>
    %288 = math.absf %287 : vector<64x128xf32>
    %cst_83 = arith.constant 1.000000e+00 : f32
    %289 = vector.broadcast %cst_83 : f32 to vector<64x128xf32>
    %290 = arith.subf %289, %288 : vector<64x128xf32>
    %cst_84 = arith.constant 0.000000e+00 : f32
    %291 = vector.broadcast %cst_84 : f32 to vector<64x128xf32>
    %292 = arith.maximumf %290, %291 : vector<64x128xf32>
    %293 = vector.extract_strided_slice %3 {offsets = [0, 23], sizes = [64, 1], strides = [1, 1]} : vector<64x64xf32> to vector<64x1xf32>
    %294 = vector.broadcast %293 : vector<64x1xf32> to vector<64x128xf32>
    %295 = arith.mulf %292, %294 : vector<64x128xf32>
    %296 = arith.addf %285, %295 : vector<64x128xf32>
    %cst_85 = arith.constant 2.400000e+01 : f32
    %297 = vector.broadcast %cst_85 : f32 to vector<64x128xf32>
    %298 = arith.subf %31, %297 : vector<64x128xf32>
    %299 = math.absf %298 : vector<64x128xf32>
    %cst_86 = arith.constant 1.000000e+00 : f32
    %300 = vector.broadcast %cst_86 : f32 to vector<64x128xf32>
    %301 = arith.subf %300, %299 : vector<64x128xf32>
    %cst_87 = arith.constant 0.000000e+00 : f32
    %302 = vector.broadcast %cst_87 : f32 to vector<64x128xf32>
    %303 = arith.maximumf %301, %302 : vector<64x128xf32>
    %304 = vector.extract_strided_slice %3 {offsets = [0, 24], sizes = [64, 1], strides = [1, 1]} : vector<64x64xf32> to vector<64x1xf32>
    %305 = vector.broadcast %304 : vector<64x1xf32> to vector<64x128xf32>
    %306 = arith.mulf %303, %305 : vector<64x128xf32>
    %307 = arith.addf %296, %306 : vector<64x128xf32>
    %cst_88 = arith.constant 2.500000e+01 : f32
    %308 = vector.broadcast %cst_88 : f32 to vector<64x128xf32>
    %309 = arith.subf %31, %308 : vector<64x128xf32>
    %310 = math.absf %309 : vector<64x128xf32>
    %cst_89 = arith.constant 1.000000e+00 : f32
    %311 = vector.broadcast %cst_89 : f32 to vector<64x128xf32>
    %312 = arith.subf %311, %310 : vector<64x128xf32>
    %cst_90 = arith.constant 0.000000e+00 : f32
    %313 = vector.broadcast %cst_90 : f32 to vector<64x128xf32>
    %314 = arith.maximumf %312, %313 : vector<64x128xf32>
    %315 = vector.extract_strided_slice %3 {offsets = [0, 25], sizes = [64, 1], strides = [1, 1]} : vector<64x64xf32> to vector<64x1xf32>
    %316 = vector.broadcast %315 : vector<64x1xf32> to vector<64x128xf32>
    %317 = arith.mulf %314, %316 : vector<64x128xf32>
    %318 = arith.addf %307, %317 : vector<64x128xf32>
    %cst_91 = arith.constant 2.600000e+01 : f32
    %319 = vector.broadcast %cst_91 : f32 to vector<64x128xf32>
    %320 = arith.subf %31, %319 : vector<64x128xf32>
    %321 = math.absf %320 : vector<64x128xf32>
    %cst_92 = arith.constant 1.000000e+00 : f32
    %322 = vector.broadcast %cst_92 : f32 to vector<64x128xf32>
    %323 = arith.subf %322, %321 : vector<64x128xf32>
    %cst_93 = arith.constant 0.000000e+00 : f32
    %324 = vector.broadcast %cst_93 : f32 to vector<64x128xf32>
    %325 = arith.maximumf %323, %324 : vector<64x128xf32>
    %326 = vector.extract_strided_slice %3 {offsets = [0, 26], sizes = [64, 1], strides = [1, 1]} : vector<64x64xf32> to vector<64x1xf32>
    %327 = vector.broadcast %326 : vector<64x1xf32> to vector<64x128xf32>
    %328 = arith.mulf %325, %327 : vector<64x128xf32>
    %329 = arith.addf %318, %328 : vector<64x128xf32>
    %cst_94 = arith.constant 2.700000e+01 : f32
    %330 = vector.broadcast %cst_94 : f32 to vector<64x128xf32>
    %331 = arith.subf %31, %330 : vector<64x128xf32>
    %332 = math.absf %331 : vector<64x128xf32>
    %cst_95 = arith.constant 1.000000e+00 : f32
    %333 = vector.broadcast %cst_95 : f32 to vector<64x128xf32>
    %334 = arith.subf %333, %332 : vector<64x128xf32>
    %cst_96 = arith.constant 0.000000e+00 : f32
    %335 = vector.broadcast %cst_96 : f32 to vector<64x128xf32>
    %336 = arith.maximumf %334, %335 : vector<64x128xf32>
    %337 = vector.extract_strided_slice %3 {offsets = [0, 27], sizes = [64, 1], strides = [1, 1]} : vector<64x64xf32> to vector<64x1xf32>
    %338 = vector.broadcast %337 : vector<64x1xf32> to vector<64x128xf32>
    %339 = arith.mulf %336, %338 : vector<64x128xf32>
    %340 = arith.addf %329, %339 : vector<64x128xf32>
    %cst_97 = arith.constant 2.800000e+01 : f32
    %341 = vector.broadcast %cst_97 : f32 to vector<64x128xf32>
    %342 = arith.subf %31, %341 : vector<64x128xf32>
    %343 = math.absf %342 : vector<64x128xf32>
    %cst_98 = arith.constant 1.000000e+00 : f32
    %344 = vector.broadcast %cst_98 : f32 to vector<64x128xf32>
    %345 = arith.subf %344, %343 : vector<64x128xf32>
    %cst_99 = arith.constant 0.000000e+00 : f32
    %346 = vector.broadcast %cst_99 : f32 to vector<64x128xf32>
    %347 = arith.maximumf %345, %346 : vector<64x128xf32>
    %348 = vector.extract_strided_slice %3 {offsets = [0, 28], sizes = [64, 1], strides = [1, 1]} : vector<64x64xf32> to vector<64x1xf32>
    %349 = vector.broadcast %348 : vector<64x1xf32> to vector<64x128xf32>
    %350 = arith.mulf %347, %349 : vector<64x128xf32>
    %351 = arith.addf %340, %350 : vector<64x128xf32>
    %cst_100 = arith.constant 2.900000e+01 : f32
    %352 = vector.broadcast %cst_100 : f32 to vector<64x128xf32>
    %353 = arith.subf %31, %352 : vector<64x128xf32>
    %354 = math.absf %353 : vector<64x128xf32>
    %cst_101 = arith.constant 1.000000e+00 : f32
    %355 = vector.broadcast %cst_101 : f32 to vector<64x128xf32>
    %356 = arith.subf %355, %354 : vector<64x128xf32>
    %cst_102 = arith.constant 0.000000e+00 : f32
    %357 = vector.broadcast %cst_102 : f32 to vector<64x128xf32>
    %358 = arith.maximumf %356, %357 : vector<64x128xf32>
    %359 = vector.extract_strided_slice %3 {offsets = [0, 29], sizes = [64, 1], strides = [1, 1]} : vector<64x64xf32> to vector<64x1xf32>
    %360 = vector.broadcast %359 : vector<64x1xf32> to vector<64x128xf32>
    %361 = arith.mulf %358, %360 : vector<64x128xf32>
    %362 = arith.addf %351, %361 : vector<64x128xf32>
    %cst_103 = arith.constant 3.000000e+01 : f32
    %363 = vector.broadcast %cst_103 : f32 to vector<64x128xf32>
    %364 = arith.subf %31, %363 : vector<64x128xf32>
    %365 = math.absf %364 : vector<64x128xf32>
    %cst_104 = arith.constant 1.000000e+00 : f32
    %366 = vector.broadcast %cst_104 : f32 to vector<64x128xf32>
    %367 = arith.subf %366, %365 : vector<64x128xf32>
    %cst_105 = arith.constant 0.000000e+00 : f32
    %368 = vector.broadcast %cst_105 : f32 to vector<64x128xf32>
    %369 = arith.maximumf %367, %368 : vector<64x128xf32>
    %370 = vector.extract_strided_slice %3 {offsets = [0, 30], sizes = [64, 1], strides = [1, 1]} : vector<64x64xf32> to vector<64x1xf32>
    %371 = vector.broadcast %370 : vector<64x1xf32> to vector<64x128xf32>
    %372 = arith.mulf %369, %371 : vector<64x128xf32>
    %373 = arith.addf %362, %372 : vector<64x128xf32>
    %cst_106 = arith.constant 3.100000e+01 : f32
    %374 = vector.broadcast %cst_106 : f32 to vector<64x128xf32>
    %375 = arith.subf %31, %374 : vector<64x128xf32>
    %376 = math.absf %375 : vector<64x128xf32>
    %cst_107 = arith.constant 1.000000e+00 : f32
    %377 = vector.broadcast %cst_107 : f32 to vector<64x128xf32>
    %378 = arith.subf %377, %376 : vector<64x128xf32>
    %cst_108 = arith.constant 0.000000e+00 : f32
    %379 = vector.broadcast %cst_108 : f32 to vector<64x128xf32>
    %380 = arith.maximumf %378, %379 : vector<64x128xf32>
    %381 = vector.extract_strided_slice %3 {offsets = [0, 31], sizes = [64, 1], strides = [1, 1]} : vector<64x64xf32> to vector<64x1xf32>
    %382 = vector.broadcast %381 : vector<64x1xf32> to vector<64x128xf32>
    %383 = arith.mulf %380, %382 : vector<64x128xf32>
    %384 = arith.addf %373, %383 : vector<64x128xf32>
    %cst_109 = arith.constant 3.200000e+01 : f32
    %385 = vector.broadcast %cst_109 : f32 to vector<64x128xf32>
    %386 = arith.subf %31, %385 : vector<64x128xf32>
    %387 = math.absf %386 : vector<64x128xf32>
    %cst_110 = arith.constant 1.000000e+00 : f32
    %388 = vector.broadcast %cst_110 : f32 to vector<64x128xf32>
    %389 = arith.subf %388, %387 : vector<64x128xf32>
    %cst_111 = arith.constant 0.000000e+00 : f32
    %390 = vector.broadcast %cst_111 : f32 to vector<64x128xf32>
    %391 = arith.maximumf %389, %390 : vector<64x128xf32>
    %392 = vector.extract_strided_slice %3 {offsets = [0, 32], sizes = [64, 1], strides = [1, 1]} : vector<64x64xf32> to vector<64x1xf32>
    %393 = vector.broadcast %392 : vector<64x1xf32> to vector<64x128xf32>
    %394 = arith.mulf %391, %393 : vector<64x128xf32>
    %395 = arith.addf %384, %394 : vector<64x128xf32>
    %cst_112 = arith.constant 3.300000e+01 : f32
    %396 = vector.broadcast %cst_112 : f32 to vector<64x128xf32>
    %397 = arith.subf %31, %396 : vector<64x128xf32>
    %398 = math.absf %397 : vector<64x128xf32>
    %cst_113 = arith.constant 1.000000e+00 : f32
    %399 = vector.broadcast %cst_113 : f32 to vector<64x128xf32>
    %400 = arith.subf %399, %398 : vector<64x128xf32>
    %cst_114 = arith.constant 0.000000e+00 : f32
    %401 = vector.broadcast %cst_114 : f32 to vector<64x128xf32>
    %402 = arith.maximumf %400, %401 : vector<64x128xf32>
    %403 = vector.extract_strided_slice %3 {offsets = [0, 33], sizes = [64, 1], strides = [1, 1]} : vector<64x64xf32> to vector<64x1xf32>
    %404 = vector.broadcast %403 : vector<64x1xf32> to vector<64x128xf32>
    %405 = arith.mulf %402, %404 : vector<64x128xf32>
    %406 = arith.addf %395, %405 : vector<64x128xf32>
    %cst_115 = arith.constant 3.400000e+01 : f32
    %407 = vector.broadcast %cst_115 : f32 to vector<64x128xf32>
    %408 = arith.subf %31, %407 : vector<64x128xf32>
    %409 = math.absf %408 : vector<64x128xf32>
    %cst_116 = arith.constant 1.000000e+00 : f32
    %410 = vector.broadcast %cst_116 : f32 to vector<64x128xf32>
    %411 = arith.subf %410, %409 : vector<64x128xf32>
    %cst_117 = arith.constant 0.000000e+00 : f32
    %412 = vector.broadcast %cst_117 : f32 to vector<64x128xf32>
    %413 = arith.maximumf %411, %412 : vector<64x128xf32>
    %414 = vector.extract_strided_slice %3 {offsets = [0, 34], sizes = [64, 1], strides = [1, 1]} : vector<64x64xf32> to vector<64x1xf32>
    %415 = vector.broadcast %414 : vector<64x1xf32> to vector<64x128xf32>
    %416 = arith.mulf %413, %415 : vector<64x128xf32>
    %417 = arith.addf %406, %416 : vector<64x128xf32>
    %cst_118 = arith.constant 3.500000e+01 : f32
    %418 = vector.broadcast %cst_118 : f32 to vector<64x128xf32>
    %419 = arith.subf %31, %418 : vector<64x128xf32>
    %420 = math.absf %419 : vector<64x128xf32>
    %cst_119 = arith.constant 1.000000e+00 : f32
    %421 = vector.broadcast %cst_119 : f32 to vector<64x128xf32>
    %422 = arith.subf %421, %420 : vector<64x128xf32>
    %cst_120 = arith.constant 0.000000e+00 : f32
    %423 = vector.broadcast %cst_120 : f32 to vector<64x128xf32>
    %424 = arith.maximumf %422, %423 : vector<64x128xf32>
    %425 = vector.extract_strided_slice %3 {offsets = [0, 35], sizes = [64, 1], strides = [1, 1]} : vector<64x64xf32> to vector<64x1xf32>
    %426 = vector.broadcast %425 : vector<64x1xf32> to vector<64x128xf32>
    %427 = arith.mulf %424, %426 : vector<64x128xf32>
    %428 = arith.addf %417, %427 : vector<64x128xf32>
    %cst_121 = arith.constant 3.600000e+01 : f32
    %429 = vector.broadcast %cst_121 : f32 to vector<64x128xf32>
    %430 = arith.subf %31, %429 : vector<64x128xf32>
    %431 = math.absf %430 : vector<64x128xf32>
    %cst_122 = arith.constant 1.000000e+00 : f32
    %432 = vector.broadcast %cst_122 : f32 to vector<64x128xf32>
    %433 = arith.subf %432, %431 : vector<64x128xf32>
    %cst_123 = arith.constant 0.000000e+00 : f32
    %434 = vector.broadcast %cst_123 : f32 to vector<64x128xf32>
    %435 = arith.maximumf %433, %434 : vector<64x128xf32>
    %436 = vector.extract_strided_slice %3 {offsets = [0, 36], sizes = [64, 1], strides = [1, 1]} : vector<64x64xf32> to vector<64x1xf32>
    %437 = vector.broadcast %436 : vector<64x1xf32> to vector<64x128xf32>
    %438 = arith.mulf %435, %437 : vector<64x128xf32>
    %439 = arith.addf %428, %438 : vector<64x128xf32>
    %cst_124 = arith.constant 3.700000e+01 : f32
    %440 = vector.broadcast %cst_124 : f32 to vector<64x128xf32>
    %441 = arith.subf %31, %440 : vector<64x128xf32>
    %442 = math.absf %441 : vector<64x128xf32>
    %cst_125 = arith.constant 1.000000e+00 : f32
    %443 = vector.broadcast %cst_125 : f32 to vector<64x128xf32>
    %444 = arith.subf %443, %442 : vector<64x128xf32>
    %cst_126 = arith.constant 0.000000e+00 : f32
    %445 = vector.broadcast %cst_126 : f32 to vector<64x128xf32>
    %446 = arith.maximumf %444, %445 : vector<64x128xf32>
    %447 = vector.extract_strided_slice %3 {offsets = [0, 37], sizes = [64, 1], strides = [1, 1]} : vector<64x64xf32> to vector<64x1xf32>
    %448 = vector.broadcast %447 : vector<64x1xf32> to vector<64x128xf32>
    %449 = arith.mulf %446, %448 : vector<64x128xf32>
    %450 = arith.addf %439, %449 : vector<64x128xf32>
    %cst_127 = arith.constant 3.800000e+01 : f32
    %451 = vector.broadcast %cst_127 : f32 to vector<64x128xf32>
    %452 = arith.subf %31, %451 : vector<64x128xf32>
    %453 = math.absf %452 : vector<64x128xf32>
    %cst_128 = arith.constant 1.000000e+00 : f32
    %454 = vector.broadcast %cst_128 : f32 to vector<64x128xf32>
    %455 = arith.subf %454, %453 : vector<64x128xf32>
    %cst_129 = arith.constant 0.000000e+00 : f32
    %456 = vector.broadcast %cst_129 : f32 to vector<64x128xf32>
    %457 = arith.maximumf %455, %456 : vector<64x128xf32>
    %458 = vector.extract_strided_slice %3 {offsets = [0, 38], sizes = [64, 1], strides = [1, 1]} : vector<64x64xf32> to vector<64x1xf32>
    %459 = vector.broadcast %458 : vector<64x1xf32> to vector<64x128xf32>
    %460 = arith.mulf %457, %459 : vector<64x128xf32>
    %461 = arith.addf %450, %460 : vector<64x128xf32>
    %cst_130 = arith.constant 3.900000e+01 : f32
    %462 = vector.broadcast %cst_130 : f32 to vector<64x128xf32>
    %463 = arith.subf %31, %462 : vector<64x128xf32>
    %464 = math.absf %463 : vector<64x128xf32>
    %cst_131 = arith.constant 1.000000e+00 : f32
    %465 = vector.broadcast %cst_131 : f32 to vector<64x128xf32>
    %466 = arith.subf %465, %464 : vector<64x128xf32>
    %cst_132 = arith.constant 0.000000e+00 : f32
    %467 = vector.broadcast %cst_132 : f32 to vector<64x128xf32>
    %468 = arith.maximumf %466, %467 : vector<64x128xf32>
    %469 = vector.extract_strided_slice %3 {offsets = [0, 39], sizes = [64, 1], strides = [1, 1]} : vector<64x64xf32> to vector<64x1xf32>
    %470 = vector.broadcast %469 : vector<64x1xf32> to vector<64x128xf32>
    %471 = arith.mulf %468, %470 : vector<64x128xf32>
    %472 = arith.addf %461, %471 : vector<64x128xf32>
    %cst_133 = arith.constant 4.000000e+01 : f32
    %473 = vector.broadcast %cst_133 : f32 to vector<64x128xf32>
    %474 = arith.subf %31, %473 : vector<64x128xf32>
    %475 = math.absf %474 : vector<64x128xf32>
    %cst_134 = arith.constant 1.000000e+00 : f32
    %476 = vector.broadcast %cst_134 : f32 to vector<64x128xf32>
    %477 = arith.subf %476, %475 : vector<64x128xf32>
    %cst_135 = arith.constant 0.000000e+00 : f32
    %478 = vector.broadcast %cst_135 : f32 to vector<64x128xf32>
    %479 = arith.maximumf %477, %478 : vector<64x128xf32>
    %480 = vector.extract_strided_slice %3 {offsets = [0, 40], sizes = [64, 1], strides = [1, 1]} : vector<64x64xf32> to vector<64x1xf32>
    %481 = vector.broadcast %480 : vector<64x1xf32> to vector<64x128xf32>
    %482 = arith.mulf %479, %481 : vector<64x128xf32>
    %483 = arith.addf %472, %482 : vector<64x128xf32>
    %cst_136 = arith.constant 4.100000e+01 : f32
    %484 = vector.broadcast %cst_136 : f32 to vector<64x128xf32>
    %485 = arith.subf %31, %484 : vector<64x128xf32>
    %486 = math.absf %485 : vector<64x128xf32>
    %cst_137 = arith.constant 1.000000e+00 : f32
    %487 = vector.broadcast %cst_137 : f32 to vector<64x128xf32>
    %488 = arith.subf %487, %486 : vector<64x128xf32>
    %cst_138 = arith.constant 0.000000e+00 : f32
    %489 = vector.broadcast %cst_138 : f32 to vector<64x128xf32>
    %490 = arith.maximumf %488, %489 : vector<64x128xf32>
    %491 = vector.extract_strided_slice %3 {offsets = [0, 41], sizes = [64, 1], strides = [1, 1]} : vector<64x64xf32> to vector<64x1xf32>
    %492 = vector.broadcast %491 : vector<64x1xf32> to vector<64x128xf32>
    %493 = arith.mulf %490, %492 : vector<64x128xf32>
    %494 = arith.addf %483, %493 : vector<64x128xf32>
    %cst_139 = arith.constant 4.200000e+01 : f32
    %495 = vector.broadcast %cst_139 : f32 to vector<64x128xf32>
    %496 = arith.subf %31, %495 : vector<64x128xf32>
    %497 = math.absf %496 : vector<64x128xf32>
    %cst_140 = arith.constant 1.000000e+00 : f32
    %498 = vector.broadcast %cst_140 : f32 to vector<64x128xf32>
    %499 = arith.subf %498, %497 : vector<64x128xf32>
    %cst_141 = arith.constant 0.000000e+00 : f32
    %500 = vector.broadcast %cst_141 : f32 to vector<64x128xf32>
    %501 = arith.maximumf %499, %500 : vector<64x128xf32>
    %502 = vector.extract_strided_slice %3 {offsets = [0, 42], sizes = [64, 1], strides = [1, 1]} : vector<64x64xf32> to vector<64x1xf32>
    %503 = vector.broadcast %502 : vector<64x1xf32> to vector<64x128xf32>
    %504 = arith.mulf %501, %503 : vector<64x128xf32>
    %505 = arith.addf %494, %504 : vector<64x128xf32>
    %cst_142 = arith.constant 4.300000e+01 : f32
    %506 = vector.broadcast %cst_142 : f32 to vector<64x128xf32>
    %507 = arith.subf %31, %506 : vector<64x128xf32>
    %508 = math.absf %507 : vector<64x128xf32>
    %cst_143 = arith.constant 1.000000e+00 : f32
    %509 = vector.broadcast %cst_143 : f32 to vector<64x128xf32>
    %510 = arith.subf %509, %508 : vector<64x128xf32>
    %cst_144 = arith.constant 0.000000e+00 : f32
    %511 = vector.broadcast %cst_144 : f32 to vector<64x128xf32>
    %512 = arith.maximumf %510, %511 : vector<64x128xf32>
    %513 = vector.extract_strided_slice %3 {offsets = [0, 43], sizes = [64, 1], strides = [1, 1]} : vector<64x64xf32> to vector<64x1xf32>
    %514 = vector.broadcast %513 : vector<64x1xf32> to vector<64x128xf32>
    %515 = arith.mulf %512, %514 : vector<64x128xf32>
    %516 = arith.addf %505, %515 : vector<64x128xf32>
    %cst_145 = arith.constant 4.400000e+01 : f32
    %517 = vector.broadcast %cst_145 : f32 to vector<64x128xf32>
    %518 = arith.subf %31, %517 : vector<64x128xf32>
    %519 = math.absf %518 : vector<64x128xf32>
    %cst_146 = arith.constant 1.000000e+00 : f32
    %520 = vector.broadcast %cst_146 : f32 to vector<64x128xf32>
    %521 = arith.subf %520, %519 : vector<64x128xf32>
    %cst_147 = arith.constant 0.000000e+00 : f32
    %522 = vector.broadcast %cst_147 : f32 to vector<64x128xf32>
    %523 = arith.maximumf %521, %522 : vector<64x128xf32>
    %524 = vector.extract_strided_slice %3 {offsets = [0, 44], sizes = [64, 1], strides = [1, 1]} : vector<64x64xf32> to vector<64x1xf32>
    %525 = vector.broadcast %524 : vector<64x1xf32> to vector<64x128xf32>
    %526 = arith.mulf %523, %525 : vector<64x128xf32>
    %527 = arith.addf %516, %526 : vector<64x128xf32>
    %cst_148 = arith.constant 4.500000e+01 : f32
    %528 = vector.broadcast %cst_148 : f32 to vector<64x128xf32>
    %529 = arith.subf %31, %528 : vector<64x128xf32>
    %530 = math.absf %529 : vector<64x128xf32>
    %cst_149 = arith.constant 1.000000e+00 : f32
    %531 = vector.broadcast %cst_149 : f32 to vector<64x128xf32>
    %532 = arith.subf %531, %530 : vector<64x128xf32>
    %cst_150 = arith.constant 0.000000e+00 : f32
    %533 = vector.broadcast %cst_150 : f32 to vector<64x128xf32>
    %534 = arith.maximumf %532, %533 : vector<64x128xf32>
    %535 = vector.extract_strided_slice %3 {offsets = [0, 45], sizes = [64, 1], strides = [1, 1]} : vector<64x64xf32> to vector<64x1xf32>
    %536 = vector.broadcast %535 : vector<64x1xf32> to vector<64x128xf32>
    %537 = arith.mulf %534, %536 : vector<64x128xf32>
    %538 = arith.addf %527, %537 : vector<64x128xf32>
    %cst_151 = arith.constant 4.600000e+01 : f32
    %539 = vector.broadcast %cst_151 : f32 to vector<64x128xf32>
    %540 = arith.subf %31, %539 : vector<64x128xf32>
    %541 = math.absf %540 : vector<64x128xf32>
    %cst_152 = arith.constant 1.000000e+00 : f32
    %542 = vector.broadcast %cst_152 : f32 to vector<64x128xf32>
    %543 = arith.subf %542, %541 : vector<64x128xf32>
    %cst_153 = arith.constant 0.000000e+00 : f32
    %544 = vector.broadcast %cst_153 : f32 to vector<64x128xf32>
    %545 = arith.maximumf %543, %544 : vector<64x128xf32>
    %546 = vector.extract_strided_slice %3 {offsets = [0, 46], sizes = [64, 1], strides = [1, 1]} : vector<64x64xf32> to vector<64x1xf32>
    %547 = vector.broadcast %546 : vector<64x1xf32> to vector<64x128xf32>
    %548 = arith.mulf %545, %547 : vector<64x128xf32>
    %549 = arith.addf %538, %548 : vector<64x128xf32>
    %cst_154 = arith.constant 4.700000e+01 : f32
    %550 = vector.broadcast %cst_154 : f32 to vector<64x128xf32>
    %551 = arith.subf %31, %550 : vector<64x128xf32>
    %552 = math.absf %551 : vector<64x128xf32>
    %cst_155 = arith.constant 1.000000e+00 : f32
    %553 = vector.broadcast %cst_155 : f32 to vector<64x128xf32>
    %554 = arith.subf %553, %552 : vector<64x128xf32>
    %cst_156 = arith.constant 0.000000e+00 : f32
    %555 = vector.broadcast %cst_156 : f32 to vector<64x128xf32>
    %556 = arith.maximumf %554, %555 : vector<64x128xf32>
    %557 = vector.extract_strided_slice %3 {offsets = [0, 47], sizes = [64, 1], strides = [1, 1]} : vector<64x64xf32> to vector<64x1xf32>
    %558 = vector.broadcast %557 : vector<64x1xf32> to vector<64x128xf32>
    %559 = arith.mulf %556, %558 : vector<64x128xf32>
    %560 = arith.addf %549, %559 : vector<64x128xf32>
    %cst_157 = arith.constant 4.800000e+01 : f32
    %561 = vector.broadcast %cst_157 : f32 to vector<64x128xf32>
    %562 = arith.subf %31, %561 : vector<64x128xf32>
    %563 = math.absf %562 : vector<64x128xf32>
    %cst_158 = arith.constant 1.000000e+00 : f32
    %564 = vector.broadcast %cst_158 : f32 to vector<64x128xf32>
    %565 = arith.subf %564, %563 : vector<64x128xf32>
    %cst_159 = arith.constant 0.000000e+00 : f32
    %566 = vector.broadcast %cst_159 : f32 to vector<64x128xf32>
    %567 = arith.maximumf %565, %566 : vector<64x128xf32>
    %568 = vector.extract_strided_slice %3 {offsets = [0, 48], sizes = [64, 1], strides = [1, 1]} : vector<64x64xf32> to vector<64x1xf32>
    %569 = vector.broadcast %568 : vector<64x1xf32> to vector<64x128xf32>
    %570 = arith.mulf %567, %569 : vector<64x128xf32>
    %571 = arith.addf %560, %570 : vector<64x128xf32>
    %cst_160 = arith.constant 4.900000e+01 : f32
    %572 = vector.broadcast %cst_160 : f32 to vector<64x128xf32>
    %573 = arith.subf %31, %572 : vector<64x128xf32>
    %574 = math.absf %573 : vector<64x128xf32>
    %cst_161 = arith.constant 1.000000e+00 : f32
    %575 = vector.broadcast %cst_161 : f32 to vector<64x128xf32>
    %576 = arith.subf %575, %574 : vector<64x128xf32>
    %cst_162 = arith.constant 0.000000e+00 : f32
    %577 = vector.broadcast %cst_162 : f32 to vector<64x128xf32>
    %578 = arith.maximumf %576, %577 : vector<64x128xf32>
    %579 = vector.extract_strided_slice %3 {offsets = [0, 49], sizes = [64, 1], strides = [1, 1]} : vector<64x64xf32> to vector<64x1xf32>
    %580 = vector.broadcast %579 : vector<64x1xf32> to vector<64x128xf32>
    %581 = arith.mulf %578, %580 : vector<64x128xf32>
    %582 = arith.addf %571, %581 : vector<64x128xf32>
    %cst_163 = arith.constant 5.000000e+01 : f32
    %583 = vector.broadcast %cst_163 : f32 to vector<64x128xf32>
    %584 = arith.subf %31, %583 : vector<64x128xf32>
    %585 = math.absf %584 : vector<64x128xf32>
    %cst_164 = arith.constant 1.000000e+00 : f32
    %586 = vector.broadcast %cst_164 : f32 to vector<64x128xf32>
    %587 = arith.subf %586, %585 : vector<64x128xf32>
    %cst_165 = arith.constant 0.000000e+00 : f32
    %588 = vector.broadcast %cst_165 : f32 to vector<64x128xf32>
    %589 = arith.maximumf %587, %588 : vector<64x128xf32>
    %590 = vector.extract_strided_slice %3 {offsets = [0, 50], sizes = [64, 1], strides = [1, 1]} : vector<64x64xf32> to vector<64x1xf32>
    %591 = vector.broadcast %590 : vector<64x1xf32> to vector<64x128xf32>
    %592 = arith.mulf %589, %591 : vector<64x128xf32>
    %593 = arith.addf %582, %592 : vector<64x128xf32>
    %cst_166 = arith.constant 5.100000e+01 : f32
    %594 = vector.broadcast %cst_166 : f32 to vector<64x128xf32>
    %595 = arith.subf %31, %594 : vector<64x128xf32>
    %596 = math.absf %595 : vector<64x128xf32>
    %cst_167 = arith.constant 1.000000e+00 : f32
    %597 = vector.broadcast %cst_167 : f32 to vector<64x128xf32>
    %598 = arith.subf %597, %596 : vector<64x128xf32>
    %cst_168 = arith.constant 0.000000e+00 : f32
    %599 = vector.broadcast %cst_168 : f32 to vector<64x128xf32>
    %600 = arith.maximumf %598, %599 : vector<64x128xf32>
    %601 = vector.extract_strided_slice %3 {offsets = [0, 51], sizes = [64, 1], strides = [1, 1]} : vector<64x64xf32> to vector<64x1xf32>
    %602 = vector.broadcast %601 : vector<64x1xf32> to vector<64x128xf32>
    %603 = arith.mulf %600, %602 : vector<64x128xf32>
    %604 = arith.addf %593, %603 : vector<64x128xf32>
    %cst_169 = arith.constant 5.200000e+01 : f32
    %605 = vector.broadcast %cst_169 : f32 to vector<64x128xf32>
    %606 = arith.subf %31, %605 : vector<64x128xf32>
    %607 = math.absf %606 : vector<64x128xf32>
    %cst_170 = arith.constant 1.000000e+00 : f32
    %608 = vector.broadcast %cst_170 : f32 to vector<64x128xf32>
    %609 = arith.subf %608, %607 : vector<64x128xf32>
    %cst_171 = arith.constant 0.000000e+00 : f32
    %610 = vector.broadcast %cst_171 : f32 to vector<64x128xf32>
    %611 = arith.maximumf %609, %610 : vector<64x128xf32>
    %612 = vector.extract_strided_slice %3 {offsets = [0, 52], sizes = [64, 1], strides = [1, 1]} : vector<64x64xf32> to vector<64x1xf32>
    %613 = vector.broadcast %612 : vector<64x1xf32> to vector<64x128xf32>
    %614 = arith.mulf %611, %613 : vector<64x128xf32>
    %615 = arith.addf %604, %614 : vector<64x128xf32>
    %cst_172 = arith.constant 5.300000e+01 : f32
    %616 = vector.broadcast %cst_172 : f32 to vector<64x128xf32>
    %617 = arith.subf %31, %616 : vector<64x128xf32>
    %618 = math.absf %617 : vector<64x128xf32>
    %cst_173 = arith.constant 1.000000e+00 : f32
    %619 = vector.broadcast %cst_173 : f32 to vector<64x128xf32>
    %620 = arith.subf %619, %618 : vector<64x128xf32>
    %cst_174 = arith.constant 0.000000e+00 : f32
    %621 = vector.broadcast %cst_174 : f32 to vector<64x128xf32>
    %622 = arith.maximumf %620, %621 : vector<64x128xf32>
    %623 = vector.extract_strided_slice %3 {offsets = [0, 53], sizes = [64, 1], strides = [1, 1]} : vector<64x64xf32> to vector<64x1xf32>
    %624 = vector.broadcast %623 : vector<64x1xf32> to vector<64x128xf32>
    %625 = arith.mulf %622, %624 : vector<64x128xf32>
    %626 = arith.addf %615, %625 : vector<64x128xf32>
    %cst_175 = arith.constant 5.400000e+01 : f32
    %627 = vector.broadcast %cst_175 : f32 to vector<64x128xf32>
    %628 = arith.subf %31, %627 : vector<64x128xf32>
    %629 = math.absf %628 : vector<64x128xf32>
    %cst_176 = arith.constant 1.000000e+00 : f32
    %630 = vector.broadcast %cst_176 : f32 to vector<64x128xf32>
    %631 = arith.subf %630, %629 : vector<64x128xf32>
    %cst_177 = arith.constant 0.000000e+00 : f32
    %632 = vector.broadcast %cst_177 : f32 to vector<64x128xf32>
    %633 = arith.maximumf %631, %632 : vector<64x128xf32>
    %634 = vector.extract_strided_slice %3 {offsets = [0, 54], sizes = [64, 1], strides = [1, 1]} : vector<64x64xf32> to vector<64x1xf32>
    %635 = vector.broadcast %634 : vector<64x1xf32> to vector<64x128xf32>
    %636 = arith.mulf %633, %635 : vector<64x128xf32>
    %637 = arith.addf %626, %636 : vector<64x128xf32>
    %cst_178 = arith.constant 5.500000e+01 : f32
    %638 = vector.broadcast %cst_178 : f32 to vector<64x128xf32>
    %639 = arith.subf %31, %638 : vector<64x128xf32>
    %640 = math.absf %639 : vector<64x128xf32>
    %cst_179 = arith.constant 1.000000e+00 : f32
    %641 = vector.broadcast %cst_179 : f32 to vector<64x128xf32>
    %642 = arith.subf %641, %640 : vector<64x128xf32>
    %cst_180 = arith.constant 0.000000e+00 : f32
    %643 = vector.broadcast %cst_180 : f32 to vector<64x128xf32>
    %644 = arith.maximumf %642, %643 : vector<64x128xf32>
    %645 = vector.extract_strided_slice %3 {offsets = [0, 55], sizes = [64, 1], strides = [1, 1]} : vector<64x64xf32> to vector<64x1xf32>
    %646 = vector.broadcast %645 : vector<64x1xf32> to vector<64x128xf32>
    %647 = arith.mulf %644, %646 : vector<64x128xf32>
    %648 = arith.addf %637, %647 : vector<64x128xf32>
    %cst_181 = arith.constant 5.600000e+01 : f32
    %649 = vector.broadcast %cst_181 : f32 to vector<64x128xf32>
    %650 = arith.subf %31, %649 : vector<64x128xf32>
    %651 = math.absf %650 : vector<64x128xf32>
    %cst_182 = arith.constant 1.000000e+00 : f32
    %652 = vector.broadcast %cst_182 : f32 to vector<64x128xf32>
    %653 = arith.subf %652, %651 : vector<64x128xf32>
    %cst_183 = arith.constant 0.000000e+00 : f32
    %654 = vector.broadcast %cst_183 : f32 to vector<64x128xf32>
    %655 = arith.maximumf %653, %654 : vector<64x128xf32>
    %656 = vector.extract_strided_slice %3 {offsets = [0, 56], sizes = [64, 1], strides = [1, 1]} : vector<64x64xf32> to vector<64x1xf32>
    %657 = vector.broadcast %656 : vector<64x1xf32> to vector<64x128xf32>
    %658 = arith.mulf %655, %657 : vector<64x128xf32>
    %659 = arith.addf %648, %658 : vector<64x128xf32>
    %cst_184 = arith.constant 5.700000e+01 : f32
    %660 = vector.broadcast %cst_184 : f32 to vector<64x128xf32>
    %661 = arith.subf %31, %660 : vector<64x128xf32>
    %662 = math.absf %661 : vector<64x128xf32>
    %cst_185 = arith.constant 1.000000e+00 : f32
    %663 = vector.broadcast %cst_185 : f32 to vector<64x128xf32>
    %664 = arith.subf %663, %662 : vector<64x128xf32>
    %cst_186 = arith.constant 0.000000e+00 : f32
    %665 = vector.broadcast %cst_186 : f32 to vector<64x128xf32>
    %666 = arith.maximumf %664, %665 : vector<64x128xf32>
    %667 = vector.extract_strided_slice %3 {offsets = [0, 57], sizes = [64, 1], strides = [1, 1]} : vector<64x64xf32> to vector<64x1xf32>
    %668 = vector.broadcast %667 : vector<64x1xf32> to vector<64x128xf32>
    %669 = arith.mulf %666, %668 : vector<64x128xf32>
    %670 = arith.addf %659, %669 : vector<64x128xf32>
    %cst_187 = arith.constant 5.800000e+01 : f32
    %671 = vector.broadcast %cst_187 : f32 to vector<64x128xf32>
    %672 = arith.subf %31, %671 : vector<64x128xf32>
    %673 = math.absf %672 : vector<64x128xf32>
    %cst_188 = arith.constant 1.000000e+00 : f32
    %674 = vector.broadcast %cst_188 : f32 to vector<64x128xf32>
    %675 = arith.subf %674, %673 : vector<64x128xf32>
    %cst_189 = arith.constant 0.000000e+00 : f32
    %676 = vector.broadcast %cst_189 : f32 to vector<64x128xf32>
    %677 = arith.maximumf %675, %676 : vector<64x128xf32>
    %678 = vector.extract_strided_slice %3 {offsets = [0, 58], sizes = [64, 1], strides = [1, 1]} : vector<64x64xf32> to vector<64x1xf32>
    %679 = vector.broadcast %678 : vector<64x1xf32> to vector<64x128xf32>
    %680 = arith.mulf %677, %679 : vector<64x128xf32>
    %681 = arith.addf %670, %680 : vector<64x128xf32>
    %cst_190 = arith.constant 5.900000e+01 : f32
    %682 = vector.broadcast %cst_190 : f32 to vector<64x128xf32>
    %683 = arith.subf %31, %682 : vector<64x128xf32>
    %684 = math.absf %683 : vector<64x128xf32>
    %cst_191 = arith.constant 1.000000e+00 : f32
    %685 = vector.broadcast %cst_191 : f32 to vector<64x128xf32>
    %686 = arith.subf %685, %684 : vector<64x128xf32>
    %cst_192 = arith.constant 0.000000e+00 : f32
    %687 = vector.broadcast %cst_192 : f32 to vector<64x128xf32>
    %688 = arith.maximumf %686, %687 : vector<64x128xf32>
    %689 = vector.extract_strided_slice %3 {offsets = [0, 59], sizes = [64, 1], strides = [1, 1]} : vector<64x64xf32> to vector<64x1xf32>
    %690 = vector.broadcast %689 : vector<64x1xf32> to vector<64x128xf32>
    %691 = arith.mulf %688, %690 : vector<64x128xf32>
    %692 = arith.addf %681, %691 : vector<64x128xf32>
    %cst_193 = arith.constant 6.000000e+01 : f32
    %693 = vector.broadcast %cst_193 : f32 to vector<64x128xf32>
    %694 = arith.subf %31, %693 : vector<64x128xf32>
    %695 = math.absf %694 : vector<64x128xf32>
    %cst_194 = arith.constant 1.000000e+00 : f32
    %696 = vector.broadcast %cst_194 : f32 to vector<64x128xf32>
    %697 = arith.subf %696, %695 : vector<64x128xf32>
    %cst_195 = arith.constant 0.000000e+00 : f32
    %698 = vector.broadcast %cst_195 : f32 to vector<64x128xf32>
    %699 = arith.maximumf %697, %698 : vector<64x128xf32>
    %700 = vector.extract_strided_slice %3 {offsets = [0, 60], sizes = [64, 1], strides = [1, 1]} : vector<64x64xf32> to vector<64x1xf32>
    %701 = vector.broadcast %700 : vector<64x1xf32> to vector<64x128xf32>
    %702 = arith.mulf %699, %701 : vector<64x128xf32>
    %703 = arith.addf %692, %702 : vector<64x128xf32>
    %cst_196 = arith.constant 6.100000e+01 : f32
    %704 = vector.broadcast %cst_196 : f32 to vector<64x128xf32>
    %705 = arith.subf %31, %704 : vector<64x128xf32>
    %706 = math.absf %705 : vector<64x128xf32>
    %cst_197 = arith.constant 1.000000e+00 : f32
    %707 = vector.broadcast %cst_197 : f32 to vector<64x128xf32>
    %708 = arith.subf %707, %706 : vector<64x128xf32>
    %cst_198 = arith.constant 0.000000e+00 : f32
    %709 = vector.broadcast %cst_198 : f32 to vector<64x128xf32>
    %710 = arith.maximumf %708, %709 : vector<64x128xf32>
    %711 = vector.extract_strided_slice %3 {offsets = [0, 61], sizes = [64, 1], strides = [1, 1]} : vector<64x64xf32> to vector<64x1xf32>
    %712 = vector.broadcast %711 : vector<64x1xf32> to vector<64x128xf32>
    %713 = arith.mulf %710, %712 : vector<64x128xf32>
    %714 = arith.addf %703, %713 : vector<64x128xf32>
    %cst_199 = arith.constant 6.200000e+01 : f32
    %715 = vector.broadcast %cst_199 : f32 to vector<64x128xf32>
    %716 = arith.subf %31, %715 : vector<64x128xf32>
    %717 = math.absf %716 : vector<64x128xf32>
    %cst_200 = arith.constant 1.000000e+00 : f32
    %718 = vector.broadcast %cst_200 : f32 to vector<64x128xf32>
    %719 = arith.subf %718, %717 : vector<64x128xf32>
    %cst_201 = arith.constant 0.000000e+00 : f32
    %720 = vector.broadcast %cst_201 : f32 to vector<64x128xf32>
    %721 = arith.maximumf %719, %720 : vector<64x128xf32>
    %722 = vector.extract_strided_slice %3 {offsets = [0, 62], sizes = [64, 1], strides = [1, 1]} : vector<64x64xf32> to vector<64x1xf32>
    %723 = vector.broadcast %722 : vector<64x1xf32> to vector<64x128xf32>
    %724 = arith.mulf %721, %723 : vector<64x128xf32>
    %725 = arith.addf %714, %724 : vector<64x128xf32>
    %cst_202 = arith.constant 6.300000e+01 : f32
    %726 = vector.broadcast %cst_202 : f32 to vector<64x128xf32>
    %727 = arith.subf %31, %726 : vector<64x128xf32>
    %728 = math.absf %727 : vector<64x128xf32>
    %cst_203 = arith.constant 1.000000e+00 : f32
    %729 = vector.broadcast %cst_203 : f32 to vector<64x128xf32>
    %730 = arith.subf %729, %728 : vector<64x128xf32>
    %cst_204 = arith.constant 0.000000e+00 : f32
    %731 = vector.broadcast %cst_204 : f32 to vector<64x128xf32>
    %732 = arith.maximumf %730, %731 : vector<64x128xf32>
    %733 = vector.extract_strided_slice %3 {offsets = [0, 63], sizes = [64, 1], strides = [1, 1]} : vector<64x64xf32> to vector<64x1xf32>
    %734 = vector.broadcast %733 : vector<64x1xf32> to vector<64x128xf32>
    %735 = arith.mulf %732, %734 : vector<64x128xf32>
    %736 = arith.addf %725, %735 : vector<64x128xf32>
    %737 = arith.addf %1, %736 : vector<64x128xf32>
    %c0_205 = arith.constant 0 : index
    %c0_206 = arith.constant 0 : index
    %c0_207 = arith.constant 0 : index
    %738 = vector.load %arg5[%c0_205, %c0_206, %c0_207] : memref<1x64x128xf32, #tpu.memory_space<vmem>>, vector<1x64x128xf32>
    %739 = vector.shape_cast %738 : vector<1x64x128xf32> to vector<64x128xf32>
    %740 = vector.shape_cast %737 : vector<64x128xf32> to vector<1x64x128xf32>
    tpu.vector_store %arg5[%c0_205, %c0_206, %c0_207], %740 {strides = array<i32>} : memref<1x64x128xf32, #tpu.memory_space<vmem>>, vector<1x64x128xf32>,
    return
  }
  func.func @transform_0(%arg0: i32, %arg1: i32) -> (i32, i32, i32) {
    %c0_i32 = arith.constant 0 : i32
    %c0_i32_0 = arith.constant 0 : i32
    return %arg0, %arg1, %c0_i32 : i32, i32, i32
  }
  func.func @transform_1(%arg0: i32, %arg1: i32) -> (i32, i32, i32) {
    %c0_i32 = arith.constant 0 : i32
    %c0_i32_0 = arith.constant 0 : i32
    return %arg0, %arg1, %c0_i32 : i32, i32, i32
  }
  func.func @transform_2(%arg0: i32, %arg1: i32) -> (i32, i32) {
    %c0_i32 = arith.constant 0 : i32
    %c0_i32_0 = arith.constant 0 : i32
    %c0_i32_1 = arith.constant 0 : i32
    return %c0_i32, %c0_i32_0 : i32, i32
  }
  func.func @transform_3(%arg0: i32, %arg1: i32) -> (i32, i32, i32) {
    %c0_i32 = arith.constant 0 : i32
    %c0_i32_0 = arith.constant 0 : i32
    return %arg0, %arg1, %c0_i32 : i32, i32, i32
  }
}

</mosaic_0001>

<llo_original>
// kernel: tpu_custom_call.1
$region0: #{tpu_custom_call.1}
  #allocation0 [shape = 'u32[]', space=smem, size = 0x4, offset = 0x4, fixed_abs, tag = 'smem constant byte address 0x4 - core index']
  #allocation1 [shape = 'u32[144,128]{1,0:T(1,128)}', space=vmem, size = 0x12000, scoped, tag = 'internal scratch']
  %s0 = inlined_call_operand.vmem [shape: f32[2,128,128], index: 0, kind: input, shape index: {}]
  %s1 = inlined_call_operand.vmem [shape: f32[2,128,64], index: 1, kind: input, shape index: {}]
  %s2 = inlined_call_operand.vmem [shape: bf16[128,128], index: 2, kind: input, shape index: {}]
  %s3 = inlined_call_operand.hbm [shape: f32[2,128,128], index: 3, kind: output, shape index: {}]
  %s4 = sld [smem:[#allocation0]]
  $region45: #{tpu_custom_call.1} parent=0
    _
  %s6 = ssub.s32 1, %s4
  %s7 = scalar_select 0, %s6, %s4
  $region1: #{tpu_custom_call.1} parent=0
    #allocation2 [shape = 'u8[65536]{0}', space=vmem, size = 0x10000, scoped, tag = 'output window, operand 0']
    #allocation3 [shape = 's32[2]{0}', space=sflag, size = 0x8, scoped, tag = 'scoped memory for tpu_custom_call.1']
    %8 = vsyncpa [#allocation3], 0
    %s9 = scalar_lea.sflag [#allocation3], 1
    %10 = vsyncpa %s9, 0
    loop: start=0, step=1, limit=6
    $region2: #{tpu_custom_call.1} parent=1 // loop_pre_header
      _
    $region3: #{tpu_custom_call.1} parent=1 // loop_header
      %s12 = sphi 0, %s16
      %p13 = scmp.ge.s32.totalorder %s12, 6
      %s19 = sphi 0, %s31
      %s20 = sphi 0, %s27
      %s21 = sphi 0, %s19
      %s22 = sphi 0, %s20
      %s23 = sphi 0, %s21
      %s24 = sphi 0, %s22
      %s36 = sphi 0, %s38
      %s39 = sphi 0, %s36
      %s40 = sphi 0, %s39
      %s56 = sphi 0, %s40
      %s64 = sphi 0, %s66
      %s67 = sphi 0, %s64
      %s68 = sphi 0, %s67
      %s84 = sphi 0, %s68
      %s88 = sphi 0, %s88
      %s90 = sphi 0, %s88
      %s91 = sphi 0, %s90
      %s105 = sphi 0, %s91
      %s113 = sphi 0, %s115
      %s116 = sphi 0, %s113
      %s117 = sphi 0, %s116
      %s133 = sphi 0, %s117
    $region4: #{tpu_custom_call.1} parent=1 // loop_header_branch
      %15 = sbr.rel (%p13) target = $region8
    $region5: #{tpu_custom_call.1} parent=1 // loop_body
      %s17 = ssub.s32 %s12, 1
      %s18 = ssub.s32 %s12, 2
      %s25 = sadd.s32 1, %s20
      %p26 = scmp.ge.s32.totalorder %s25, 2
      %s27 = scalar_select %p26, 0, %s25
      %s28 = sadd.s32 1, %s19
      %s29 = scalar_select %p26, %s28, %s19
      %p30 = scmp.ge.s32.totalorder %s29, 2
      %s31 = scalar_select %p30, 0, %s29
      %s32 = ssub.s32 %s19, %s31
      %s33 = ssub.s32 %s20, %s27
      %s34 = sor.u32 %s32, %s33
      %p35 = scmp.eq.s32.totalorder %s34, 0
      %s37 = sadd.s32 %s36, 1
      %s38 = scalar_select %p35, %s36, %s37
      %p41 = pneg %p35
      %p42 = scmp.eq.s32.totalorder %s12, 3
      %p43 = por %p41, %p42
      %p44 = scmp.ne.s32.totalorder %s36, %s39
      %p45 = scmp.eq.s32.totalorder %s12, 0
      %p46 = por %p44, %p45
      %p47 = scmp.ne.s32.totalorder %s36, %s39
      %p48 = scmp.eq.s32.totalorder %s17, 3
      %p49 = por %p47, %p48
      %p50 = scmp.ne.s32.totalorder %s39, %s40
      %p51 = scmp.eq.s32.totalorder %s17, 0
      %p52 = por %p50, %p51
      %p53 = scmp.ne.s32.totalorder %s39, %s40
      %p54 = scmp.eq.s32.totalorder %s18, 3
      %p55 = por %p53, %p54
      %p57 = scmp.ne.s32.totalorder %s40, %s56
      %p58 = scmp.eq.s32.totalorder %s18, 0
      %p59 = por %p57, %p58
      %s60 = ssub.s32 %s19, %s31
      %s61 = ssub.s32 %s20, %s27
      %s62 = sor.u32 %s60, %s61
      %p63 = scmp.eq.s32.totalorder %s62, 0
      %s65 = sadd.s32 %s64, 1
      %s66 = scalar_select %p63, %s64, %s65
      %p69 = pneg %p63
      %p70 = scmp.eq.s32.totalorder %s12, 3
      %p71 = por %p69, %p70
      %p72 = scmp.ne.s32.totalorder %s64, %s67
      %p73 = scmp.eq.s32.totalorder %s12, 0
      %p74 = por %p72, %p73
      %p75 = scmp.ne.s32.totalorder %s64, %s67
      %p76 = scmp.eq.s32.totalorder %s17, 3
      %p77 = por %p75, %p76
      %p78 = scmp.ne.s32.totalorder %s67, %s68
      %p79 = scmp.eq.s32.totalorder %s17, 0
      %p80 = por %p78, %p79
      %p81 = scmp.ne.s32.totalorder %s67, %s68
      %p82 = scmp.eq.s32.totalorder %s18, 3
      %p83 = por %p81, %p82
      %p85 = scmp.ne.s32.totalorder %s68, %s84
      %p86 = scmp.eq.s32.totalorder %s18, 0
      %p87 = por %p85, %p86
      %s89 = sadd.s32 %s88, 1
      %p92 = scmp.eq.s32.totalorder %s12, 3
      %p93 = scmp.ne.s32.totalorder %s88, %s90
      %p94 = scmp.eq.s32.totalorder %s12, 0
      %p95 = por %p93, %p94
      %p96 = scmp.ne.s32.totalorder %s88, %s90
      %p97 = scmp.eq.s32.totalorder %s17, 3
      %p98 = por %p96, %p97
      %p99 = scmp.ne.s32.totalorder %s90, %s91
      %p100 = scmp.eq.s32.totalorder %s17, 0
      %p101 = por %p99, %p100
      %p102 = scmp.ne.s32.totalorder %s90, %s91
      %p103 = scmp.eq.s32.totalorder %s18, 3
      %p104 = por %p102, %p103
      %p106 = scmp.ne.s32.totalorder %s91, %s105
      %p107 = scmp.eq.s32.totalorder %s18, 0
      %p108 = por %p106, %p107
      %s109 = ssub.s32 %s19, %s31
      %s110 = ssub.s32 %s20, %s27
      %s111 = sor.u32 %s109, %s110
      %p112 = scmp.eq.s32.totalorder %s111, 0
      %s114 = sadd.s32 %s113, 1
      %s115 = scalar_select %p112, %s113, %s114
      %p118 = pneg %p112
      %p119 = scmp.eq.s32.totalorder %s12, 3
      %p120 = por %p118, %p119
      %p121 = scmp.ne.s32.totalorder %s113, %s116
      %p122 = scmp.eq.s32.totalorder %s12, 0
      %p123 = por %p121, %p122
      %p124 = scmp.ne.s32.totalorder %s113, %s116
      %p125 = scmp.eq.s32.totalorder %s17, 3
      %p126 = por %p124, %p125
      %p127 = scmp.ne.s32.totalorder %s116, %s117
      %p128 = scmp.eq.s32.totalorder %s17, 0
      %p129 = por %p127, %p128
      %p130 = scmp.ne.s32.totalorder %s116, %s117
      %p131 = scmp.eq.s32.totalorder %s18, 3
      %p132 = por %p130, %p131
      %p134 = scmp.ne.s32.totalorder %s117, %s133
      %p135 = scmp.eq.s32.totalorder %s18, 0
      %p136 = por %p134, %p135
      %p137 = scmp.le.s32.totalorder 1, %s12
      %p138 = scmp.lt.s32.totalorder %s12, 5
      %p139 = pnand %p137, %p138
      %p140 = pneg %p139
      // Predicated region
      $region9: #{tpu_custom_call.1} parent=5 // pred_check
        _
      $region10: #{tpu_custom_call.1} parent=5 // pred_check_branch
        %142 = sbr.rel (%p139) target = $region12
      $region11: #{tpu_custom_call.1} parent=5 // pred_region
        %s143 = ssub.s32 %s12, 1
        // Predicated region
        $region13: #{tpu_custom_call.1} parent=11 // pred_check
          %p144 = pneg %p101
        $region14: #{tpu_custom_call.1} parent=11 // pred_check_branch
          %146 = sbr.rel (%p144) target = $region16
        $region15: #{tpu_custom_call.1} parent=11 // pred_region
          _
        $region16: #{tpu_custom_call.1} parent=11 // pred_fallthru
          _
      $region12: #{tpu_custom_call.1} parent=5 // pred_fallthru
        _
      %p147 = scmp.lt.s32.totalorder %s12, 4
      // Predicated region
      $region17: #{tpu_custom_call.1} parent=5 // pred_check
        %p148 = pneg %p147
      $region18: #{tpu_custom_call.1} parent=5 // pred_check_branch
        %150 = sbr.rel (%p148) target = $region20
      $region19: #{tpu_custom_call.1} parent=5 // pred_region
        // Predicated region
        $region21: #{tpu_custom_call.1} parent=19 // pred_check
          %p151 = pneg %p46
        $region22: #{tpu_custom_call.1} parent=19 // pred_check_branch
          %153 = sbr.rel (%p151) target = $region24
        $region23: #{tpu_custom_call.1} parent=19 // pred_region
          %s154 = smul.u32 8, %s20
          %p155 = scmp.lt.s32.totalorder %s19, 1
          %s156 = scalar_select %p155, %s19, 1
          %p157 = scmp.lt.s32.totalorder %s154, 15
          %s158 = scalar_select %p157, %s154, 15
          %s159 = smul.addr %s156, 16
          %s160 = sadd.s32 %s158, %s159
          %s161 = smul.addr %s160, 8
          %s162 = scalar_lea.vmem %s0, %s161
          %s163 = smul.u32 8, %s20
        $region24: #{tpu_custom_call.1} parent=19 // pred_fallthru
          _
        // Predicated region
        $region25: #{tpu_custom_call.1} parent=19 // pred_check
          %p164 = pneg %p74
        $region26: #{tpu_custom_call.1} parent=19 // pred_check_branch
          %166 = sbr.rel (%p164) target = $region28
        $region27: #{tpu_custom_call.1} parent=19 // pred_region
          %s167 = smul.u32 8, %s20
          %p168 = scmp.lt.s32.totalorder %s19, 1
          %s169 = scalar_select %p168, %s19, 1
          %p170 = scmp.lt.s32.totalorder %s167, 15
          %s171 = scalar_select %p170, %s167, 15
          %s172 = smul.addr %s169, 16
          %s173 = sadd.s32 %s171, %s172
          %s174 = smul.addr %s173, 8
          %s175 = scalar_lea.vmem %s1, %s174
          %s176 = smul.u32 8, %s20
        $region28: #{tpu_custom_call.1} parent=19 // pred_fallthru
          _
      $region20: #{tpu_custom_call.1} parent=5 // pred_fallthru
        _
      %p177 = scmp.le.s32.totalorder 1, %s12
      %p178 = scmp.lt.s32.totalorder %s12, 5
      %p179 = pnand %p177, %p178
      %p180 = pneg %p179
      // Predicated region
      $region29: #{tpu_custom_call.1} parent=5 // pred_check
        _
      $region30: #{tpu_custom_call.1} parent=5 // pred_check_branch
        %182 = sbr.rel (%p179) target = $region32
      $region31: #{tpu_custom_call.1} parent=5 // pred_region
        %s183 = ssub.s32 %s12, 1
        %s184 = smul.u32 8, %s22
        %p185 = scmp.lt.s32.totalorder %s21, 1
        %s186 = scalar_select %p185, %s21, 1
        %p187 = scmp.lt.s32.totalorder %s184, 15
        %s188 = scalar_select %p187, %s184, 15
        %s189 = smul.addr %s186, 16
        %s190 = sadd.s32 %s188, %s189
        %s191 = smul.addr %s190, 8
        %s192 = scalar_lea.vmem %s0, %s191
        %p193 = pneg %p52
        %p194 = pneg %p49
        %s195 = smul.u32 8, %s22
        %p196 = scmp.lt.s32.totalorder %s21, 1
        %s197 = scalar_select %p196, %s21, 1
        %p198 = scmp.lt.s32.totalorder %s195, 15
        %s199 = scalar_select %p198, %s195, 15
        %s200 = smul.addr %s197, 16
        %s201 = sadd.s32 %s199, %s200
        %s202 = smul.addr %s201, 8
        %s203 = scalar_lea.vmem %s1, %s202
        %p204 = pneg %p80
        %p205 = pneg %p77
        %p206 = pneg %p101
        %p207 = pneg %p98
        %p208 = pneg %p129
        %p209 = pneg %p126
        %s210 = sand.u32 %s116, 1
        %s211 = scalar_lea.sflag [#allocation3], %s210
        %s212 = sand.u32 %s116, 1
        %s213 = smul.addr %s212, 64
        %s214 = scalar_lea.vmem [#allocation2], %s213
        %s215 = smul.u32 8, %s22
        %p216 = scmp.lt.s32.totalorder %s21, 1
        %s217 = scalar_select %p216, %s21, 1
        %p218 = scmp.lt.s32.totalorder %s215, 15
        %s219 = scalar_select %p218, %s215, 15
        %s220 = smul.addr %s217, 16
        %s221 = sadd.s32 %s219, %s220
        %s222 = smul.addr %s221, 8
        %s223 = scalar_lea.vmem %s0, %s222
        %s224 = smul.u32 8, %s22
        %s225 = smul.u32 8, %s22
        %p226 = scmp.lt.s32.totalorder %s21, 1
        %s227 = scalar_select %p226, %s21, 1
        %p228 = scmp.lt.s32.totalorder %s225, 15
        %s229 = scalar_select %p228, %s225, 15
        %s230 = smul.addr %s227, 16
        %s231 = sadd.s32 %s229, %s230
        %s232 = smul.addr %s231, 8
        %s233 = scalar_lea.vmem %s1, %s232
        %s234 = smul.u32 8, %s22
        %s235 = smul.u32 8, %s22
        %v237 = vld [vmem:[%s223] sm:$0xff]
        %v238 = vld [vmem:[%s223 + $0x8] sm:$0xff]
        %v239 = vld [vmem:[%s223 + $0x10] sm:$0xff]
        %v240 = vld [vmem:[%s223 + $0x18] sm:$0xff]
        %v241 = vld [vmem:[%s223 + $0x20] sm:$0xff]
        %v242 = vld [vmem:[%s223 + $0x28] sm:$0xff]
        %v243 = vld [vmem:[%s223 + $0x30] sm:$0xff]
        %v244 = vld [vmem:[%s223 + $0x38] sm:$0xff]
        %v245 = vld [vmem:[%s233] sm:$0xff]
        %v246 = vld [vmem:[%s233 + $0x8] sm:$0xff]
        %v247 = vld [vmem:[%s233 + $0x10] sm:$0xff]
        %v248 = vld [vmem:[%s233 + $0x18] sm:$0xff]
        %v249 = vld [vmem:[%s233 + $0x20] sm:$0xff]
        %v250 = vld [vmem:[%s233 + $0x28] sm:$0xff]
        %v251 = vld [vmem:[%s233 + $0x30] sm:$0xff]
        %v252 = vld [vmem:[%s233 + $0x38] sm:$0xff]
        %v253 = vld [vmem:[%s2] sm:$0xf]
        %v254 = vld [vmem:[%s2 + $0x4] sm:$0xf]
        %v255 = vld [vmem:[%s2 + $0x8] sm:$0xf]
        %v256 = vld [vmem:[%s2 + $0xc] sm:$0xf]
        %v257 = vld [vmem:[%s2 + $0x10] sm:$0xf]
        %v258 = vld [vmem:[%s2 + $0x14] sm:$0xf]
        %v259 = vld [vmem:[%s2 + $0x18] sm:$0xf]
        %v260 = vld [vmem:[%s2 + $0x1c] sm:$0xf]
        %v261 = vld [vmem:[%s2 + $0x20] sm:$0xf]
        %v262 = vld [vmem:[%s2 + $0x24] sm:$0xf]
        %v263 = vld [vmem:[%s2 + $0x28] sm:$0xf]
        %v264 = vld [vmem:[%s2 + $0x2c] sm:$0xf]
        %v265 = vld [vmem:[%s2 + $0x30] sm:$0xf]
        %v266 = vld [vmem:[%s2 + $0x34] sm:$0xf]
        %v267 = vld [vmem:[%s2 + $0x38] sm:$0xf]
        %v268 = vld [vmem:[%s2 + $0x3c] sm:$0xf]
        %v269 = vxor.u32 %v237, 2147483648
        %v270 = vxor.u32 %v238, 2147483648
        %v271 = vxor.u32 %v239, 2147483648
        %v272 = vxor.u32 %v240, 2147483648
        %v273 = vxor.u32 %v241, 2147483648
        %v274 = vxor.u32 %v242, 2147483648
        %v275 = vxor.u32 %v243, 2147483648
        %v276 = vxor.u32 %v244, 2147483648
        %v277 = vmul.f32 %v269, 1.442695
        %v278 = vpow.pop %v277
        %v279 = vmul.f32 %v270, 1.442695
        %v280 = vpow.pop %v279
        %v281 = vmul.f32 %v271, 1.442695
        %v282 = vpow.pop %v281
        %v283 = vmul.f32 %v272, 1.442695
        %v284 = vpow.pop %v283
        %v285 = vmul.f32 %v273, 1.442695
        %v286 = vpow.pop %v285
        %v287 = vmul.f32 %v274, 1.442695
        %v288 = vpow.pop %v287
        %v289 = vmul.f32 %v275, 1.442695
        %v290 = vpow.pop %v289
        %v291 = vmul.f32 %v276, 1.442695
        %v292 = vpow.pop %v291
        %v293 = vadd.f32 %v278, 1.0
        %v294 = vadd.f32 %v280, 1.0
        %v295 = vadd.f32 %v282, 1.0
        %v296 = vadd.f32 %v284, 1.0
        %v297 = vadd.f32 %v286, 1.0
        %v298 = vadd.f32 %v288, 1.0
        %v299 = vadd.f32 %v290, 1.0
        %v300 = vadd.f32 %v292, 1.0
        %v301 = vrcp.pop %v293
        %v302 = vmul.f32 1.0, %v301
        %v303 = vrcp.pop %v294
        %v304 = vmul.f32 1.0, %v303
        %v305 = vrcp.pop %v295
        %v306 = vmul.f32 1.0, %v305
        %v307 = vrcp.pop %v296
        %v308 = vmul.f32 1.0, %v307
        %v309 = vrcp.pop %v297
        %v310 = vmul.f32 1.0, %v309
        %v311 = vrcp.pop %v298
        %v312 = vmul.f32 1.0, %v311
        %v313 = vrcp.pop %v299
        %v314 = vmul.f32 1.0, %v313
        %v315 = vrcp.pop %v300
        %v316 = vmul.f32 1.0, %v315
        %v317 = vlaneseq
        %v318 = vshrl.u32 %v317, 7
        %v319 = vadd.s32 %v318, 8
        %v320 = vadd.s32 %v318, 16
        %v321 = vadd.s32 %v318, 24
        %v322 = vadd.s32 %v318, 32
        %v323 = vadd.s32 %v318, 40
        %v324 = vadd.s32 %v318, 48
        %v325 = vadd.s32 %v318, 56
        %s326 = smul.u32 %s22, 64
        %v327 = vstv %s326
        %v328 = vadd.s32 %v318, %v327
        %v329 = vadd.s32 %v319, %v327
        %v330 = vadd.s32 %v320, %v327
        %v331 = vadd.s32 %v321, %v327
        %v332 = vadd.s32 %v322, %v327
        %v333 = vadd.s32 %v323, %v327
        %v334 = vadd.s32 %v324, %v327
        %v335 = vadd.s32 %v325, %v327
        %v336 = vlaneseq
        %v337 = vand.u32 %v336, 127
        %vm338 = vcmp.le.s32.totalorder %v337, %v328
        %vm339 = vcmp.le.s32.totalorder %v337, %v329
        %vm340 = vcmp.le.s32.totalorder %v337, %v330
        %vm341 = vcmp.le.s32.totalorder %v337, %v331
        %vm342 = vcmp.le.s32.totalorder %v337, %v332
        %vm343 = vcmp.le.s32.totalorder %v337, %v333
        %vm344 = vcmp.le.s32.totalorder %v337, %v334
        %vm345 = vcmp.le.s32.totalorder %v337, %v335
        %v346 = vsel %vm338, %v302, 0.0
        %v347 = vsel %vm339, %v304, 0.0
        %v348 = vsel %vm340, %v306, 0.0
        %v349 = vsel %vm341, %v308, 0.0
        %v350 = vsel %vm342, %v310, 0.0
        %v351 = vsel %vm343, %v312, 0.0
        %v352 = vsel %vm344, %v314, 0.0
        %v353 = vsel %vm345, %v316, 0.0
        %v354 = vpack.c.bf16 %v347, %v346
        %v355 = vpack.c.bf16 %v349, %v348
        %v356 = vpack.c.bf16 %v351, %v350
        %v357 = vpack.c.bf16 %v353, %v352
        %v358 = vunpack.c.l.bf16 %v354
        %v359 = vunpack.c.h.bf16 %v354
        %v360 = vunpack.c.l.bf16 %v355
        %v361 = vunpack.c.h.bf16 %v355
        %v362 = vunpack.c.l.bf16 %v356
        %v363 = vunpack.c.h.bf16 %v356
        %v364 = vunpack.c.l.bf16 %v357
        %v365 = vunpack.c.h.bf16 %v357
        %v366 = vsub.f32 %v346, %v358
        %v367 = vsub.f32 %v347, %v359
        %v368 = vsub.f32 %v348, %v360
        %v369 = vsub.f32 %v349, %v361
        %v370 = vsub.f32 %v350, %v362
        %v371 = vsub.f32 %v351, %v363
        %v372 = vsub.f32 %v352, %v364
        %v373 = vsub.f32 %v353, %v365
        %v374 = vpack.c.bf16 %v367, %v366
        %v375 = vpack.c.bf16 %v369, %v368
        %v376 = vpack.c.bf16 %v371, %v370
        %v377 = vpack.c.bf16 %v373, %v372
        %v378 = vunpack.c.l.bf16 %v374
        %v379 = vunpack.c.h.bf16 %v374
        %v380 = vunpack.c.l.bf16 %v375
        %v381 = vunpack.c.h.bf16 %v375
        %v382 = vunpack.c.l.bf16 %v376
        %v383 = vunpack.c.h.bf16 %v376
        %v384 = vunpack.c.l.bf16 %v377
        %v385 = vunpack.c.h.bf16 %v377
        %v386 = vsub.f32 %v366, %v378
        %v387 = vsub.f32 %v367, %v379
        %v388 = vsub.f32 %v368, %v380
        %v389 = vsub.f32 %v369, %v381
        %v390 = vsub.f32 %v370, %v382
        %v391 = vsub.f32 %v371, %v383
        %v392 = vsub.f32 %v372, %v384
        %v393 = vsub.f32 %v373, %v385
        %v394 = vpack.c.bf16 %v387, %v386
        %v395 = vpack.c.bf16 %v389, %v388
        %v396 = vpack.c.bf16 %v391, %v390
        %v397 = vpack.c.bf16 %v393, %v392
        %v414 = vunpack.c.l.b16 %v253
        %v415 = vunpack.c.l.b16 %v254
        %v416 = vunpack.c.l.b16 %v255
        %v417 = vunpack.c.l.b16 %v256
        %v418 = vunpack.c.l.b16 %v257
        %v419 = vunpack.c.l.b16 %v258
        %v420 = vunpack.c.l.b16 %v259
        %v421 = vunpack.c.l.b16 %v260
        %v422 = vunpack.c.l.b16 %v261
        %v423 = vunpack.c.l.b16 %v262
        %v424 = vunpack.c.l.b16 %v263
        %v425 = vunpack.c.l.b16 %v264
        %v426 = vunpack.c.l.b16 %v265
        %v427 = vunpack.c.l.b16 %v266
        %v428 = vunpack.c.l.b16 %v267
        %v429 = vunpack.c.l.b16 %v268
        %v430 = vpack.c.b16 %v415, %v414
        %v431 = vpack.c.b16 %v417, %v416
        %v432 = vpack.c.b16 %v419, %v418
        %v433 = vpack.c.b16 %v421, %v420
        %v434 = vpack.c.b16 %v423, %v422
        %v435 = vpack.c.b16 %v425, %v424
        %v436 = vpack.c.b16 %v427, %v426
        %v437 = vpack.c.b16 %v429, %v428
        %446 = vmatprep.subr.bf16.mxu0 0
        %447 = vmatpush1.bf16.msra.mxu0 %v437
        %448 = vmatprep.subr.bf16.mxu0 0
        %449 = vmatpush1.bf16.msra.mxu0 %v436
        %450 = vmatprep.subr.bf16.mxu0 0
        %451 = vmatpush1.bf16.msra.mxu0 %v435
        %452 = vmatprep.subr.bf16.mxu0 0
        %453 = vmatpush1.bf16.msra.mxu0 %v434
        %454 = vmatprep.subr.bf16.mxu0 0
        %455 = vmatpush1.bf16.msra.mxu0 %v433
        %456 = vmatprep.subr.bf16.mxu0 0
        %457 = vmatpush1.bf16.msra.mxu0 %v432
        %458 = vmatprep.subr.bf16.mxu0 0
        %459 = vmatpush1.bf16.msra.mxu0 %v431
        %460 = vmatprep.subr.bf16.mxu0 0
        %461 = vmatpush1.bf16.msra.mxu0 %v430
        %462 = vmatprep.subr.bf16.mxu0 0
        %463 = vmatpush2.bf16.msra.mxu0 0
        %464 = vmatprep.subr.bf16.mxu0 0
        %465 = vmatpush2.bf16.msra.mxu0 0
        %466 = vmatprep.subr.bf16.mxu0 0
        %467 = vmatpush2.bf16.msra.mxu0 0
        %468 = vmatprep.subr.bf16.mxu0 0
        %469 = vmatpush2.bf16.msra.mxu0 0
        %470 = vmatprep.subr.bf16.mxu0 0
        %471 = vmatpush2.bf16.msra.mxu0 0
        %472 = vmatprep.subr.bf16.mxu0 0
        %473 = vmatpush2.bf16.msra.mxu0 0
        %474 = vmatprep.subr.bf16.mxu0 0
        %475 = vmatpush2.bf16.msra.mxu0 0
        %476 = vmatprep.subr.bf16.mxu0 0
        %477 = vmatpush2.bf16.msra.mxu0 0
        %478 = vmatprep.mubr.bf16.mxu0 0
        %479 = vmatmul.mubr.bf16.gmra.mxu0 %v374
        %v480 = vpop.f32.mrf.mxu0
        %v481 = vadd.f32 0.0, %v480
        %v482 = vpop.f32.mrf.mxu0
        %v483 = vpop.f32.mrf.mxu0
        %v484 = vadd.f32 0.0, %v483
        %v485 = vpop.f32.mrf.mxu0
        %486 = vmatprep.mubr.bf16.mxu0 0
        %487 = vmatmul.mubr.bf16.gmra.mxu0 %v375
        %v488 = vpop.f32.mrf.mxu0
        %v489 = vadd.f32 0.0, %v488
        %v490 = vpop.f32.mrf.mxu0
        %v491 = vpop.f32.mrf.mxu0
        %v492 = vadd.f32 0.0, %v491
        %v493 = vpop.f32.mrf.mxu0
        %494 = vmatprep.mubr.bf16.mxu0 0
        %495 = vmatmul.mubr.bf16.gmra.mxu0 %v376
        %v496 = vpop.f32.mrf.mxu0
        %v497 = vadd.f32 0.0, %v496
        %v498 = vpop.f32.mrf.mxu0
        %v499 = vpop.f32.mrf.mxu0
        %v500 = vadd.f32 0.0, %v499
        %v501 = vpop.f32.mrf.mxu0
        %502 = vmatprep.mubr.bf16.mxu0 0
        %503 = vmatmul.mubr.bf16.gmra.mxu0 %v377
        %v504 = vpop.f32.mrf.mxu0
        %v505 = vadd.f32 0.0, %v504
        %v506 = vpop.f32.mrf.mxu0
        %v507 = vpop.f32.mrf.mxu0
        %v508 = vadd.f32 0.0, %v507
        %v509 = vpop.f32.mrf.mxu0
        %510 = vdwg.mxu0
        %511 = vmatprep.subr.bf16.mxu0 0
        %512 = vmatpush1.bf16.msra.mxu0 %v437
        %513 = vmatprep.subr.bf16.mxu0 0
        %514 = vmatpush1.bf16.msra.mxu0 %v436
        %515 = vmatprep.subr.bf16.mxu0 0
        %516 = vmatpush1.bf16.msra.mxu0 %v435
        %517 = vmatprep.subr.bf16.mxu0 0
        %518 = vmatpush1.bf16.msra.mxu0 %v434
        %519 = vmatprep.subr.bf16.mxu0 0
        %520 = vmatpush1.bf16.msra.mxu0 %v433
        %521 = vmatprep.subr.bf16.mxu0 0
        %522 = vmatpush1.bf16.msra.mxu0 %v432
        %523 = vmatprep.subr.bf16.mxu0 0
        %524 = vmatpush1.bf16.msra.mxu0 %v431
        %525 = vmatprep.subr.bf16.mxu0 0
        %526 = vmatpush1.bf16.msra.mxu0 %v430
        %527 = vmatprep.subr.bf16.mxu0 0
        %528 = vmatpush2.bf16.msra.mxu0 0
        %529 = vmatprep.subr.bf16.mxu0 0
        %530 = vmatpush2.bf16.msra.mxu0 0
        %531 = vmatprep.subr.bf16.mxu0 0
        %532 = vmatpush2.bf16.msra.mxu0 0
        %533 = vmatprep.subr.bf16.mxu0 0
        %534 = vmatpush2.bf16.msra.mxu0 0
        %535 = vmatprep.subr.bf16.mxu0 0
        %536 = vmatpush2.bf16.msra.mxu0 0
        %537 = vmatprep.subr.bf16.mxu0 0
        %538 = vmatpush2.bf16.msra.mxu0 0
        %539 = vmatprep.subr.bf16.mxu0 0
        %540 = vmatpush2.bf16.msra.mxu0 0
        %541 = vmatprep.subr.bf16.mxu0 0
        %542 = vmatpush2.bf16.msra.mxu0 0
        %543 = vmatprep.mubr.bf16.mxu0 0
        %544 = vmatmul.mubr.bf16.gmra.mxu0 %v354
        %v545 = vpop.f32.mrf.mxu0
        %v546 = vadd.f32 %v481, %v545
        %v547 = vpop.f32.mrf.mxu0
        %v548 = vpop.f32.mrf.mxu0
        %v549 = vadd.f32 %v484, %v548
        %v550 = vpop.f32.mrf.mxu0
        %551 = vmatprep.mubr.bf16.mxu0 0
        %552 = vmatmul.mubr.bf16.gmra.mxu0 %v355
        %v553 = vpop.f32.mrf.mxu0
        %v554 = vadd.f32 %v489, %v553
        %v555 = vpop.f32.mrf.mxu0
        %v556 = vpop.f32.mrf.mxu0
        %v557 = vadd.f32 %v492, %v556
        %v558 = vpop.f32.mrf.mxu0
        %559 = vmatprep.mubr.bf16.mxu0 0
        %560 = vmatmul.mubr.bf16.gmra.mxu0 %v356
        %v561 = vpop.f32.mrf.mxu0
        %v562 = vadd.f32 %v497, %v561
        %v563 = vpop.f32.mrf.mxu0
        %v564 = vpop.f32.mrf.mxu0
        %v565 = vadd.f32 %v500, %v564
        %v566 = vpop.f32.mrf.mxu0
        %567 = vmatprep.mubr.bf16.mxu0 0
        %568 = vmatmul.mubr.bf16.gmra.mxu0 %v357
        %v569 = vpop.f32.mrf.mxu0
        %v570 = vadd.f32 %v505, %v569
        %v571 = vpop.f32.mrf.mxu0
        %v572 = vpop.f32.mrf.mxu0
        %v573 = vadd.f32 %v508, %v572
        %v574 = vpop.f32.mrf.mxu0
        %575 = vdwg.mxu0
        %576 = vmatprep.subr.bf16.mxu0 0
        %577 = vmatpush1.bf16.msra.mxu0 %v437
        %578 = vmatprep.subr.bf16.mxu0 0
        %579 = vmatpush1.bf16.msra.mxu0 %v436
        %580 = vmatprep.subr.bf16.mxu0 0
        %581 = vmatpush1.bf16.msra.mxu0 %v435
        %582 = vmatprep.subr.bf16.mxu0 0
        %583 = vmatpush1.bf16.msra.mxu0 %v434
        %584 = vmatprep.subr.bf16.mxu0 0
        %585 = vmatpush1.bf16.msra.mxu0 %v433
        %586 = vmatprep.subr.bf16.mxu0 0
        %587 = vmatpush1.bf16.msra.mxu0 %v432
        %588 = vmatprep.subr.bf16.mxu0 0
        %589 = vmatpush1.bf16.msra.mxu0 %v431
        %590 = vmatprep.subr.bf16.mxu0 0
        %591 = vmatpush1.bf16.msra.mxu0 %v430
        %592 = vmatprep.subr.bf16.mxu0 0
        %593 = vmatpush2.bf16.msra.mxu0 0
        %594 = vmatprep.subr.bf16.mxu0 0
        %595 = vmatpush2.bf16.msra.mxu0 0
        %596 = vmatprep.subr.bf16.mxu0 0
        %597 = vmatpush2.bf16.msra.mxu0 0
        %598 = vmatprep.subr.bf16.mxu0 0
        %599 = vmatpush2.bf16.msra.mxu0 0
        %600 = vmatprep.subr.bf16.mxu0 0
        %601 = vmatpush2.bf16.msra.mxu0 0
        %602 = vmatprep.subr.bf16.mxu0 0
        %603 = vmatpush2.bf16.msra.mxu0 0
        %604 = vmatprep.subr.bf16.mxu0 0
        %605 = vmatpush2.bf16.msra.mxu0 0
        %606 = vmatprep.subr.bf16.mxu0 0
        %607 = vmatpush2.bf16.msra.mxu0 0
        %608 = vmatprep.mubr.bf16.mxu0 0
        %609 = vmatmul.mubr.bf16.gmra.mxu0 %v394
        %v610 = vpop.f32.mrf.mxu0
        %v611 = vadd.f32 0.0, %v610
        %v612 = vpop.f32.mrf.mxu0
        %v613 = vpop.f32.mrf.mxu0
        %v614 = vadd.f32 0.0, %v613
        %v615 = vpop.f32.mrf.mxu0
        %616 = vmatprep.mubr.bf16.mxu0 0
        %617 = vmatmul.mubr.bf16.gmra.mxu0 %v395
        %v618 = vpop.f32.mrf.mxu0
        %v619 = vadd.f32 0.0, %v618
        %v620 = vpop.f32.mrf.mxu0
        %v621 = vpop.f32.mrf.mxu0
        %v622 = vadd.f32 0.0, %v621
        %v623 = vpop.f32.mrf.mxu0
        %624 = vmatprep.mubr.bf16.mxu0 0
        %625 = vmatmul.mubr.bf16.gmra.mxu0 %v396
        %v626 = vpop.f32.mrf.mxu0
        %v627 = vadd.f32 0.0, %v626
        %v628 = vpop.f32.mrf.mxu0
        %v629 = vpop.f32.mrf.mxu0
        %v630 = vadd.f32 0.0, %v629
        %v631 = vpop.f32.mrf.mxu0
        %632 = vmatprep.mubr.bf16.mxu0 0
        %633 = vmatmul.mubr.bf16.gmra.mxu0 %v397
        %v634 = vpop.f32.mrf.mxu0
        %v635 = vadd.f32 0.0, %v634
        %v636 = vpop.f32.mrf.mxu0
        %v637 = vpop.f32.mrf.mxu0
        %v638 = vadd.f32 0.0, %v637
        %v639 = vpop.f32.mrf.mxu0
        %640 = vdwg.mxu0
        %v641 = vadd.f32 %v546, %v611
        %v642 = vadd.f32 %v549, %v614
        %v643 = vadd.f32 %v554, %v619
        %v644 = vadd.f32 %v557, %v622
        %v645 = vadd.f32 %v562, %v627
        %v646 = vadd.f32 %v565, %v630
        %v647 = vadd.f32 %v570, %v635
        %v648 = vadd.f32 %v573, %v638
        %v649 = vmin.f32 %v641, 63.0
        %v650 = vmin.f32 %v642, 63.0
        %v651 = vmin.f32 %v643, 63.0
        %v652 = vmin.f32 %v644, 63.0
        %v653 = vmin.f32 %v645, 63.0
        %v654 = vmin.f32 %v646, 63.0
        %v655 = vmin.f32 %v647, 63.0
        %v656 = vmin.f32 %v648, 63.0
        %v657 = vand.u32 2147483647, %v649
        %v658 = vand.u32 2147483647, %v650
        %v659 = vand.u32 2147483647, %v651
        %v660 = vand.u32 2147483647, %v652
        %v661 = vand.u32 2147483647, %v653
        %v662 = vand.u32 2147483647, %v654
        %v663 = vand.u32 2147483647, %v655
        %v664 = vand.u32 2147483647, %v656
        %v665 = vsub.f32 1.0, %v657
        %v666 = vsub.f32 1.0, %v658
        %v667 = vsub.f32 1.0, %v659
        %v668 = vsub.f32 1.0, %v660
        %v669 = vsub.f32 1.0, %v661
        %v670 = vsub.f32 1.0, %v662
        %v671 = vsub.f32 1.0, %v663
        %v672 = vsub.f32 1.0, %v664
        %v673 = vmax.f32 %v665, 0.0
        %v674 = vmax.f32 %v666, 0.0
        %v675 = vmax.f32 %v667, 0.0
        %v676 = vmax.f32 %v668, 0.0
        %v677 = vmax.f32 %v669, 0.0
        %v678 = vmax.f32 %v670, 0.0
        %v679 = vmax.f32 %v671, 0.0
        %v680 = vmax.f32 %v672, 0.0
        %682 = vset.pattern.permute.xlu0 0
        %683 = vperm.xlu0 %682, %v245
        %v684 = vpop.permute.xlu0 %683
        %687 = vset.pattern.permute.xlu0 0
        %688 = vperm.xlu0 %687, %v246
        %v689 = vpop.permute.xlu0 %688
        %692 = vset.pattern.permute.xlu0 0
        %693 = vperm.xlu0 %692, %v247
        %v694 = vpop.permute.xlu0 %693
        %697 = vset.pattern.permute.xlu0 0
        %698 = vperm.xlu0 %697, %v248
        %v699 = vpop.permute.xlu0 %698
        %702 = vset.pattern.permute.xlu0 0
        %703 = vperm.xlu0 %702, %v249
        %v704 = vpop.permute.xlu0 %703
        %707 = vset.pattern.permute.xlu0 0
        %708 = vperm.xlu0 %707, %v250
        %v709 = vpop.permute.xlu0 %708
        %712 = vset.pattern.permute.xlu0 0
        %713 = vperm.xlu0 %712, %v251
        %v714 = vpop.permute.xlu0 %713
        %717 = vset.pattern.permute.xlu0 0
        %718 = vperm.xlu0 %717, %v252
        %v719 = vpop.permute.xlu0 %718
        %v721 = vmul.f32 %v673, %v684
        %v722 = vmul.f32 %v674, %v689
        %v723 = vmul.f32 %v675, %v694
        %v724 = vmul.f32 %v676, %v699
        %v725 = vmul.f32 %v677, %v704
        %v726 = vmul.f32 %v678, %v709
        %v727 = vmul.f32 %v679, %v714
        %v728 = vmul.f32 %v680, %v719
        %v729 = vadd.f32 %v721, 0.0
        %v730 = vadd.f32 %v722, 0.0
        %v731 = vadd.f32 %v723, 0.0
        %v732 = vadd.f32 %v724, 0.0
        %v733 = vadd.f32 %v725, 0.0
        %v734 = vadd.f32 %v726, 0.0
        %v735 = vadd.f32 %v727, 0.0
        %v736 = vadd.f32 %v728, 0.0
        %v737 = vsub.f32 %v649, 1.0
        %v738 = vsub.f32 %v650, 1.0
        %v739 = vsub.f32 %v651, 1.0
        %v740 = vsub.f32 %v652, 1.0
        %v741 = vsub.f32 %v653, 1.0
        %v742 = vsub.f32 %v654, 1.0
        %v743 = vsub.f32 %v655, 1.0
        %v744 = vsub.f32 %v656, 1.0
        %v745 = vand.u32 2147483647, %v737
        %v746 = vand.u32 2147483647, %v738
        %v747 = vand.u32 2147483647, %v739
        %v748 = vand.u32 2147483647, %v740
        %v749 = vand.u32 2147483647, %v741
        %v750 = vand.u32 2147483647, %v742
        %v751 = vand.u32 2147483647, %v743
        %v752 = vand.u32 2147483647, %v744
        %v753 = vsub.f32 1.0, %v745
        %v754 = vsub.f32 1.0, %v746
        %v755 = vsub.f32 1.0, %v747
        %v756 = vsub.f32 1.0, %v748
        %v757 = vsub.f32 1.0, %v749
        %v758 = vsub.f32 1.0, %v750
        %v759 = vsub.f32 1.0, %v751
        %v760 = vsub.f32 1.0, %v752
        %v761 = vmax.f32 %v753, 0.0
        %v762 = vmax.f32 %v754, 0.0
        %v763 = vmax.f32 %v755, 0.0
        %v764 = vmax.f32 %v756, 0.0
        %v765 = vmax.f32 %v757, 0.0
        %v766 = vmax.f32 %v758, 0.0
        %v767 = vmax.f32 %v759, 0.0
        %v768 = vmax.f32 %v760, 0.0
        %769 = vset.pattern.permute.xlu0 1
        %770 = vperm.xlu0 %769, %v245
        %v771 = vpop.permute.xlu0 %770
        %773 = vset.pattern.permute.xlu0 1
        %774 = vperm.xlu0 %773, %v246
        %v775 = vpop.permute.xlu0 %774
        %777 = vset.pattern.permute.xlu0 1
        %778 = vperm.xlu0 %777, %v247
        %v779 = vpop.permute.xlu0 %778
        %781 = vset.pattern.permute.xlu0 1
        %782 = vperm.xlu0 %781, %v248
        %v783 = vpop.permute.xlu0 %782
        %785 = vset.pattern.permute.xlu0 1
        %786 = vperm.xlu0 %785, %v249
        %v787 = vpop.permute.xlu0 %786
        %789 = vset.pattern.permute.xlu0 1
        %790 = vperm.xlu0 %789, %v250
        %v791 = vpop.permute.xlu0 %790
        %793 = vset.pattern.permute.xlu0 1
        %794 = vperm.xlu0 %793, %v251
        %v795 = vpop.permute.xlu0 %794
        %797 = vset.pattern.permute.xlu0 1
        %798 = vperm.xlu0 %797, %v252
        %v799 = vpop.permute.xlu0 %798
        %v801 = vmul.f32 %v761, %v771
        %v802 = vmul.f32 %v762, %v775
        %v803 = vmul.f32 %v763, %v779
        %v804 = vmul.f32 %v764, %v783
        %v805 = vmul.f32 %v765, %v787
        %v806 = vmul.f32 %v766, %v791
        %v807 = vmul.f32 %v767, %v795
        %v808 = vmul.f32 %v768, %v799
        %v809 = vadd.f32 %v729, %v801
        %v810 = vadd.f32 %v730, %v802
        %v811 = vadd.f32 %v731, %v803
        %v812 = vadd.f32 %v732, %v804
        %v813 = vadd.f32 %v733, %v805
        %v814 = vadd.f32 %v734, %v806
        %v815 = vadd.f32 %v735, %v807
        %v816 = vadd.f32 %v736, %v808
        %v817 = vsub.f32 %v649, 2.0
        %v818 = vsub.f32 %v650, 2.0
        %v819 = vsub.f32 %v651, 2.0
        %v820 = vsub.f32 %v652, 2.0
        %v821 = vsub.f32 %v653, 2.0
        %v822 = vsub.f32 %v654, 2.0
        %v823 = vsub.f32 %v655, 2.0
        %v824 = vsub.f32 %v656, 2.0
        %v825 = vand.u32 2147483647, %v817
        %v826 = vand.u32 2147483647, %v818
        %v827 = vand.u32 2147483647, %v819
        %v828 = vand.u32 2147483647, %v820
        %v829 = vand.u32 2147483647, %v821
        %v830 = vand.u32 2147483647, %v822
        %v831 = vand.u32 2147483647, %v823
        %v832 = vand.u32 2147483647, %v824
        %v833 = vsub.f32 1.0, %v825
        %v834 = vsub.f32 1.0, %v826
        %v835 = vsub.f32 1.0, %v827
        %v836 = vsub.f32 1.0, %v828
        %v837 = vsub.f32 1.0, %v829
        %v838 = vsub.f32 1.0, %v830
        %v839 = vsub.f32 1.0, %v831
        %v840 = vsub.f32 1.0, %v832
        %v841 = vmax.f32 %v833, 0.0
        %v842 = vmax.f32 %v834, 0.0
        %v843 = vmax.f32 %v835, 0.0
        %v844 = vmax.f32 %v836, 0.0
        %v845 = vmax.f32 %v837, 0.0
        %v846 = vmax.f32 %v838, 0.0
        %v847 = vmax.f32 %v839, 0.0
        %v848 = vmax.f32 %v840, 0.0
        %849 = vset.pattern.permute.xlu0 2
        %850 = vperm.xlu0 %849, %v245
        %v851 = vpop.permute.xlu0 %850
        %853 = vset.pattern.permute.xlu0 2
        %854 = vperm.xlu0 %853, %v246
        %v855 = vpop.permute.xlu0 %854
        %857 = vset.pattern.permute.xlu0 2
        %858 = vperm.xlu0 %857, %v247
        %v859 = vpop.permute.xlu0 %858
        %861 = vset.pattern.permute.xlu0 2
        %862 = vperm.xlu0 %861, %v248
        %v863 = vpop.permute.xlu0 %862
        %865 = vset.pattern.permute.xlu0 2
        %866 = vperm.xlu0 %865, %v249
        %v867 = vpop.permute.xlu0 %866
        %869 = vset.pattern.permute.xlu0 2
        %870 = vperm.xlu0 %869, %v250
        %v871 = vpop.permute.xlu0 %870
        %873 = vset.pattern.permute.xlu0 2
        %874 = vperm.xlu0 %873, %v251
        %v875 = vpop.permute.xlu0 %874
        %877 = vset.pattern.permute.xlu0 2
        %878 = vperm.xlu0 %877, %v252
        %v879 = vpop.permute.xlu0 %878
        %v881 = vmul.f32 %v841, %v851
        %v882 = vmul.f32 %v842, %v855
        %v883 = vmul.f32 %v843, %v859
        %v884 = vmul.f32 %v844, %v863
        %v885 = vmul.f32 %v845, %v867
        %v886 = vmul.f32 %v846, %v871
        %v887 = vmul.f32 %v847, %v875
        %v888 = vmul.f32 %v848, %v879
        %v889 = vadd.f32 %v809, %v881
        %v890 = vadd.f32 %v810, %v882
        %v891 = vadd.f32 %v811, %v883
        %v892 = vadd.f32 %v812, %v884
        %v893 = vadd.f32 %v813, %v885
        %v894 = vadd.f32 %v814, %v886
        %v895 = vadd.f32 %v815, %v887
        %v896 = vadd.f32 %v816, %v888
        %v897 = vsub.f32 %v649, 3.0
        %v898 = vsub.f32 %v650, 3.0
        %v899 = vsub.f32 %v651, 3.0
        %v900 = vsub.f32 %v652, 3.0
        %v901 = vsub.f32 %v653, 3.0
        %v902 = vsub.f32 %v654, 3.0
        %v903 = vsub.f32 %v655, 3.0
        %v904 = vsub.f32 %v656, 3.0
        %v905 = vand.u32 2147483647, %v897
        %v906 = vand.u32 2147483647, %v898
        %v907 = vand.u32 2147483647, %v899
        %v908 = vand.u32 2147483647, %v900
        %v909 = vand.u32 2147483647, %v901
        %v910 = vand.u32 2147483647, %v902
        %v911 = vand.u32 2147483647, %v903
        %v912 = vand.u32 2147483647, %v904
        %v913 = vsub.f32 1.0, %v905
        %v914 = vsub.f32 1.0, %v906
        %v915 = vsub.f32 1.0, %v907
        %v916 = vsub.f32 1.0, %v908
        %v917 = vsub.f32 1.0, %v909
        %v918 = vsub.f32 1.0, %v910
        %v919 = vsub.f32 1.0, %v911
        %v920 = vsub.f32 1.0, %v912
        %v921 = vmax.f32 %v913, 0.0
        %v922 = vmax.f32 %v914, 0.0
        %v923 = vmax.f32 %v915, 0.0
        %v924 = vmax.f32 %v916, 0.0
        %v925 = vmax.f32 %v917, 0.0
        %v926 = vmax.f32 %v918, 0.0
        %v927 = vmax.f32 %v919, 0.0
        %v928 = vmax.f32 %v920, 0.0
        %929 = vset.pattern.permute.xlu0 3
        %930 = vperm.xlu0 %929, %v245
        %v931 = vpop.permute.xlu0 %930
        %933 = vset.pattern.permute.xlu0 3
        %934 = vperm.xlu0 %933, %v246
        %v935 = vpop.permute.xlu0 %934
        %937 = vset.pattern.permute.xlu0 3
        %938 = vperm.xlu0 %937, %v247
        %v939 = vpop.permute.xlu0 %938
        %941 = vset.pattern.permute.xlu0 3
        %942 = vperm.xlu0 %941, %v248
        %v943 = vpop.permute.xlu0 %942
        %945 = vset.pattern.permute.xlu0 3
        %946 = vperm.xlu0 %945, %v249
        %v947 = vpop.permute.xlu0 %946
        %949 = vset.pattern.permute.xlu0 3
        %950 = vperm.xlu0 %949, %v250
        %v951 = vpop.permute.xlu0 %950
        %953 = vset.pattern.permute.xlu0 3
        %954 = vperm.xlu0 %953, %v251
        %v955 = vpop.permute.xlu0 %954
        %957 = vset.pattern.permute.xlu0 3
        %958 = vperm.xlu0 %957, %v252
        %v959 = vpop.permute.xlu0 %958
        %v961 = vmul.f32 %v921, %v931
        %v962 = vmul.f32 %v922, %v935
        %v963 = vmul.f32 %v923, %v939
        %v964 = vmul.f32 %v924, %v943
        %v965 = vmul.f32 %v925, %v947
        %v966 = vmul.f32 %v926, %v951
        %v967 = vmul.f32 %v927, %v955
        %v968 = vmul.f32 %v928, %v959
        %v969 = vadd.f32 %v889, %v961
        %v970 = vadd.f32 %v890, %v962
        %v971 = vadd.f32 %v891, %v963
        %v972 = vadd.f32 %v892, %v964
        %v973 = vadd.f32 %v893, %v965
        %v974 = vadd.f32 %v894, %v966
        %v975 = vadd.f32 %v895, %v967
        %v976 = vadd.f32 %v896, %v968
        %v977 = vsub.f32 %v649, 4.0
        %v978 = vsub.f32 %v650, 4.0
        %v979 = vsub.f32 %v651, 4.0
        %v980 = vsub.f32 %v652, 4.0
        %v981 = vsub.f32 %v653, 4.0
        %v982 = vsub.f32 %v654, 4.0
        %v983 = vsub.f32 %v655, 4.0
        %v984 = vsub.f32 %v656, 4.0
        %v985 = vand.u32 2147483647, %v977
        %v986 = vand.u32 2147483647, %v978
        %v987 = vand.u32 2147483647, %v979
        %v988 = vand.u32 2147483647, %v980
        %v989 = vand.u32 2147483647, %v981
        %v990 = vand.u32 2147483647, %v982
        %v991 = vand.u32 2147483647, %v983
        %v992 = vand.u32 2147483647, %v984
        %v993 = vsub.f32 1.0, %v985
        %v994 = vsub.f32 1.0, %v986
        %v995 = vsub.f32 1.0, %v987
        %v996 = vsub.f32 1.0, %v988
        %v997 = vsub.f32 1.0, %v989
        %v998 = vsub.f32 1.0, %v990
        %v999 = vsub.f32 1.0, %v991
        %v1000 = vsub.f32 1.0, %v992
        %v1001 = vmax.f32 %v993, 0.0
        %v1002 = vmax.f32 %v994, 0.0
        %v1003 = vmax.f32 %v995, 0.0
        %v1004 = vmax.f32 %v996, 0.0
        %v1005 = vmax.f32 %v997, 0.0
        %v1006 = vmax.f32 %v998, 0.0
        %v1007 = vmax.f32 %v999, 0.0
        %v1008 = vmax.f32 %v1000, 0.0
        %1009 = vset.pattern.permute.xlu0 4
        %1010 = vperm.xlu0 %1009, %v245
        %v1011 = vpop.permute.xlu0 %1010
        %1013 = vset.pattern.permute.xlu0 4
        %1014 = vperm.xlu0 %1013, %v246
        %v1015 = vpop.permute.xlu0 %1014
        %1017 = vset.pattern.permute.xlu0 4
        %1018 = vperm.xlu0 %1017, %v247
        %v1019 = vpop.permute.xlu0 %1018
        %1021 = vset.pattern.permute.xlu0 4
        %1022 = vperm.xlu0 %1021, %v248
        %v1023 = vpop.permute.xlu0 %1022
        %1025 = vset.pattern.permute.xlu0 4
        %1026 = vperm.xlu0 %1025, %v249
        %v1027 = vpop.permute.xlu0 %1026
        %1029 = vset.pattern.permute.xlu0 4
        %1030 = vperm.xlu0 %1029, %v250
        %v1031 = vpop.permute.xlu0 %1030
        %1033 = vset.pattern.permute.xlu0 4
        %1034 = vperm.xlu0 %1033, %v251
        %v1035 = vpop.permute.xlu0 %1034
        %1037 = vset.pattern.permute.xlu0 4
        %1038 = vperm.xlu0 %1037, %v252
        %v1039 = vpop.permute.xlu0 %1038
        %v1041 = vmul.f32 %v1001, %v1011
        %v1042 = vmul.f32 %v1002, %v1015
        %v1043 = vmul.f32 %v1003, %v1019
        %v1044 = vmul.f32 %v1004, %v1023
        %v1045 = vmul.f32 %v1005, %v1027
        %v1046 = vmul.f32 %v1006, %v1031
        %v1047 = vmul.f32 %v1007, %v1035
        %v1048 = vmul.f32 %v1008, %v1039
        %v1049 = vadd.f32 %v969, %v1041
        %v1050 = vadd.f32 %v970, %v1042
        %v1051 = vadd.f32 %v971, %v1043
        %v1052 = vadd.f32 %v972, %v1044
        %v1053 = vadd.f32 %v973, %v1045
        %v1054 = vadd.f32 %v974, %v1046
        %v1055 = vadd.f32 %v975, %v1047
        %v1056 = vadd.f32 %v976, %v1048
        %v1057 = vsub.f32 %v649, 5.0
        %v1058 = vsub.f32 %v650, 5.0
        %v1059 = vsub.f32 %v651, 5.0
        %v1060 = vsub.f32 %v652, 5.0
        %v1061 = vsub.f32 %v653, 5.0
        %v1062 = vsub.f32 %v654, 5.0
        %v1063 = vsub.f32 %v655, 5.0
        %v1064 = vsub.f32 %v656, 5.0
        %v1065 = vand.u32 2147483647, %v1057
        %v1066 = vand.u32 2147483647, %v1058
        %v1067 = vand.u32 2147483647, %v1059
        %v1068 = vand.u32 2147483647, %v1060
        %v1069 = vand.u32 2147483647, %v1061
        %v1070 = vand.u32 2147483647, %v1062
        %v1071 = vand.u32 2147483647, %v1063
        %v1072 = vand.u32 2147483647, %v1064
        %v1073 = vsub.f32 1.0, %v1065
        %v1074 = vsub.f32 1.0, %v1066
        %v1075 = vsub.f32 1.0, %v1067
        %v1076 = vsub.f32 1.0, %v1068
        %v1077 = vsub.f32 1.0, %v1069
        %v1078 = vsub.f32 1.0, %v1070
        %v1079 = vsub.f32 1.0, %v1071
        %v1080 = vsub.f32 1.0, %v1072
        %v1081 = vmax.f32 %v1073, 0.0
        %v1082 = vmax.f32 %v1074, 0.0
        %v1083 = vmax.f32 %v1075, 0.0
        %v1084 = vmax.f32 %v1076, 0.0
        %v1085 = vmax.f32 %v1077, 0.0
        %v1086 = vmax.f32 %v1078, 0.0
        %v1087 = vmax.f32 %v1079, 0.0
        %v1088 = vmax.f32 %v1080, 0.0
        %1089 = vset.pattern.permute.xlu0 5
        %1090 = vperm.xlu0 %1089, %v245
        %v1091 = vpop.permute.xlu0 %1090
        %1093 = vset.pattern.permute.xlu0 5
        %1094 = vperm.xlu0 %1093, %v246
        %v1095 = vpop.permute.xlu0 %1094
        %1097 = vset.pattern.permute.xlu0 5
        %1098 = vperm.xlu0 %1097, %v247
        %v1099 = vpop.permute.xlu0 %1098
        %1101 = vset.pattern.permute.xlu0 5
        %1102 = vperm.xlu0 %1101, %v248
        %v1103 = vpop.permute.xlu0 %1102
        %1105 = vset.pattern.permute.xlu0 5
        %1106 = vperm.xlu0 %1105, %v249
        %v1107 = vpop.permute.xlu0 %1106
        %1109 = vset.pattern.permute.xlu0 5
        %1110 = vperm.xlu0 %1109, %v250
        %v1111 = vpop.permute.xlu0 %1110
        %1113 = vset.pattern.permute.xlu0 5
        %1114 = vperm.xlu0 %1113, %v251
        %v1115 = vpop.permute.xlu0 %1114
        %1117 = vset.pattern.permute.xlu0 5
        %1118 = vperm.xlu0 %1117, %v252
        %v1119 = vpop.permute.xlu0 %1118
        %v1121 = vmul.f32 %v1081, %v1091
        %v1122 = vmul.f32 %v1082, %v1095
        %v1123 = vmul.f32 %v1083, %v1099
        %v1124 = vmul.f32 %v1084, %v1103
        %v1125 = vmul.f32 %v1085, %v1107
        %v1126 = vmul.f32 %v1086, %v1111
        %v1127 = vmul.f32 %v1087, %v1115
        %v1128 = vmul.f32 %v1088, %v1119
        %v1129 = vadd.f32 %v1049, %v1121
        %v1130 = vadd.f32 %v1050, %v1122
        %v1131 = vadd.f32 %v1051, %v1123
        %v1132 = vadd.f32 %v1052, %v1124
        %v1133 = vadd.f32 %v1053, %v1125
        %v1134 = vadd.f32 %v1054, %v1126
        %v1135 = vadd.f32 %v1055, %v1127
        %v1136 = vadd.f32 %v1056, %v1128
        %v1137 = vsub.f32 %v649, 6.0
        %v1138 = vsub.f32 %v650, 6.0
        %v1139 = vsub.f32 %v651, 6.0
        %v1140 = vsub.f32 %v652, 6.0
        %v1141 = vsub.f32 %v653, 6.0
        %v1142 = vsub.f32 %v654, 6.0
        %v1143 = vsub.f32 %v655, 6.0
        %v1144 = vsub.f32 %v656, 6.0
        %v1145 = vand.u32 2147483647, %v1137
        %v1146 = vand.u32 2147483647, %v1138
        %v1147 = vand.u32 2147483647, %v1139
        %v1148 = vand.u32 2147483647, %v1140
        %v1149 = vand.u32 2147483647, %v1141
        %v1150 = vand.u32 2147483647, %v1142
        %v1151 = vand.u32 2147483647, %v1143
        %v1152 = vand.u32 2147483647, %v1144
        %v1153 = vsub.f32 1.0, %v1145
        %v1154 = vsub.f32 1.0, %v1146
        %v1155 = vsub.f32 1.0, %v1147
        %v1156 = vsub.f32 1.0, %v1148
        %v1157 = vsub.f32 1.0, %v1149
        %v1158 = vsub.f32 1.0, %v1150
        %v1159 = vsub.f32 1.0, %v1151
        %v1160 = vsub.f32 1.0, %v1152
        %v1161 = vmax.f32 %v1153, 0.0
        %v1162 = vmax.f32 %v1154, 0.0
        %v1163 = vmax.f32 %v1155, 0.0
        %v1164 = vmax.f32 %v1156, 0.0
        %v1165 = vmax.f32 %v1157, 0.0
        %v1166 = vmax.f32 %v1158, 0.0
        %v1167 = vmax.f32 %v1159, 0.0
        %v1168 = vmax.f32 %v1160, 0.0
        %1169 = vset.pattern.permute.xlu0 6
        %1170 = vperm.xlu0 %1169, %v245
        %v1171 = vpop.permute.xlu0 %1170
        %1173 = vset.pattern.permute.xlu0 6
        %1174 = vperm.xlu0 %1173, %v246
        %v1175 = vpop.permute.xlu0 %1174
        %1177 = vset.pattern.permute.xlu0 6
        %1178 = vperm.xlu0 %1177, %v247
        %v1179 = vpop.permute.xlu0 %1178
        %1181 = vset.pattern.permute.xlu0 6
        %1182 = vperm.xlu0 %1181, %v248
        %v1183 = vpop.permute.xlu0 %1182
        %1185 = vset.pattern.permute.xlu0 6
        %1186 = vperm.xlu0 %1185, %v249
        %v1187 = vpop.permute.xlu0 %1186
        %1189 = vset.pattern.permute.xlu0 6
        %1190 = vperm.xlu0 %1189, %v250
        %v1191 = vpop.permute.xlu0 %1190
        %1193 = vset.pattern.permute.xlu0 6
        %1194 = vperm.xlu0 %1193, %v251
        %v1195 = vpop.permute.xlu0 %1194
        %1197 = vset.pattern.permute.xlu0 6
        %1198 = vperm.xlu0 %1197, %v252
        %v1199 = vpop.permute.xlu0 %1198
        %v1201 = vmul.f32 %v1161, %v1171
        %v1202 = vmul.f32 %v1162, %v1175
        %v1203 = vmul.f32 %v1163, %v1179
        %v1204 = vmul.f32 %v1164, %v1183
        %v1205 = vmul.f32 %v1165, %v1187
        %v1206 = vmul.f32 %v1166, %v1191
        %v1207 = vmul.f32 %v1167, %v1195
        %v1208 = vmul.f32 %v1168, %v1199
        %v1209 = vadd.f32 %v1129, %v1201
        %v1210 = vadd.f32 %v1130, %v1202
        %v1211 = vadd.f32 %v1131, %v1203
        %v1212 = vadd.f32 %v1132, %v1204
        %v1213 = vadd.f32 %v1133, %v1205
        %v1214 = vadd.f32 %v1134, %v1206
        %v1215 = vadd.f32 %v1135, %v1207
        %v1216 = vadd.f32 %v1136, %v1208
        %v1217 = vsub.f32 %v649, 7.0
        %v1218 = vsub.f32 %v650, 7.0
        %v1219 = vsub.f32 %v651, 7.0
        %v1220 = vsub.f32 %v652, 7.0
        %v1221 = vsub.f32 %v653, 7.0
        %v1222 = vsub.f32 %v654, 7.0
        %v1223 = vsub.f32 %v655, 7.0
        %v1224 = vsub.f32 %v656, 7.0
        %v1225 = vand.u32 2147483647, %v1217
        %v1226 = vand.u32 2147483647, %v1218
        %v1227 = vand.u32 2147483647, %v1219
        %v1228 = vand.u32 2147483647, %v1220
        %v1229 = vand.u32 2147483647, %v1221
        %v1230 = vand.u32 2147483647, %v1222
        %v1231 = vand.u32 2147483647, %v1223
        %v1232 = vand.u32 2147483647, %v1224
        %v1233 = vsub.f32 1.0, %v1225
        %v1234 = vsub.f32 1.0, %v1226
        %v1235 = vsub.f32 1.0, %v1227
        %v1236 = vsub.f32 1.0, %v1228
        %v1237 = vsub.f32 1.0, %v1229
        %v1238 = vsub.f32 1.0, %v1230
        %v1239 = vsub.f32 1.0, %v1231
        %v1240 = vsub.f32 1.0, %v1232
        %v1241 = vmax.f32 %v1233, 0.0
        %v1242 = vmax.f32 %v1234, 0.0
        %v1243 = vmax.f32 %v1235, 0.0
        %v1244 = vmax.f32 %v1236, 0.0
        %v1245 = vmax.f32 %v1237, 0.0
        %v1246 = vmax.f32 %v1238, 0.0
        %v1247 = vmax.f32 %v1239, 0.0
        %v1248 = vmax.f32 %v1240, 0.0
        %1249 = vset.pattern.permute.xlu0 7
        %1250 = vperm.xlu0 %1249, %v245
        %v1251 = vpop.permute.xlu0 %1250
        %1253 = vset.pattern.permute.xlu0 7
        %1254 = vperm.xlu0 %1253, %v246
        %v1255 = vpop.permute.xlu0 %1254
        %1257 = vset.pattern.permute.xlu0 7
        %1258 = vperm.xlu0 %1257, %v247
        %v1259 = vpop.permute.xlu0 %1258
        %1261 = vset.pattern.permute.xlu0 7
        %1262 = vperm.xlu0 %1261, %v248
        %v1263 = vpop.permute.xlu0 %1262
        %1265 = vset.pattern.permute.xlu0 7
        %1266 = vperm.xlu0 %1265, %v249
        %v1267 = vpop.permute.xlu0 %1266
        %1269 = vset.pattern.permute.xlu0 7
        %1270 = vperm.xlu0 %1269, %v250
        %v1271 = vpop.permute.xlu0 %1270
        %1273 = vset.pattern.permute.xlu0 7
        %1274 = vperm.xlu0 %1273, %v251
        %v1275 = vpop.permute.xlu0 %1274
        %1277 = vset.pattern.permute.xlu0 7
        %1278 = vperm.xlu0 %1277, %v252
        %v1279 = vpop.permute.xlu0 %1278
        %v1281 = vmul.f32 %v1241, %v1251
        %v1282 = vmul.f32 %v1242, %v1255
        %v1283 = vmul.f32 %v1243, %v1259
        %v1284 = vmul.f32 %v1244, %v1263
        %v1285 = vmul.f32 %v1245, %v1267
        %v1286 = vmul.f32 %v1246, %v1271
        %v1287 = vmul.f32 %v1247, %v1275
        %v1288 = vmul.f32 %v1248, %v1279
        %v1289 = vadd.f32 %v1209, %v1281
        %v1290 = vadd.f32 %v1210, %v1282
        %v1291 = vadd.f32 %v1211, %v1283
        %v1292 = vadd.f32 %v1212, %v1284
        %v1293 = vadd.f32 %v1213, %v1285
        %v1294 = vadd.f32 %v1214, %v1286
        %v1295 = vadd.f32 %v1215, %v1287
        %v1296 = vadd.f32 %v1216, %v1288
        %v1297 = vsub.f32 %v649, 8.0
        %v1298 = vsub.f32 %v650, 8.0
        %v1299 = vsub.f32 %v651, 8.0
        %v1300 = vsub.f32 %v652, 8.0
        %v1301 = vsub.f32 %v653, 8.0
        %v1302 = vsub.f32 %v654, 8.0
        %v1303 = vsub.f32 %v655, 8.0
        %v1304 = vsub.f32 %v656, 8.0
        %v1305 = vand.u32 2147483647, %v1297
        %v1306 = vand.u32 2147483647, %v1298
        %v1307 = vand.u32 2147483647, %v1299
        %v1308 = vand.u32 2147483647, %v1300
        %v1309 = vand.u32 2147483647, %v1301
        %v1310 = vand.u32 2147483647, %v1302
        %v1311 = vand.u32 2147483647, %v1303
        %v1312 = vand.u32 2147483647, %v1304
        %v1313 = vsub.f32 1.0, %v1305
        %v1314 = vsub.f32 1.0, %v1306
        %v1315 = vsub.f32 1.0, %v1307
        %v1316 = vsub.f32 1.0, %v1308
        %v1317 = vsub.f32 1.0, %v1309
        %v1318 = vsub.f32 1.0, %v1310
        %v1319 = vsub.f32 1.0, %v1311
        %v1320 = vsub.f32 1.0, %v1312
        %v1321 = vmax.f32 %v1313, 0.0
        %v1322 = vmax.f32 %v1314, 0.0
        %v1323 = vmax.f32 %v1315, 0.0
        %v1324 = vmax.f32 %v1316, 0.0
        %v1325 = vmax.f32 %v1317, 0.0
        %v1326 = vmax.f32 %v1318, 0.0
        %v1327 = vmax.f32 %v1319, 0.0
        %v1328 = vmax.f32 %v1320, 0.0
        %1329 = vset.pattern.permute.xlu0 8
        %1330 = vperm.xlu0 %1329, %v245
        %v1331 = vpop.permute.xlu0 %1330
        %1333 = vset.pattern.permute.xlu0 8
        %1334 = vperm.xlu0 %1333, %v246
        %v1335 = vpop.permute.xlu0 %1334
        %1337 = vset.pattern.permute.xlu0 8
        %1338 = vperm.xlu0 %1337, %v247
        %v1339 = vpop.permute.xlu0 %1338
        %1341 = vset.pattern.permute.xlu0 8
        %1342 = vperm.xlu0 %1341, %v248
        %v1343 = vpop.permute.xlu0 %1342
        %1345 = vset.pattern.permute.xlu0 8
        %1346 = vperm.xlu0 %1345, %v249
        %v1347 = vpop.permute.xlu0 %1346
        %1349 = vset.pattern.permute.xlu0 8
        %1350 = vperm.xlu0 %1349, %v250
        %v1351 = vpop.permute.xlu0 %1350
        %1353 = vset.pattern.permute.xlu0 8
        %1354 = vperm.xlu0 %1353, %v251
        %v1355 = vpop.permute.xlu0 %1354
        %1357 = vset.pattern.permute.xlu0 8
        %1358 = vperm.xlu0 %1357, %v252
        %v1359 = vpop.permute.xlu0 %1358
        %v1361 = vmul.f32 %v1321, %v1331
        %v1362 = vmul.f32 %v1322, %v1335
        %v1363 = vmul.f32 %v1323, %v1339
        %v1364 = vmul.f32 %v1324, %v1343
        %v1365 = vmul.f32 %v1325, %v1347
        %v1366 = vmul.f32 %v1326, %v1351
        %v1367 = vmul.f32 %v1327, %v1355
        %v1368 = vmul.f32 %v1328, %v1359
        %v1369 = vadd.f32 %v1289, %v1361
        %v1370 = vadd.f32 %v1290, %v1362
        %v1371 = vadd.f32 %v1291, %v1363
        %v1372 = vadd.f32 %v1292, %v1364
        %v1373 = vadd.f32 %v1293, %v1365
        %v1374 = vadd.f32 %v1294, %v1366
        %v1375 = vadd.f32 %v1295, %v1367
        %v1376 = vadd.f32 %v1296, %v1368
        %v1377 = vsub.f32 %v649, 9.0
        %v1378 = vsub.f32 %v650, 9.0
        %v1379 = vsub.f32 %v651, 9.0
        %v1380 = vsub.f32 %v652, 9.0
        %v1381 = vsub.f32 %v653, 9.0
        %v1382 = vsub.f32 %v654, 9.0
        %v1383 = vsub.f32 %v655, 9.0
        %v1384 = vsub.f32 %v656, 9.0
        %v1385 = vand.u32 2147483647, %v1377
        %v1386 = vand.u32 2147483647, %v1378
        %v1387 = vand.u32 2147483647, %v1379
        %v1388 = vand.u32 2147483647, %v1380
        %v1389 = vand.u32 2147483647, %v1381
        %v1390 = vand.u32 2147483647, %v1382
        %v1391 = vand.u32 2147483647, %v1383
        %v1392 = vand.u32 2147483647, %v1384
        %v1393 = vsub.f32 1.0, %v1385
        %v1394 = vsub.f32 1.0, %v1386
        %v1395 = vsub.f32 1.0, %v1387
        %v1396 = vsub.f32 1.0, %v1388
        %v1397 = vsub.f32 1.0, %v1389
        %v1398 = vsub.f32 1.0, %v1390
        %v1399 = vsub.f32 1.0, %v1391
        %v1400 = vsub.f32 1.0, %v1392
        %v1401 = vmax.f32 %v1393, 0.0
        %v1402 = vmax.f32 %v1394, 0.0
        %v1403 = vmax.f32 %v1395, 0.0
        %v1404 = vmax.f32 %v1396, 0.0
        %v1405 = vmax.f32 %v1397, 0.0
        %v1406 = vmax.f32 %v1398, 0.0
        %v1407 = vmax.f32 %v1399, 0.0
        %v1408 = vmax.f32 %v1400, 0.0
        %1409 = vset.pattern.permute.xlu0 9
        %1410 = vperm.xlu0 %1409, %v245
        %v1411 = vpop.permute.xlu0 %1410
        %1413 = vset.pattern.permute.xlu0 9
        %1414 = vperm.xlu0 %1413, %v246
        %v1415 = vpop.permute.xlu0 %1414
        %1417 = vset.pattern.permute.xlu0 9
        %1418 = vperm.xlu0 %1417, %v247
        %v1419 = vpop.permute.xlu0 %1418
        %1421 = vset.pattern.permute.xlu0 9
        %1422 = vperm.xlu0 %1421, %v248
        %v1423 = vpop.permute.xlu0 %1422
        %1425 = vset.pattern.permute.xlu0 9
        %1426 = vperm.xlu0 %1425, %v249
        %v1427 = vpop.permute.xlu0 %1426
        %1429 = vset.pattern.permute.xlu0 9
        %1430 = vperm.xlu0 %1429, %v250
        %v1431 = vpop.permute.xlu0 %1430
        %1433 = vset.pattern.permute.xlu0 9
        %1434 = vperm.xlu0 %1433, %v251
        %v1435 = vpop.permute.xlu0 %1434
        %1437 = vset.pattern.permute.xlu0 9
        %1438 = vperm.xlu0 %1437, %v252
        %v1439 = vpop.permute.xlu0 %1438
        %v1441 = vmul.f32 %v1401, %v1411
        %v1442 = vmul.f32 %v1402, %v1415
        %v1443 = vmul.f32 %v1403, %v1419
        %v1444 = vmul.f32 %v1404, %v1423
        %v1445 = vmul.f32 %v1405, %v1427
        %v1446 = vmul.f32 %v1406, %v1431
        %v1447 = vmul.f32 %v1407, %v1435
        %v1448 = vmul.f32 %v1408, %v1439
        %v1449 = vadd.f32 %v1369, %v1441
        %v1450 = vadd.f32 %v1370, %v1442
        %v1451 = vadd.f32 %v1371, %v1443
        %v1452 = vadd.f32 %v1372, %v1444
        %v1453 = vadd.f32 %v1373, %v1445
        %v1454 = vadd.f32 %v1374, %v1446
        %v1455 = vadd.f32 %v1375, %v1447
        %v1456 = vadd.f32 %v1376, %v1448
        %v1457 = vsub.f32 %v649, 10.0
        %v1458 = vsub.f32 %v650, 10.0
        %v1459 = vsub.f32 %v651, 10.0
        %v1460 = vsub.f32 %v652, 10.0
        %v1461 = vsub.f32 %v653, 10.0
        %v1462 = vsub.f32 %v654, 10.0
        %v1463 = vsub.f32 %v655, 10.0
        %v1464 = vsub.f32 %v656, 10.0
        %v1465 = vand.u32 2147483647, %v1457
        %v1466 = vand.u32 2147483647, %v1458
        %v1467 = vand.u32 2147483647, %v1459
        %v1468 = vand.u32 2147483647, %v1460
        %v1469 = vand.u32 2147483647, %v1461
        %v1470 = vand.u32 2147483647, %v1462
        %v1471 = vand.u32 2147483647, %v1463
        %v1472 = vand.u32 2147483647, %v1464
        %v1473 = vsub.f32 1.0, %v1465
        %v1474 = vsub.f32 1.0, %v1466
        %v1475 = vsub.f32 1.0, %v1467
        %v1476 = vsub.f32 1.0, %v1468
        %v1477 = vsub.f32 1.0, %v1469
        %v1478 = vsub.f32 1.0, %v1470
        %v1479 = vsub.f32 1.0, %v1471
        %v1480 = vsub.f32 1.0, %v1472
        %v1481 = vmax.f32 %v1473, 0.0
        %v1482 = vmax.f32 %v1474, 0.0
        %v1483 = vmax.f32 %v1475, 0.0
        %v1484 = vmax.f32 %v1476, 0.0
        %v1485 = vmax.f32 %v1477, 0.0
        %v1486 = vmax.f32 %v1478, 0.0
        %v1487 = vmax.f32 %v1479, 0.0
        %v1488 = vmax.f32 %v1480, 0.0
        %1489 = vset.pattern.permute.xlu0 10
        %1490 = vperm.xlu0 %1489, %v245
        %v1491 = vpop.permute.xlu0 %1490
        %1493 = vset.pattern.permute.xlu0 10
        %1494 = vperm.xlu0 %1493, %v246
        %v1495 = vpop.permute.xlu0 %1494
        %1497 = vset.pattern.permute.xlu0 10
        %1498 = vperm.xlu0 %1497, %v247
        %v1499 = vpop.permute.xlu0 %1498
        %1501 = vset.pattern.permute.xlu0 10
        %1502 = vperm.xlu0 %1501, %v248
        %v1503 = vpop.permute.xlu0 %1502
        %1505 = vset.pattern.permute.xlu0 10
        %1506 = vperm.xlu0 %1505, %v249
        %v1507 = vpop.permute.xlu0 %1506
        %1509 = vset.pattern.permute.xlu0 10
        %1510 = vperm.xlu0 %1509, %v250
        %v1511 = vpop.permute.xlu0 %1510
        %1513 = vset.pattern.permute.xlu0 10
        %1514 = vperm.xlu0 %1513, %v251
        %v1515 = vpop.permute.xlu0 %1514
        %1517 = vset.pattern.permute.xlu0 10
        %1518 = vperm.xlu0 %1517, %v252
        %v1519 = vpop.permute.xlu0 %1518
        %v1521 = vmul.f32 %v1481, %v1491
        %v1522 = vmul.f32 %v1482, %v1495
        %v1523 = vmul.f32 %v1483, %v1499
        %v1524 = vmul.f32 %v1484, %v1503
        %v1525 = vmul.f32 %v1485, %v1507
        %v1526 = vmul.f32 %v1486, %v1511
        %v1527 = vmul.f32 %v1487, %v1515
        %v1528 = vmul.f32 %v1488, %v1519
        %v1529 = vadd.f32 %v1449, %v1521
        %v1530 = vadd.f32 %v1450, %v1522
        %v1531 = vadd.f32 %v1451, %v1523
        %v1532 = vadd.f32 %v1452, %v1524
        %v1533 = vadd.f32 %v1453, %v1525
        %v1534 = vadd.f32 %v1454, %v1526
        %v1535 = vadd.f32 %v1455, %v1527
        %v1536 = vadd.f32 %v1456, %v1528
        %v1537 = vsub.f32 %v649, 11.0
        %v1538 = vsub.f32 %v650, 11.0
        %v1539 = vsub.f32 %v651, 11.0
        %v1540 = vsub.f32 %v652, 11.0
        %v1541 = vsub.f32 %v653, 11.0
        %v1542 = vsub.f32 %v654, 11.0
        %v1543 = vsub.f32 %v655, 11.0
        %v1544 = vsub.f32 %v656, 11.0
        %v1545 = vand.u32 2147483647, %v1537
        %v1546 = vand.u32 2147483647, %v1538
        %v1547 = vand.u32 2147483647, %v1539
        %v1548 = vand.u32 2147483647, %v1540
        %v1549 = vand.u32 2147483647, %v1541
        %v1550 = vand.u32 2147483647, %v1542
        %v1551 = vand.u32 2147483647, %v1543
        %v1552 = vand.u32 2147483647, %v1544
        %v1553 = vsub.f32 1.0, %v1545
        %v1554 = vsub.f32 1.0, %v1546
        %v1555 = vsub.f32 1.0, %v1547
        %v1556 = vsub.f32 1.0, %v1548
        %v1557 = vsub.f32 1.0, %v1549
        %v1558 = vsub.f32 1.0, %v1550
        %v1559 = vsub.f32 1.0, %v1551
        %v1560 = vsub.f32 1.0, %v1552
        %v1561 = vmax.f32 %v1553, 0.0
        %v1562 = vmax.f32 %v1554, 0.0
        %v1563 = vmax.f32 %v1555, 0.0
        %v1564 = vmax.f32 %v1556, 0.0
        %v1565 = vmax.f32 %v1557, 0.0
        %v1566 = vmax.f32 %v1558, 0.0
        %v1567 = vmax.f32 %v1559, 0.0
        %v1568 = vmax.f32 %v1560, 0.0
        %1569 = vset.pattern.permute.xlu0 11
        %1570 = vperm.xlu0 %1569, %v245
        %v1571 = vpop.permute.xlu0 %1570
        %1573 = vset.pattern.permute.xlu0 11
        %1574 = vperm.xlu0 %1573, %v246
        %v1575 = vpop.permute.xlu0 %1574
        %1577 = vset.pattern.permute.xlu0 11
        %1578 = vperm.xlu0 %1577, %v247
        %v1579 = vpop.permute.xlu0 %1578
        %1581 = vset.pattern.permute.xlu0 11
        %1582 = vperm.xlu0 %1581, %v248
        %v1583 = vpop.permute.xlu0 %1582
        %1585 = vset.pattern.permute.xlu0 11
        %1586 = vperm.xlu0 %1585, %v249
        %v1587 = vpop.permute.xlu0 %1586
        %1589 = vset.pattern.permute.xlu0 11
        %1590 = vperm.xlu0 %1589, %v250
        %v1591 = vpop.permute.xlu0 %1590
        %1593 = vset.pattern.permute.xlu0 11
        %1594 = vperm.xlu0 %1593, %v251
        %v1595 = vpop.permute.xlu0 %1594
        %1597 = vset.pattern.permute.xlu0 11
        %1598 = vperm.xlu0 %1597, %v252
        %v1599 = vpop.permute.xlu0 %1598
        %v1601 = vmul.f32 %v1561, %v1571
        %v1602 = vmul.f32 %v1562, %v1575
        %v1603 = vmul.f32 %v1563, %v1579
        %v1604 = vmul.f32 %v1564, %v1583
        %v1605 = vmul.f32 %v1565, %v1587
        %v1606 = vmul.f32 %v1566, %v1591
        %v1607 = vmul.f32 %v1567, %v1595
        %v1608 = vmul.f32 %v1568, %v1599
        %v1609 = vadd.f32 %v1529, %v1601
        %v1610 = vadd.f32 %v1530, %v1602
        %v1611 = vadd.f32 %v1531, %v1603
        %v1612 = vadd.f32 %v1532, %v1604
        %v1613 = vadd.f32 %v1533, %v1605
        %v1614 = vadd.f32 %v1534, %v1606
        %v1615 = vadd.f32 %v1535, %v1607
        %v1616 = vadd.f32 %v1536, %v1608
        %v1617 = vsub.f32 %v649, 12.0
        %v1618 = vsub.f32 %v650, 12.0
        %v1619 = vsub.f32 %v651, 12.0
        %v1620 = vsub.f32 %v652, 12.0
        %v1621 = vsub.f32 %v653, 12.0
        %v1622 = vsub.f32 %v654, 12.0
        %v1623 = vsub.f32 %v655, 12.0
        %v1624 = vsub.f32 %v656, 12.0
        %v1625 = vand.u32 2147483647, %v1617
        %v1626 = vand.u32 2147483647, %v1618
        %v1627 = vand.u32 2147483647, %v1619
        %v1628 = vand.u32 2147483647, %v1620
        %v1629 = vand.u32 2147483647, %v1621
        %v1630 = vand.u32 2147483647, %v1622
        %v1631 = vand.u32 2147483647, %v1623
        %v1632 = vand.u32 2147483647, %v1624
        %v1633 = vsub.f32 1.0, %v1625
        %v1634 = vsub.f32 1.0, %v1626
        %v1635 = vsub.f32 1.0, %v1627
        %v1636 = vsub.f32 1.0, %v1628
        %v1637 = vsub.f32 1.0, %v1629
        %v1638 = vsub.f32 1.0, %v1630
        %v1639 = vsub.f32 1.0, %v1631
        %v1640 = vsub.f32 1.0, %v1632
        %v1641 = vmax.f32 %v1633, 0.0
        %v1642 = vmax.f32 %v1634, 0.0
        %v1643 = vmax.f32 %v1635, 0.0
        %v1644 = vmax.f32 %v1636, 0.0
        %v1645 = vmax.f32 %v1637, 0.0
        %v1646 = vmax.f32 %v1638, 0.0
        %v1647 = vmax.f32 %v1639, 0.0
        %v1648 = vmax.f32 %v1640, 0.0
        %1649 = vset.pattern.permute.xlu0 12
        %1650 = vperm.xlu0 %1649, %v245
        %v1651 = vpop.permute.xlu0 %1650
        %1653 = vset.pattern.permute.xlu0 12
        %1654 = vperm.xlu0 %1653, %v246
        %v1655 = vpop.permute.xlu0 %1654
        %1657 = vset.pattern.permute.xlu0 12
        %1658 = vperm.xlu0 %1657, %v247
        %v1659 = vpop.permute.xlu0 %1658
        %1661 = vset.pattern.permute.xlu0 12
        %1662 = vperm.xlu0 %1661, %v248
        %v1663 = vpop.permute.xlu0 %1662
        %1665 = vset.pattern.permute.xlu0 12
        %1666 = vperm.xlu0 %1665, %v249
        %v1667 = vpop.permute.xlu0 %1666
        %1669 = vset.pattern.permute.xlu0 12
        %1670 = vperm.xlu0 %1669, %v250
        %v1671 = vpop.permute.xlu0 %1670
        %1673 = vset.pattern.permute.xlu0 12
        %1674 = vperm.xlu0 %1673, %v251
        %v1675 = vpop.permute.xlu0 %1674
        %1677 = vset.pattern.permute.xlu0 12
        %1678 = vperm.xlu0 %1677, %v252
        %v1679 = vpop.permute.xlu0 %1678
        %v1681 = vmul.f32 %v1641, %v1651
        %v1682 = vmul.f32 %v1642, %v1655
        %v1683 = vmul.f32 %v1643, %v1659
        %v1684 = vmul.f32 %v1644, %v1663
        %v1685 = vmul.f32 %v1645, %v1667
        %v1686 = vmul.f32 %v1646, %v1671
        %v1687 = vmul.f32 %v1647, %v1675
        %v1688 = vmul.f32 %v1648, %v1679
        %v1689 = vadd.f32 %v1609, %v1681
        %v1690 = vadd.f32 %v1610, %v1682
        %v1691 = vadd.f32 %v1611, %v1683
        %v1692 = vadd.f32 %v1612, %v1684
        %v1693 = vadd.f32 %v1613, %v1685
        %v1694 = vadd.f32 %v1614, %v1686
        %v1695 = vadd.f32 %v1615, %v1687
        %v1696 = vadd.f32 %v1616, %v1688
        %v1697 = vsub.f32 %v649, 13.0
        %v1698 = vsub.f32 %v650, 13.0
        %v1699 = vsub.f32 %v651, 13.0
        %v1700 = vsub.f32 %v652, 13.0
        %v1701 = vsub.f32 %v653, 13.0
        %v1702 = vsub.f32 %v654, 13.0
        %v1703 = vsub.f32 %v655, 13.0
        %v1704 = vsub.f32 %v656, 13.0
        %v1705 = vand.u32 2147483647, %v1697
        %v1706 = vand.u32 2147483647, %v1698
        %v1707 = vand.u32 2147483647, %v1699
        %v1708 = vand.u32 2147483647, %v1700
        %v1709 = vand.u32 2147483647, %v1701
        %v1710 = vand.u32 2147483647, %v1702
        %v1711 = vand.u32 2147483647, %v1703
        %v1712 = vand.u32 2147483647, %v1704
        %v1713 = vsub.f32 1.0, %v1705
        %v1714 = vsub.f32 1.0, %v1706
        %v1715 = vsub.f32 1.0, %v1707
        %v1716 = vsub.f32 1.0, %v1708
        %v1717 = vsub.f32 1.0, %v1709
        %v1718 = vsub.f32 1.0, %v1710
        %v1719 = vsub.f32 1.0, %v1711
        %v1720 = vsub.f32 1.0, %v1712
        %v1721 = vmax.f32 %v1713, 0.0
        %v1722 = vmax.f32 %v1714, 0.0
        %v1723 = vmax.f32 %v1715, 0.0
        %v1724 = vmax.f32 %v1716, 0.0
        %v1725 = vmax.f32 %v1717, 0.0
        %v1726 = vmax.f32 %v1718, 0.0
        %v1727 = vmax.f32 %v1719, 0.0
        %v1728 = vmax.f32 %v1720, 0.0
        %1729 = vset.pattern.permute.xlu0 13
        %1730 = vperm.xlu0 %1729, %v245
        %v1731 = vpop.permute.xlu0 %1730
        %1733 = vset.pattern.permute.xlu0 13
        %1734 = vperm.xlu0 %1733, %v246
        %v1735 = vpop.permute.xlu0 %1734
        %1737 = vset.pattern.permute.xlu0 13
        %1738 = vperm.xlu0 %1737, %v247
        %v1739 = vpop.permute.xlu0 %1738
        %1741 = vset.pattern.permute.xlu0 13
        %1742 = vperm.xlu0 %1741, %v248
        %v1743 = vpop.permute.xlu0 %1742
        %1745 = vset.pattern.permute.xlu0 13
        %1746 = vperm.xlu0 %1745, %v249
        %v1747 = vpop.permute.xlu0 %1746
        %1749 = vset.pattern.permute.xlu0 13
        %1750 = vperm.xlu0 %1749, %v250
        %v1751 = vpop.permute.xlu0 %1750
        %1753 = vset.pattern.permute.xlu0 13
        %1754 = vperm.xlu0 %1753, %v251
        %v1755 = vpop.permute.xlu0 %1754
        %1757 = vset.pattern.permute.xlu0 13
        %1758 = vperm.xlu0 %1757, %v252
        %v1759 = vpop.permute.xlu0 %1758
        %v1761 = vmul.f32 %v1721, %v1731
        %v1762 = vmul.f32 %v1722, %v1735
        %v1763 = vmul.f32 %v1723, %v1739
        %v1764 = vmul.f32 %v1724, %v1743
        %v1765 = vmul.f32 %v1725, %v1747
        %v1766 = vmul.f32 %v1726, %v1751
        %v1767 = vmul.f32 %v1727, %v1755
        %v1768 = vmul.f32 %v1728, %v1759
        %v1769 = vadd.f32 %v1689, %v1761
        %v1770 = vadd.f32 %v1690, %v1762
        %v1771 = vadd.f32 %v1691, %v1763
        %v1772 = vadd.f32 %v1692, %v1764
        %v1773 = vadd.f32 %v1693, %v1765
        %v1774 = vadd.f32 %v1694, %v1766
        %v1775 = vadd.f32 %v1695, %v1767
        %v1776 = vadd.f32 %v1696, %v1768
        %v1777 = vsub.f32 %v649, 14.0
        %v1778 = vsub.f32 %v650, 14.0
        %v1779 = vsub.f32 %v651, 14.0
        %v1780 = vsub.f32 %v652, 14.0
        %v1781 = vsub.f32 %v653, 14.0
        %v1782 = vsub.f32 %v654, 14.0
        %v1783 = vsub.f32 %v655, 14.0
        %v1784 = vsub.f32 %v656, 14.0
        %v1785 = vand.u32 2147483647, %v1777
        %v1786 = vand.u32 2147483647, %v1778
        %v1787 = vand.u32 2147483647, %v1779
        %v1788 = vand.u32 2147483647, %v1780
        %v1789 = vand.u32 2147483647, %v1781
        %v1790 = vand.u32 2147483647, %v1782
        %v1791 = vand.u32 2147483647, %v1783
        %v1792 = vand.u32 2147483647, %v1784
        %v1793 = vsub.f32 1.0, %v1785
        %v1794 = vsub.f32 1.0, %v1786
        %v1795 = vsub.f32 1.0, %v1787
        %v1796 = vsub.f32 1.0, %v1788
        %v1797 = vsub.f32 1.0, %v1789
        %v1798 = vsub.f32 1.0, %v1790
        %v1799 = vsub.f32 1.0, %v1791
        %v1800 = vsub.f32 1.0, %v1792
        %v1801 = vmax.f32 %v1793, 0.0
        %v1802 = vmax.f32 %v1794, 0.0
        %v1803 = vmax.f32 %v1795, 0.0
        %v1804 = vmax.f32 %v1796, 0.0
        %v1805 = vmax.f32 %v1797, 0.0
        %v1806 = vmax.f32 %v1798, 0.0
        %v1807 = vmax.f32 %v1799, 0.0
        %v1808 = vmax.f32 %v1800, 0.0
        %1809 = vset.pattern.permute.xlu0 14
        %1810 = vperm.xlu0 %1809, %v245
        %v1811 = vpop.permute.xlu0 %1810
        %1813 = vset.pattern.permute.xlu0 14
        %1814 = vperm.xlu0 %1813, %v246
        %v1815 = vpop.permute.xlu0 %1814
        %1817 = vset.pattern.permute.xlu0 14
        %1818 = vperm.xlu0 %1817, %v247
        %v1819 = vpop.permute.xlu0 %1818
        %1821 = vset.pattern.permute.xlu0 14
        %1822 = vperm.xlu0 %1821, %v248
        %v1823 = vpop.permute.xlu0 %1822
        %1825 = vset.pattern.permute.xlu0 14
        %1826 = vperm.xlu0 %1825, %v249
        %v1827 = vpop.permute.xlu0 %1826
        %1829 = vset.pattern.permute.xlu0 14
        %1830 = vperm.xlu0 %1829, %v250
        %v1831 = vpop.permute.xlu0 %1830
        %1833 = vset.pattern.permute.xlu0 14
        %1834 = vperm.xlu0 %1833, %v251
        %v1835 = vpop.permute.xlu0 %1834
        %1837 = vset.pattern.permute.xlu0 14
        %1838 = vperm.xlu0 %1837, %v252
        %v1839 = vpop.permute.xlu0 %1838
        %v1841 = vmul.f32 %v1801, %v1811
        %v1842 = vmul.f32 %v1802, %v1815
        %v1843 = vmul.f32 %v1803, %v1819
        %v1844 = vmul.f32 %v1804, %v1823
        %v1845 = vmul.f32 %v1805, %v1827
        %v1846 = vmul.f32 %v1806, %v1831
        %v1847 = vmul.f32 %v1807, %v1835
        %v1848 = vmul.f32 %v1808, %v1839
        %v1849 = vadd.f32 %v1769, %v1841
        %v1850 = vadd.f32 %v1770, %v1842
        %v1851 = vadd.f32 %v1771, %v1843
        %v1852 = vadd.f32 %v1772, %v1844
        %v1853 = vadd.f32 %v1773, %v1845
        %v1854 = vadd.f32 %v1774, %v1846
        %v1855 = vadd.f32 %v1775, %v1847
        %v1856 = vadd.f32 %v1776, %v1848
        %v1857 = vsub.f32 %v649, 15.0
        %v1858 = vsub.f32 %v650, 15.0
        %v1859 = vsub.f32 %v651, 15.0
        %v1860 = vsub.f32 %v652, 15.0
        %v1861 = vsub.f32 %v653, 15.0
        %v1862 = vsub.f32 %v654, 15.0
        %v1863 = vsub.f32 %v655, 15.0
        %v1864 = vsub.f32 %v656, 15.0
        %v1865 = vand.u32 2147483647, %v1857
        %v1866 = vand.u32 2147483647, %v1858
        %v1867 = vand.u32 2147483647, %v1859
        %v1868 = vand.u32 2147483647, %v1860
        %v1869 = vand.u32 2147483647, %v1861
        %v1870 = vand.u32 2147483647, %v1862
        %v1871 = vand.u32 2147483647, %v1863
        %v1872 = vand.u32 2147483647, %v1864
        %v1873 = vsub.f32 1.0, %v1865
        %v1874 = vsub.f32 1.0, %v1866
        %v1875 = vsub.f32 1.0, %v1867
        %v1876 = vsub.f32 1.0, %v1868
        %v1877 = vsub.f32 1.0, %v1869
        %v1878 = vsub.f32 1.0, %v1870
        %v1879 = vsub.f32 1.0, %v1871
        %v1880 = vsub.f32 1.0, %v1872
        %v1881 = vmax.f32 %v1873, 0.0
        %v1882 = vmax.f32 %v1874, 0.0
        %v1883 = vmax.f32 %v1875, 0.0
        %v1884 = vmax.f32 %v1876, 0.0
        %v1885 = vmax.f32 %v1877, 0.0
        %v1886 = vmax.f32 %v1878, 0.0
        %v1887 = vmax.f32 %v1879, 0.0
        %v1888 = vmax.f32 %v1880, 0.0
        %1889 = vset.pattern.permute.xlu0 15
        %1890 = vperm.xlu0 %1889, %v245
        %v1891 = vpop.permute.xlu0 %1890
        %1893 = vset.pattern.permute.xlu0 15
        %1894 = vperm.xlu0 %1893, %v246
        %v1895 = vpop.permute.xlu0 %1894
        %1897 = vset.pattern.permute.xlu0 15
        %1898 = vperm.xlu0 %1897, %v247
        %v1899 = vpop.permute.xlu0 %1898
        %1901 = vset.pattern.permute.xlu0 15
        %1902 = vperm.xlu0 %1901, %v248
        %v1903 = vpop.permute.xlu0 %1902
        %1905 = vset.pattern.permute.xlu0 15
        %1906 = vperm.xlu0 %1905, %v249
        %v1907 = vpop.permute.xlu0 %1906
        %1909 = vset.pattern.permute.xlu0 15
        %1910 = vperm.xlu0 %1909, %v250
        %v1911 = vpop.permute.xlu0 %1910
        %1913 = vset.pattern.permute.xlu0 15
        %1914 = vperm.xlu0 %1913, %v251
        %v1915 = vpop.permute.xlu0 %1914
        %1917 = vset.pattern.permute.xlu0 15
        %1918 = vperm.xlu0 %1917, %v252
        %v1919 = vpop.permute.xlu0 %1918
        %v1921 = vmul.f32 %v1881, %v1891
        %v1922 = vmul.f32 %v1882, %v1895
        %v1923 = vmul.f32 %v1883, %v1899
        %v1924 = vmul.f32 %v1884, %v1903
        %v1925 = vmul.f32 %v1885, %v1907
        %v1926 = vmul.f32 %v1886, %v1911
        %v1927 = vmul.f32 %v1887, %v1915
        %v1928 = vmul.f32 %v1888, %v1919
        %v1929 = vadd.f32 %v1849, %v1921
        %v1930 = vadd.f32 %v1850, %v1922
        %v1931 = vadd.f32 %v1851, %v1923
        %v1932 = vadd.f32 %v1852, %v1924
        %v1933 = vadd.f32 %v1853, %v1925
        %v1934 = vadd.f32 %v1854, %v1926
        %v1935 = vadd.f32 %v1855, %v1927
        %v1936 = vadd.f32 %v1856, %v1928
        %v1937 = vsub.f32 %v649, 16.0
        %v1938 = vsub.f32 %v650, 16.0
        %v1939 = vsub.f32 %v651, 16.0
        %v1940 = vsub.f32 %v652, 16.0
        %v1941 = vsub.f32 %v653, 16.0
        %v1942 = vsub.f32 %v654, 16.0
        %v1943 = vsub.f32 %v655, 16.0
        %v1944 = vsub.f32 %v656, 16.0
        %v1945 = vand.u32 2147483647, %v1937
        %v1946 = vand.u32 2147483647, %v1938
        %v1947 = vand.u32 2147483647, %v1939
        %v1948 = vand.u32 2147483647, %v1940
        %v1949 = vand.u32 2147483647, %v1941
        %v1950 = vand.u32 2147483647, %v1942
        %v1951 = vand.u32 2147483647, %v1943
        %v1952 = vand.u32 2147483647, %v1944
        %v1953 = vsub.f32 1.0, %v1945
        %v1954 = vsub.f32 1.0, %v1946
        %v1955 = vsub.f32 1.0, %v1947
        %v1956 = vsub.f32 1.0, %v1948
        %v1957 = vsub.f32 1.0, %v1949
        %v1958 = vsub.f32 1.0, %v1950
        %v1959 = vsub.f32 1.0, %v1951
        %v1960 = vsub.f32 1.0, %v1952
        %v1961 = vmax.f32 %v1953, 0.0
        %v1962 = vmax.f32 %v1954, 0.0
        %v1963 = vmax.f32 %v1955, 0.0
        %v1964 = vmax.f32 %v1956, 0.0
        %v1965 = vmax.f32 %v1957, 0.0
        %v1966 = vmax.f32 %v1958, 0.0
        %v1967 = vmax.f32 %v1959, 0.0
        %v1968 = vmax.f32 %v1960, 0.0
        %1969 = vset.pattern.permute.xlu0 16
        %1970 = vperm.xlu0 %1969, %v245
        %v1971 = vpop.permute.xlu0 %1970
        %1973 = vset.pattern.permute.xlu0 16
        %1974 = vperm.xlu0 %1973, %v246
        %v1975 = vpop.permute.xlu0 %1974
        %1977 = vset.pattern.permute.xlu0 16
        %1978 = vperm.xlu0 %1977, %v247
        %v1979 = vpop.permute.xlu0 %1978
        %1981 = vset.pattern.permute.xlu0 16
        %1982 = vperm.xlu0 %1981, %v248
        %v1983 = vpop.permute.xlu0 %1982
        %1985 = vset.pattern.permute.xlu0 16
        %1986 = vperm.xlu0 %1985, %v249
        %v1987 = vpop.permute.xlu0 %1986
        %1989 = vset.pattern.permute.xlu0 16
        %1990 = vperm.xlu0 %1989, %v250
        %v1991 = vpop.permute.xlu0 %1990
        %1993 = vset.pattern.permute.xlu0 16
        %1994 = vperm.xlu0 %1993, %v251
        %v1995 = vpop.permute.xlu0 %1994
        %1997 = vset.pattern.permute.xlu0 16
        %1998 = vperm.xlu0 %1997, %v252
        %v1999 = vpop.permute.xlu0 %1998
        %v2001 = vmul.f32 %v1961, %v1971
        %v2002 = vmul.f32 %v1962, %v1975
        %v2003 = vmul.f32 %v1963, %v1979
        %v2004 = vmul.f32 %v1964, %v1983
        %v2005 = vmul.f32 %v1965, %v1987
        %v2006 = vmul.f32 %v1966, %v1991
        %v2007 = vmul.f32 %v1967, %v1995
        %v2008 = vmul.f32 %v1968, %v1999
        %v2009 = vadd.f32 %v1929, %v2001
        %v2010 = vadd.f32 %v1930, %v2002
        %v2011 = vadd.f32 %v1931, %v2003
        %v2012 = vadd.f32 %v1932, %v2004
        %v2013 = vadd.f32 %v1933, %v2005
        %v2014 = vadd.f32 %v1934, %v2006
        %v2015 = vadd.f32 %v1935, %v2007
        %v2016 = vadd.f32 %v1936, %v2008
        %v2017 = vsub.f32 %v649, 17.0
        %v2018 = vsub.f32 %v650, 17.0
        %v2019 = vsub.f32 %v651, 17.0
        %v2020 = vsub.f32 %v652, 17.0
        %v2021 = vsub.f32 %v653, 17.0
        %v2022 = vsub.f32 %v654, 17.0
        %v2023 = vsub.f32 %v655, 17.0
        %v2024 = vsub.f32 %v656, 17.0
        %v2025 = vand.u32 2147483647, %v2017
        %v2026 = vand.u32 2147483647, %v2018
        %v2027 = vand.u32 2147483647, %v2019
        %v2028 = vand.u32 2147483647, %v2020
        %v2029 = vand.u32 2147483647, %v2021
        %v2030 = vand.u32 2147483647, %v2022
        %v2031 = vand.u32 2147483647, %v2023
        %v2032 = vand.u32 2147483647, %v2024
        %v2033 = vsub.f32 1.0, %v2025
        %v2034 = vsub.f32 1.0, %v2026
        %v2035 = vsub.f32 1.0, %v2027
        %v2036 = vsub.f32 1.0, %v2028
        %v2037 = vsub.f32 1.0, %v2029
        %v2038 = vsub.f32 1.0, %v2030
        %v2039 = vsub.f32 1.0, %v2031
        %v2040 = vsub.f32 1.0, %v2032
        %v2041 = vmax.f32 %v2033, 0.0
        %v2042 = vmax.f32 %v2034, 0.0
        %v2043 = vmax.f32 %v2035, 0.0
        %v2044 = vmax.f32 %v2036, 0.0
        %v2045 = vmax.f32 %v2037, 0.0
        %v2046 = vmax.f32 %v2038, 0.0
        %v2047 = vmax.f32 %v2039, 0.0
        %v2048 = vmax.f32 %v2040, 0.0
        %2049 = vset.pattern.permute.xlu0 17
        %2050 = vperm.xlu0 %2049, %v245
        %v2051 = vpop.permute.xlu0 %2050
        %2053 = vset.pattern.permute.xlu0 17
        %2054 = vperm.xlu0 %2053, %v246
        %v2055 = vpop.permute.xlu0 %2054
        %2057 = vset.pattern.permute.xlu0 17
        %2058 = vperm.xlu0 %2057, %v247
        %v2059 = vpop.permute.xlu0 %2058
        %2061 = vset.pattern.permute.xlu0 17
        %2062 = vperm.xlu0 %2061, %v248
        %v2063 = vpop.permute.xlu0 %2062
        %2065 = vset.pattern.permute.xlu0 17
        %2066 = vperm.xlu0 %2065, %v249
        %v2067 = vpop.permute.xlu0 %2066
        %2069 = vset.pattern.permute.xlu0 17
        %2070 = vperm.xlu0 %2069, %v250
        %v2071 = vpop.permute.xlu0 %2070
        %2073 = vset.pattern.permute.xlu0 17
        %2074 = vperm.xlu0 %2073, %v251
        %v2075 = vpop.permute.xlu0 %2074
        %2077 = vset.pattern.permute.xlu0 17
        %2078 = vperm.xlu0 %2077, %v252
        %v2079 = vpop.permute.xlu0 %2078
        %v2081 = vmul.f32 %v2041, %v2051
        %v2082 = vmul.f32 %v2042, %v2055
        %v2083 = vmul.f32 %v2043, %v2059
        %v2084 = vmul.f32 %v2044, %v2063
        %v2085 = vmul.f32 %v2045, %v2067
        %v2086 = vmul.f32 %v2046, %v2071
        %v2087 = vmul.f32 %v2047, %v2075
        %v2088 = vmul.f32 %v2048, %v2079
        %v2089 = vadd.f32 %v2009, %v2081
        %v2090 = vadd.f32 %v2010, %v2082
        %v2091 = vadd.f32 %v2011, %v2083
        %v2092 = vadd.f32 %v2012, %v2084
        %v2093 = vadd.f32 %v2013, %v2085
        %v2094 = vadd.f32 %v2014, %v2086
        %v2095 = vadd.f32 %v2015, %v2087
        %v2096 = vadd.f32 %v2016, %v2088
        %v2097 = vsub.f32 %v649, 18.0
        %v2098 = vsub.f32 %v650, 18.0
        %v2099 = vsub.f32 %v651, 18.0
        %v2100 = vsub.f32 %v652, 18.0
        %v2101 = vsub.f32 %v653, 18.0
        %v2102 = vsub.f32 %v654, 18.0
        %v2103 = vsub.f32 %v655, 18.0
        %v2104 = vsub.f32 %v656, 18.0
        %v2105 = vand.u32 2147483647, %v2097
        %v2106 = vand.u32 2147483647, %v2098
        %v2107 = vand.u32 2147483647, %v2099
        %v2108 = vand.u32 2147483647, %v2100
        %v2109 = vand.u32 2147483647, %v2101
        %v2110 = vand.u32 2147483647, %v2102
        %v2111 = vand.u32 2147483647, %v2103
        %v2112 = vand.u32 2147483647, %v2104
        %v2113 = vsub.f32 1.0, %v2105
        %v2114 = vsub.f32 1.0, %v2106
        %v2115 = vsub.f32 1.0, %v2107
        %v2116 = vsub.f32 1.0, %v2108
        %v2117 = vsub.f32 1.0, %v2109
        %v2118 = vsub.f32 1.0, %v2110
        %v2119 = vsub.f32 1.0, %v2111
        %v2120 = vsub.f32 1.0, %v2112
        %v2121 = vmax.f32 %v2113, 0.0
        %v2122 = vmax.f32 %v2114, 0.0
        %v2123 = vmax.f32 %v2115, 0.0
        %v2124 = vmax.f32 %v2116, 0.0
        %v2125 = vmax.f32 %v2117, 0.0
        %v2126 = vmax.f32 %v2118, 0.0
        %v2127 = vmax.f32 %v2119, 0.0
        %v2128 = vmax.f32 %v2120, 0.0
        %2129 = vset.pattern.permute.xlu0 18
        %2130 = vperm.xlu0 %2129, %v245
        %v2131 = vpop.permute.xlu0 %2130
        %2133 = vset.pattern.permute.xlu0 18
        %2134 = vperm.xlu0 %2133, %v246
        %v2135 = vpop.permute.xlu0 %2134
        %2137 = vset.pattern.permute.xlu0 18
        %2138 = vperm.xlu0 %2137, %v247
        %v2139 = vpop.permute.xlu0 %2138
        %2141 = vset.pattern.permute.xlu0 18
        %2142 = vperm.xlu0 %2141, %v248
        %v2143 = vpop.permute.xlu0 %2142
        %2145 = vset.pattern.permute.xlu0 18
        %2146 = vperm.xlu0 %2145, %v249
        %v2147 = vpop.permute.xlu0 %2146
        %2149 = vset.pattern.permute.xlu0 18
        %2150 = vperm.xlu0 %2149, %v250
        %v2151 = vpop.permute.xlu0 %2150
        %2153 = vset.pattern.permute.xlu0 18
        %2154 = vperm.xlu0 %2153, %v251
        %v2155 = vpop.permute.xlu0 %2154
        %2157 = vset.pattern.permute.xlu0 18
        %2158 = vperm.xlu0 %2157, %v252
        %v2159 = vpop.permute.xlu0 %2158
        %v2161 = vmul.f32 %v2121, %v2131
        %v2162 = vmul.f32 %v2122, %v2135
        %v2163 = vmul.f32 %v2123, %v2139
        %v2164 = vmul.f32 %v2124, %v2143
        %v2165 = vmul.f32 %v2125, %v2147
        %v2166 = vmul.f32 %v2126, %v2151
        %v2167 = vmul.f32 %v2127, %v2155
        %v2168 = vmul.f32 %v2128, %v2159
        %v2169 = vadd.f32 %v2089, %v2161
        %v2170 = vadd.f32 %v2090, %v2162
        %v2171 = vadd.f32 %v2091, %v2163
        %v2172 = vadd.f32 %v2092, %v2164
        %v2173 = vadd.f32 %v2093, %v2165
        %v2174 = vadd.f32 %v2094, %v2166
        %v2175 = vadd.f32 %v2095, %v2167
        %v2176 = vadd.f32 %v2096, %v2168
        %v2177 = vsub.f32 %v649, 19.0
        %v2178 = vsub.f32 %v650, 19.0
        %v2179 = vsub.f32 %v651, 19.0
        %v2180 = vsub.f32 %v652, 19.0
        %v2181 = vsub.f32 %v653, 19.0
        %v2182 = vsub.f32 %v654, 19.0
        %v2183 = vsub.f32 %v655, 19.0
        %v2184 = vsub.f32 %v656, 19.0
        %v2185 = vand.u32 2147483647, %v2177
        %v2186 = vand.u32 2147483647, %v2178
        %v2187 = vand.u32 2147483647, %v2179
        %v2188 = vand.u32 2147483647, %v2180
        %v2189 = vand.u32 2147483647, %v2181
        %v2190 = vand.u32 2147483647, %v2182
        %v2191 = vand.u32 2147483647, %v2183
        %v2192 = vand.u32 2147483647, %v2184
        %v2193 = vsub.f32 1.0, %v2185
        %v2194 = vsub.f32 1.0, %v2186
        %v2195 = vsub.f32 1.0, %v2187
        %v2196 = vsub.f32 1.0, %v2188
        %v2197 = vsub.f32 1.0, %v2189
        %v2198 = vsub.f32 1.0, %v2190
        %v2199 = vsub.f32 1.0, %v2191
        %v2200 = vsub.f32 1.0, %v2192
        %v2201 = vmax.f32 %v2193, 0.0
        %v2202 = vmax.f32 %v2194, 0.0
        %v2203 = vmax.f32 %v2195, 0.0
        %v2204 = vmax.f32 %v2196, 0.0
        %v2205 = vmax.f32 %v2197, 0.0
        %v2206 = vmax.f32 %v2198, 0.0
        %v2207 = vmax.f32 %v2199, 0.0
        %v2208 = vmax.f32 %v2200, 0.0
        %2209 = vset.pattern.permute.xlu0 19
        %2210 = vperm.xlu0 %2209, %v245
        %v2211 = vpop.permute.xlu0 %2210
        %2213 = vset.pattern.permute.xlu0 19
        %2214 = vperm.xlu0 %2213, %v246
        %v2215 = vpop.permute.xlu0 %2214
        %2217 = vset.pattern.permute.xlu0 19
        %2218 = vperm.xlu0 %2217, %v247
        %v2219 = vpop.permute.xlu0 %2218
        %2221 = vset.pattern.permute.xlu0 19
        %2222 = vperm.xlu0 %2221, %v248
        %v2223 = vpop.permute.xlu0 %2222
        %2225 = vset.pattern.permute.xlu0 19
        %2226 = vperm.xlu0 %2225, %v249
        %v2227 = vpop.permute.xlu0 %2226
        %2229 = vset.pattern.permute.xlu0 19
        %2230 = vperm.xlu0 %2229, %v250
        %v2231 = vpop.permute.xlu0 %2230
        %2233 = vset.pattern.permute.xlu0 19
        %2234 = vperm.xlu0 %2233, %v251
        %v2235 = vpop.permute.xlu0 %2234
        %2237 = vset.pattern.permute.xlu0 19
        %2238 = vperm.xlu0 %2237, %v252
        %v2239 = vpop.permute.xlu0 %2238
        %v2241 = vmul.f32 %v2201, %v2211
        %v2242 = vmul.f32 %v2202, %v2215
        %v2243 = vmul.f32 %v2203, %v2219
        %v2244 = vmul.f32 %v2204, %v2223
        %v2245 = vmul.f32 %v2205, %v2227
        %v2246 = vmul.f32 %v2206, %v2231
        %v2247 = vmul.f32 %v2207, %v2235
        %v2248 = vmul.f32 %v2208, %v2239
        %v2249 = vadd.f32 %v2169, %v2241
        %v2250 = vadd.f32 %v2170, %v2242
        %v2251 = vadd.f32 %v2171, %v2243
        %v2252 = vadd.f32 %v2172, %v2244
        %v2253 = vadd.f32 %v2173, %v2245
        %v2254 = vadd.f32 %v2174, %v2246
        %v2255 = vadd.f32 %v2175, %v2247
        %v2256 = vadd.f32 %v2176, %v2248
        %v2257 = vsub.f32 %v649, 20.0
        %v2258 = vsub.f32 %v650, 20.0
        %v2259 = vsub.f32 %v651, 20.0
        %v2260 = vsub.f32 %v652, 20.0
        %v2261 = vsub.f32 %v653, 20.0
        %v2262 = vsub.f32 %v654, 20.0
        %v2263 = vsub.f32 %v655, 20.0
        %v2264 = vsub.f32 %v656, 20.0
        %v2265 = vand.u32 2147483647, %v2257
        %v2266 = vand.u32 2147483647, %v2258
        %v2267 = vand.u32 2147483647, %v2259
        %v2268 = vand.u32 2147483647, %v2260
        %v2269 = vand.u32 2147483647, %v2261
        %v2270 = vand.u32 2147483647, %v2262
        %v2271 = vand.u32 2147483647, %v2263
        %v2272 = vand.u32 2147483647, %v2264
        %v2273 = vsub.f32 1.0, %v2265
        %v2274 = vsub.f32 1.0, %v2266
        %v2275 = vsub.f32 1.0, %v2267
        %v2276 = vsub.f32 1.0, %v2268
        %v2277 = vsub.f32 1.0, %v2269
        %v2278 = vsub.f32 1.0, %v2270
        %v2279 = vsub.f32 1.0, %v2271
        %v2280 = vsub.f32 1.0, %v2272
        %v2281 = vmax.f32 %v2273, 0.0
        %v2282 = vmax.f32 %v2274, 0.0
        %v2283 = vmax.f32 %v2275, 0.0
        %v2284 = vmax.f32 %v2276, 0.0
        %v2285 = vmax.f32 %v2277, 0.0
        %v2286 = vmax.f32 %v2278, 0.0
        %v2287 = vmax.f32 %v2279, 0.0
        %v2288 = vmax.f32 %v2280, 0.0
        %2289 = vset.pattern.permute.xlu0 20
        %2290 = vperm.xlu0 %2289, %v245
        %v2291 = vpop.permute.xlu0 %2290
        %2293 = vset.pattern.permute.xlu0 20
        %2294 = vperm.xlu0 %2293, %v246
        %v2295 = vpop.permute.xlu0 %2294
        %2297 = vset.pattern.permute.xlu0 20
        %2298 = vperm.xlu0 %2297, %v247
        %v2299 = vpop.permute.xlu0 %2298
        %2301 = vset.pattern.permute.xlu0 20
        %2302 = vperm.xlu0 %2301, %v248
        %v2303 = vpop.permute.xlu0 %2302
        %2305 = vset.pattern.permute.xlu0 20
        %2306 = vperm.xlu0 %2305, %v249
        %v2307 = vpop.permute.xlu0 %2306
        %2309 = vset.pattern.permute.xlu0 20
        %2310 = vperm.xlu0 %2309, %v250
        %v2311 = vpop.permute.xlu0 %2310
        %2313 = vset.pattern.permute.xlu0 20
        %2314 = vperm.xlu0 %2313, %v251
        %v2315 = vpop.permute.xlu0 %2314
        %2317 = vset.pattern.permute.xlu0 20
        %2318 = vperm.xlu0 %2317, %v252
        %v2319 = vpop.permute.xlu0 %2318
        %v2321 = vmul.f32 %v2281, %v2291
        %v2322 = vmul.f32 %v2282, %v2295
        %v2323 = vmul.f32 %v2283, %v2299
        %v2324 = vmul.f32 %v2284, %v2303
        %v2325 = vmul.f32 %v2285, %v2307
        %v2326 = vmul.f32 %v2286, %v2311
        %v2327 = vmul.f32 %v2287, %v2315
        %v2328 = vmul.f32 %v2288, %v2319
        %v2329 = vadd.f32 %v2249, %v2321
        %v2330 = vadd.f32 %v2250, %v2322
        %v2331 = vadd.f32 %v2251, %v2323
        %v2332 = vadd.f32 %v2252, %v2324
        %v2333 = vadd.f32 %v2253, %v2325
        %v2334 = vadd.f32 %v2254, %v2326
        %v2335 = vadd.f32 %v2255, %v2327
        %v2336 = vadd.f32 %v2256, %v2328
        %v2337 = vsub.f32 %v649, 21.0
        %v2338 = vsub.f32 %v650, 21.0
        %v2339 = vsub.f32 %v651, 21.0
        %v2340 = vsub.f32 %v652, 21.0
        %v2341 = vsub.f32 %v653, 21.0
        %v2342 = vsub.f32 %v654, 21.0
        %v2343 = vsub.f32 %v655, 21.0
        %v2344 = vsub.f32 %v656, 21.0
        %v2345 = vand.u32 2147483647, %v2337
        %v2346 = vand.u32 2147483647, %v2338
        %v2347 = vand.u32 2147483647, %v2339
        %v2348 = vand.u32 2147483647, %v2340
        %v2349 = vand.u32 2147483647, %v2341
        %v2350 = vand.u32 2147483647, %v2342
        %v2351 = vand.u32 2147483647, %v2343
        %v2352 = vand.u32 2147483647, %v2344
        %v2353 = vsub.f32 1.0, %v2345
        %v2354 = vsub.f32 1.0, %v2346
        %v2355 = vsub.f32 1.0, %v2347
        %v2356 = vsub.f32 1.0, %v2348
        %v2357 = vsub.f32 1.0, %v2349
        %v2358 = vsub.f32 1.0, %v2350
        %v2359 = vsub.f32 1.0, %v2351
        %v2360 = vsub.f32 1.0, %v2352
        %v2361 = vmax.f32 %v2353, 0.0
        %v2362 = vmax.f32 %v2354, 0.0
        %v2363 = vmax.f32 %v2355, 0.0
        %v2364 = vmax.f32 %v2356, 0.0
        %v2365 = vmax.f32 %v2357, 0.0
        %v2366 = vmax.f32 %v2358, 0.0
        %v2367 = vmax.f32 %v2359, 0.0
        %v2368 = vmax.f32 %v2360, 0.0
        %2369 = vset.pattern.permute.xlu0 21
        %2370 = vperm.xlu0 %2369, %v245
        %v2371 = vpop.permute.xlu0 %2370
        %2373 = vset.pattern.permute.xlu0 21
        %2374 = vperm.xlu0 %2373, %v246
        %v2375 = vpop.permute.xlu0 %2374
        %2377 = vset.pattern.permute.xlu0 21
        %2378 = vperm.xlu0 %2377, %v247
        %v2379 = vpop.permute.xlu0 %2378
        %2381 = vset.pattern.permute.xlu0 21
        %2382 = vperm.xlu0 %2381, %v248
        %v2383 = vpop.permute.xlu0 %2382
        %2385 = vset.pattern.permute.xlu0 21
        %2386 = vperm.xlu0 %2385, %v249
        %v2387 = vpop.permute.xlu0 %2386
        %2389 = vset.pattern.permute.xlu0 21
        %2390 = vperm.xlu0 %2389, %v250
        %v2391 = vpop.permute.xlu0 %2390
        %2393 = vset.pattern.permute.xlu0 21
        %2394 = vperm.xlu0 %2393, %v251
        %v2395 = vpop.permute.xlu0 %2394
        %2397 = vset.pattern.permute.xlu0 21
        %2398 = vperm.xlu0 %2397, %v252
        %v2399 = vpop.permute.xlu0 %2398
        %v2401 = vmul.f32 %v2361, %v2371
        %v2402 = vmul.f32 %v2362, %v2375
        %v2403 = vmul.f32 %v2363, %v2379
        %v2404 = vmul.f32 %v2364, %v2383
        %v2405 = vmul.f32 %v2365, %v2387
        %v2406 = vmul.f32 %v2366, %v2391
        %v2407 = vmul.f32 %v2367, %v2395
        %v2408 = vmul.f32 %v2368, %v2399
        %v2409 = vadd.f32 %v2329, %v2401
        %v2410 = vadd.f32 %v2330, %v2402
        %v2411 = vadd.f32 %v2331, %v2403
        %v2412 = vadd.f32 %v2332, %v2404
        %v2413 = vadd.f32 %v2333, %v2405
        %v2414 = vadd.f32 %v2334, %v2406
        %v2415 = vadd.f32 %v2335, %v2407
        %v2416 = vadd.f32 %v2336, %v2408
        %v2417 = vsub.f32 %v649, 22.0
        %v2418 = vsub.f32 %v650, 22.0
        %v2419 = vsub.f32 %v651, 22.0
        %v2420 = vsub.f32 %v652, 22.0
        %v2421 = vsub.f32 %v653, 22.0
        %v2422 = vsub.f32 %v654, 22.0
        %v2423 = vsub.f32 %v655, 22.0
        %v2424 = vsub.f32 %v656, 22.0
        %v2425 = vand.u32 2147483647, %v2417
        %v2426 = vand.u32 2147483647, %v2418
        %v2427 = vand.u32 2147483647, %v2419
        %v2428 = vand.u32 2147483647, %v2420
        %v2429 = vand.u32 2147483647, %v2421
        %v2430 = vand.u32 2147483647, %v2422
        %v2431 = vand.u32 2147483647, %v2423
        %v2432 = vand.u32 2147483647, %v2424
        %v2433 = vsub.f32 1.0, %v2425
        %v2434 = vsub.f32 1.0, %v2426
        %v2435 = vsub.f32 1.0, %v2427
        %v2436 = vsub.f32 1.0, %v2428
        %v2437 = vsub.f32 1.0, %v2429
        %v2438 = vsub.f32 1.0, %v2430
        %v2439 = vsub.f32 1.0, %v2431
        %v2440 = vsub.f32 1.0, %v2432
        %v2441 = vmax.f32 %v2433, 0.0
        %v2442 = vmax.f32 %v2434, 0.0
        %v2443 = vmax.f32 %v2435, 0.0
        %v2444 = vmax.f32 %v2436, 0.0
        %v2445 = vmax.f32 %v2437, 0.0
        %v2446 = vmax.f32 %v2438, 0.0
        %v2447 = vmax.f32 %v2439, 0.0
        %v2448 = vmax.f32 %v2440, 0.0
        %2449 = vset.pattern.permute.xlu0 22
        %2450 = vperm.xlu0 %2449, %v245
        %v2451 = vpop.permute.xlu0 %2450
        %2453 = vset.pattern.permute.xlu0 22
        %2454 = vperm.xlu0 %2453, %v246
        %v2455 = vpop.permute.xlu0 %2454
        %2457 = vset.pattern.permute.xlu0 22
        %2458 = vperm.xlu0 %2457, %v247
        %v2459 = vpop.permute.xlu0 %2458
        %2461 = vset.pattern.permute.xlu0 22
        %2462 = vperm.xlu0 %2461, %v248
        %v2463 = vpop.permute.xlu0 %2462
        %2465 = vset.pattern.permute.xlu0 22
        %2466 = vperm.xlu0 %2465, %v249
        %v2467 = vpop.permute.xlu0 %2466
        %2469 = vset.pattern.permute.xlu0 22
        %2470 = vperm.xlu0 %2469, %v250
        %v2471 = vpop.permute.xlu0 %2470
        %2473 = vset.pattern.permute.xlu0 22
        %2474 = vperm.xlu0 %2473, %v251
        %v2475 = vpop.permute.xlu0 %2474
        %2477 = vset.pattern.permute.xlu0 22
        %2478 = vperm.xlu0 %2477, %v252
        %v2479 = vpop.permute.xlu0 %2478
        %v2481 = vmul.f32 %v2441, %v2451
        %v2482 = vmul.f32 %v2442, %v2455
        %v2483 = vmul.f32 %v2443, %v2459
        %v2484 = vmul.f32 %v2444, %v2463
        %v2485 = vmul.f32 %v2445, %v2467
        %v2486 = vmul.f32 %v2446, %v2471
        %v2487 = vmul.f32 %v2447, %v2475
        %v2488 = vmul.f32 %v2448, %v2479
        %v2489 = vadd.f32 %v2409, %v2481
        %v2490 = vadd.f32 %v2410, %v2482
        %v2491 = vadd.f32 %v2411, %v2483
        %v2492 = vadd.f32 %v2412, %v2484
        %v2493 = vadd.f32 %v2413, %v2485
        %v2494 = vadd.f32 %v2414, %v2486
        %v2495 = vadd.f32 %v2415, %v2487
        %v2496 = vadd.f32 %v2416, %v2488
        %v2497 = vsub.f32 %v649, 23.0
        %v2498 = vsub.f32 %v650, 23.0
        %v2499 = vsub.f32 %v651, 23.0
        %v2500 = vsub.f32 %v652, 23.0
        %v2501 = vsub.f32 %v653, 23.0
        %v2502 = vsub.f32 %v654, 23.0
        %v2503 = vsub.f32 %v655, 23.0
        %v2504 = vsub.f32 %v656, 23.0
        %v2505 = vand.u32 2147483647, %v2497
        %v2506 = vand.u32 2147483647, %v2498
        %v2507 = vand.u32 2147483647, %v2499
        %v2508 = vand.u32 2147483647, %v2500
        %v2509 = vand.u32 2147483647, %v2501
        %v2510 = vand.u32 2147483647, %v2502
        %v2511 = vand.u32 2147483647, %v2503
        %v2512 = vand.u32 2147483647, %v2504
        %v2513 = vsub.f32 1.0, %v2505
        %v2514 = vsub.f32 1.0, %v2506
        %v2515 = vsub.f32 1.0, %v2507
        %v2516 = vsub.f32 1.0, %v2508
        %v2517 = vsub.f32 1.0, %v2509
        %v2518 = vsub.f32 1.0, %v2510
        %v2519 = vsub.f32 1.0, %v2511
        %v2520 = vsub.f32 1.0, %v2512
        %v2521 = vmax.f32 %v2513, 0.0
        %v2522 = vmax.f32 %v2514, 0.0
        %v2523 = vmax.f32 %v2515, 0.0
        %v2524 = vmax.f32 %v2516, 0.0
        %v2525 = vmax.f32 %v2517, 0.0
        %v2526 = vmax.f32 %v2518, 0.0
        %v2527 = vmax.f32 %v2519, 0.0
        %v2528 = vmax.f32 %v2520, 0.0
        %2529 = vset.pattern.permute.xlu0 23
        %2530 = vperm.xlu0 %2529, %v245
        %v2531 = vpop.permute.xlu0 %2530
        %2533 = vset.pattern.permute.xlu0 23
        %2534 = vperm.xlu0 %2533, %v246
        %v2535 = vpop.permute.xlu0 %2534
        %2537 = vset.pattern.permute.xlu0 23
        %2538 = vperm.xlu0 %2537, %v247
        %v2539 = vpop.permute.xlu0 %2538
        %2541 = vset.pattern.permute.xlu0 23
        %2542 = vperm.xlu0 %2541, %v248
        %v2543 = vpop.permute.xlu0 %2542
        %2545 = vset.pattern.permute.xlu0 23
        %2546 = vperm.xlu0 %2545, %v249
        %v2547 = vpop.permute.xlu0 %2546
        %2549 = vset.pattern.permute.xlu0 23
        %2550 = vperm.xlu0 %2549, %v250
        %v2551 = vpop.permute.xlu0 %2550
        %2553 = vset.pattern.permute.xlu0 23
        %2554 = vperm.xlu0 %2553, %v251
        %v2555 = vpop.permute.xlu0 %2554
        %2557 = vset.pattern.permute.xlu0 23
        %2558 = vperm.xlu0 %2557, %v252
        %v2559 = vpop.permute.xlu0 %2558
        %v2561 = vmul.f32 %v2521, %v2531
        %v2562 = vmul.f32 %v2522, %v2535
        %v2563 = vmul.f32 %v2523, %v2539
        %v2564 = vmul.f32 %v2524, %v2543
        %v2565 = vmul.f32 %v2525, %v2547
        %v2566 = vmul.f32 %v2526, %v2551
        %v2567 = vmul.f32 %v2527, %v2555
        %v2568 = vmul.f32 %v2528, %v2559
        %v2569 = vadd.f32 %v2489, %v2561
        %v2570 = vadd.f32 %v2490, %v2562
        %v2571 = vadd.f32 %v2491, %v2563
        %v2572 = vadd.f32 %v2492, %v2564
        %v2573 = vadd.f32 %v2493, %v2565
        %v2574 = vadd.f32 %v2494, %v2566
        %v2575 = vadd.f32 %v2495, %v2567
        %v2576 = vadd.f32 %v2496, %v2568
        %v2577 = vsub.f32 %v649, 24.0
        %v2578 = vsub.f32 %v650, 24.0
        %v2579 = vsub.f32 %v651, 24.0
        %v2580 = vsub.f32 %v652, 24.0
        %v2581 = vsub.f32 %v653, 24.0
        %v2582 = vsub.f32 %v654, 24.0
        %v2583 = vsub.f32 %v655, 24.0
        %v2584 = vsub.f32 %v656, 24.0
        %v2585 = vand.u32 2147483647, %v2577
        %v2586 = vand.u32 2147483647, %v2578
        %v2587 = vand.u32 2147483647, %v2579
        %v2588 = vand.u32 2147483647, %v2580
        %v2589 = vand.u32 2147483647, %v2581
        %v2590 = vand.u32 2147483647, %v2582
        %v2591 = vand.u32 2147483647, %v2583
        %v2592 = vand.u32 2147483647, %v2584
        %v2593 = vsub.f32 1.0, %v2585
        %v2594 = vsub.f32 1.0, %v2586
        %v2595 = vsub.f32 1.0, %v2587
        %v2596 = vsub.f32 1.0, %v2588
        %v2597 = vsub.f32 1.0, %v2589
        %v2598 = vsub.f32 1.0, %v2590
        %v2599 = vsub.f32 1.0, %v2591
        %v2600 = vsub.f32 1.0, %v2592
        %v2601 = vmax.f32 %v2593, 0.0
        %v2602 = vmax.f32 %v2594, 0.0
        %v2603 = vmax.f32 %v2595, 0.0
        %v2604 = vmax.f32 %v2596, 0.0
        %v2605 = vmax.f32 %v2597, 0.0
        %v2606 = vmax.f32 %v2598, 0.0
        %v2607 = vmax.f32 %v2599, 0.0
        %v2608 = vmax.f32 %v2600, 0.0
        %2609 = vset.pattern.permute.xlu0 24
        %2610 = vperm.xlu0 %2609, %v245
        %v2611 = vpop.permute.xlu0 %2610
        %2613 = vset.pattern.permute.xlu0 24
        %2614 = vperm.xlu0 %2613, %v246
        %v2615 = vpop.permute.xlu0 %2614
        %2617 = vset.pattern.permute.xlu0 24
        %2618 = vperm.xlu0 %2617, %v247
        %v2619 = vpop.permute.xlu0 %2618
        %2621 = vset.pattern.permute.xlu0 24
        %2622 = vperm.xlu0 %2621, %v248
        %v2623 = vpop.permute.xlu0 %2622
        %2625 = vset.pattern.permute.xlu0 24
        %2626 = vperm.xlu0 %2625, %v249
        %v2627 = vpop.permute.xlu0 %2626
        %2629 = vset.pattern.permute.xlu0 24
        %2630 = vperm.xlu0 %2629, %v250
        %v2631 = vpop.permute.xlu0 %2630
        %2633 = vset.pattern.permute.xlu0 24
        %2634 = vperm.xlu0 %2633, %v251
        %v2635 = vpop.permute.xlu0 %2634
        %2637 = vset.pattern.permute.xlu0 24
        %2638 = vperm.xlu0 %2637, %v252
        %v2639 = vpop.permute.xlu0 %2638
        %v2641 = vmul.f32 %v2601, %v2611
        %v2642 = vmul.f32 %v2602, %v2615
        %v2643 = vmul.f32 %v2603, %v2619
        %v2644 = vmul.f32 %v2604, %v2623
        %v2645 = vmul.f32 %v2605, %v2627
        %v2646 = vmul.f32 %v2606, %v2631
        %v2647 = vmul.f32 %v2607, %v2635
        %v2648 = vmul.f32 %v2608, %v2639
        %v2649 = vadd.f32 %v2569, %v2641
        %v2650 = vadd.f32 %v2570, %v2642
        %v2651 = vadd.f32 %v2571, %v2643
        %v2652 = vadd.f32 %v2572, %v2644
        %v2653 = vadd.f32 %v2573, %v2645
        %v2654 = vadd.f32 %v2574, %v2646
        %v2655 = vadd.f32 %v2575, %v2647
        %v2656 = vadd.f32 %v2576, %v2648
        %v2657 = vsub.f32 %v649, 25.0
        %v2658 = vsub.f32 %v650, 25.0
        %v2659 = vsub.f32 %v651, 25.0
        %v2660 = vsub.f32 %v652, 25.0
        %v2661 = vsub.f32 %v653, 25.0
        %v2662 = vsub.f32 %v654, 25.0
        %v2663 = vsub.f32 %v655, 25.0
        %v2664 = vsub.f32 %v656, 25.0
        %v2665 = vand.u32 2147483647, %v2657
        %v2666 = vand.u32 2147483647, %v2658
        %v2667 = vand.u32 2147483647, %v2659
        %v2668 = vand.u32 2147483647, %v2660
        %v2669 = vand.u32 2147483647, %v2661
        %v2670 = vand.u32 2147483647, %v2662
        %v2671 = vand.u32 2147483647, %v2663
        %v2672 = vand.u32 2147483647, %v2664
        %v2673 = vsub.f32 1.0, %v2665
        %v2674 = vsub.f32 1.0, %v2666
        %v2675 = vsub.f32 1.0, %v2667
        %v2676 = vsub.f32 1.0, %v2668
        %v2677 = vsub.f32 1.0, %v2669
        %v2678 = vsub.f32 1.0, %v2670
        %v2679 = vsub.f32 1.0, %v2671
        %v2680 = vsub.f32 1.0, %v2672
        %v2681 = vmax.f32 %v2673, 0.0
        %v2682 = vmax.f32 %v2674, 0.0
        %v2683 = vmax.f32 %v2675, 0.0
        %v2684 = vmax.f32 %v2676, 0.0
        %v2685 = vmax.f32 %v2677, 0.0
        %v2686 = vmax.f32 %v2678, 0.0
        %v2687 = vmax.f32 %v2679, 0.0
        %v2688 = vmax.f32 %v2680, 0.0
        %2689 = vset.pattern.permute.xlu0 25
        %2690 = vperm.xlu0 %2689, %v245
        %v2691 = vpop.permute.xlu0 %2690
        %2693 = vset.pattern.permute.xlu0 25
        %2694 = vperm.xlu0 %2693, %v246
        %v2695 = vpop.permute.xlu0 %2694
        %2697 = vset.pattern.permute.xlu0 25
        %2698 = vperm.xlu0 %2697, %v247
        %v2699 = vpop.permute.xlu0 %2698
        %2701 = vset.pattern.permute.xlu0 25
        %2702 = vperm.xlu0 %2701, %v248
        %v2703 = vpop.permute.xlu0 %2702
        %2705 = vset.pattern.permute.xlu0 25
        %2706 = vperm.xlu0 %2705, %v249
        %v2707 = vpop.permute.xlu0 %2706
        %2709 = vset.pattern.permute.xlu0 25
        %2710 = vperm.xlu0 %2709, %v250
        %v2711 = vpop.permute.xlu0 %2710
        %2713 = vset.pattern.permute.xlu0 25
        %2714 = vperm.xlu0 %2713, %v251
        %v2715 = vpop.permute.xlu0 %2714
        %2717 = vset.pattern.permute.xlu0 25
        %2718 = vperm.xlu0 %2717, %v252
        %v2719 = vpop.permute.xlu0 %2718
        %v2721 = vmul.f32 %v2681, %v2691
        %v2722 = vmul.f32 %v2682, %v2695
        %v2723 = vmul.f32 %v2683, %v2699
        %v2724 = vmul.f32 %v2684, %v2703
        %v2725 = vmul.f32 %v2685, %v2707
        %v2726 = vmul.f32 %v2686, %v2711
        %v2727 = vmul.f32 %v2687, %v2715
        %v2728 = vmul.f32 %v2688, %v2719
        %v2729 = vadd.f32 %v2649, %v2721
        %v2730 = vadd.f32 %v2650, %v2722
        %v2731 = vadd.f32 %v2651, %v2723
        %v2732 = vadd.f32 %v2652, %v2724
        %v2733 = vadd.f32 %v2653, %v2725
        %v2734 = vadd.f32 %v2654, %v2726
        %v2735 = vadd.f32 %v2655, %v2727
        %v2736 = vadd.f32 %v2656, %v2728
        %v2737 = vsub.f32 %v649, 26.0
        %v2738 = vsub.f32 %v650, 26.0
        %v2739 = vsub.f32 %v651, 26.0
        %v2740 = vsub.f32 %v652, 26.0
        %v2741 = vsub.f32 %v653, 26.0
        %v2742 = vsub.f32 %v654, 26.0
        %v2743 = vsub.f32 %v655, 26.0
        %v2744 = vsub.f32 %v656, 26.0
        %v2745 = vand.u32 2147483647, %v2737
        %v2746 = vand.u32 2147483647, %v2738
        %v2747 = vand.u32 2147483647, %v2739
        %v2748 = vand.u32 2147483647, %v2740
        %v2749 = vand.u32 2147483647, %v2741
        %v2750 = vand.u32 2147483647, %v2742
        %v2751 = vand.u32 2147483647, %v2743
        %v2752 = vand.u32 2147483647, %v2744
        %v2753 = vsub.f32 1.0, %v2745
        %v2754 = vsub.f32 1.0, %v2746
        %v2755 = vsub.f32 1.0, %v2747
        %v2756 = vsub.f32 1.0, %v2748
        %v2757 = vsub.f32 1.0, %v2749
        %v2758 = vsub.f32 1.0, %v2750
        %v2759 = vsub.f32 1.0, %v2751
        %v2760 = vsub.f32 1.0, %v2752
        %v2761 = vmax.f32 %v2753, 0.0
        %v2762 = vmax.f32 %v2754, 0.0
        %v2763 = vmax.f32 %v2755, 0.0
        %v2764 = vmax.f32 %v2756, 0.0
        %v2765 = vmax.f32 %v2757, 0.0
        %v2766 = vmax.f32 %v2758, 0.0
        %v2767 = vmax.f32 %v2759, 0.0
        %v2768 = vmax.f32 %v2760, 0.0
        %2769 = vset.pattern.permute.xlu0 26
        %2770 = vperm.xlu0 %2769, %v245
        %v2771 = vpop.permute.xlu0 %2770
        %2773 = vset.pattern.permute.xlu0 26
        %2774 = vperm.xlu0 %2773, %v246
        %v2775 = vpop.permute.xlu0 %2774
        %2777 = vset.pattern.permute.xlu0 26
        %2778 = vperm.xlu0 %2777, %v247
        %v2779 = vpop.permute.xlu0 %2778
        %2781 = vset.pattern.permute.xlu0 26
        %2782 = vperm.xlu0 %2781, %v248
        %v2783 = vpop.permute.xlu0 %2782
        %2785 = vset.pattern.permute.xlu0 26
        %2786 = vperm.xlu0 %2785, %v249
        %v2787 = vpop.permute.xlu0 %2786
        %2789 = vset.pattern.permute.xlu0 26
        %2790 = vperm.xlu0 %2789, %v250
        %v2791 = vpop.permute.xlu0 %2790
        %2793 = vset.pattern.permute.xlu0 26
        %2794 = vperm.xlu0 %2793, %v251
        %v2795 = vpop.permute.xlu0 %2794
        %2797 = vset.pattern.permute.xlu0 26
        %2798 = vperm.xlu0 %2797, %v252
        %v2799 = vpop.permute.xlu0 %2798
        %v2801 = vmul.f32 %v2761, %v2771
        %v2802 = vmul.f32 %v2762, %v2775
        %v2803 = vmul.f32 %v2763, %v2779
        %v2804 = vmul.f32 %v2764, %v2783
        %v2805 = vmul.f32 %v2765, %v2787
        %v2806 = vmul.f32 %v2766, %v2791
        %v2807 = vmul.f32 %v2767, %v2795
        %v2808 = vmul.f32 %v2768, %v2799
        %v2809 = vadd.f32 %v2729, %v2801
        %v2810 = vadd.f32 %v2730, %v2802
        %v2811 = vadd.f32 %v2731, %v2803
        %v2812 = vadd.f32 %v2732, %v2804
        %v2813 = vadd.f32 %v2733, %v2805
        %v2814 = vadd.f32 %v2734, %v2806
        %v2815 = vadd.f32 %v2735, %v2807
        %v2816 = vadd.f32 %v2736, %v2808
        %v2817 = vsub.f32 %v649, 27.0
        %v2818 = vsub.f32 %v650, 27.0
        %v2819 = vsub.f32 %v651, 27.0
        %v2820 = vsub.f32 %v652, 27.0
        %v2821 = vsub.f32 %v653, 27.0
        %v2822 = vsub.f32 %v654, 27.0
        %v2823 = vsub.f32 %v655, 27.0
        %v2824 = vsub.f32 %v656, 27.0
        %v2825 = vand.u32 2147483647, %v2817
        %v2826 = vand.u32 2147483647, %v2818
        %v2827 = vand.u32 2147483647, %v2819
        %v2828 = vand.u32 2147483647, %v2820
        %v2829 = vand.u32 2147483647, %v2821
        %v2830 = vand.u32 2147483647, %v2822
        %v2831 = vand.u32 2147483647, %v2823
        %v2832 = vand.u32 2147483647, %v2824
        %v2833 = vsub.f32 1.0, %v2825
        %v2834 = vsub.f32 1.0, %v2826
        %v2835 = vsub.f32 1.0, %v2827
        %v2836 = vsub.f32 1.0, %v2828
        %v2837 = vsub.f32 1.0, %v2829
        %v2838 = vsub.f32 1.0, %v2830
        %v2839 = vsub.f32 1.0, %v2831
        %v2840 = vsub.f32 1.0, %v2832
        %v2841 = vmax.f32 %v2833, 0.0
        %v2842 = vmax.f32 %v2834, 0.0
        %v2843 = vmax.f32 %v2835, 0.0
        %v2844 = vmax.f32 %v2836, 0.0
        %v2845 = vmax.f32 %v2837, 0.0
        %v2846 = vmax.f32 %v2838, 0.0
        %v2847 = vmax.f32 %v2839, 0.0
        %v2848 = vmax.f32 %v2840, 0.0
        %2849 = vset.pattern.permute.xlu0 27
        %2850 = vperm.xlu0 %2849, %v245
        %v2851 = vpop.permute.xlu0 %2850
        %2853 = vset.pattern.permute.xlu0 27
        %2854 = vperm.xlu0 %2853, %v246
        %v2855 = vpop.permute.xlu0 %2854
        %2857 = vset.pattern.permute.xlu0 27
        %2858 = vperm.xlu0 %2857, %v247
        %v2859 = vpop.permute.xlu0 %2858
        %2861 = vset.pattern.permute.xlu0 27
        %2862 = vperm.xlu0 %2861, %v248
        %v2863 = vpop.permute.xlu0 %2862
        %2865 = vset.pattern.permute.xlu0 27
        %2866 = vperm.xlu0 %2865, %v249
        %v2867 = vpop.permute.xlu0 %2866
        %2869 = vset.pattern.permute.xlu0 27
        %2870 = vperm.xlu0 %2869, %v250
        %v2871 = vpop.permute.xlu0 %2870
        %2873 = vset.pattern.permute.xlu0 27
        %2874 = vperm.xlu0 %2873, %v251
        %v2875 = vpop.permute.xlu0 %2874
        %2877 = vset.pattern.permute.xlu0 27
        %2878 = vperm.xlu0 %2877, %v252
        %v2879 = vpop.permute.xlu0 %2878
        %v2881 = vmul.f32 %v2841, %v2851
        %v2882 = vmul.f32 %v2842, %v2855
        %v2883 = vmul.f32 %v2843, %v2859
        %v2884 = vmul.f32 %v2844, %v2863
        %v2885 = vmul.f32 %v2845, %v2867
        %v2886 = vmul.f32 %v2846, %v2871
        %v2887 = vmul.f32 %v2847, %v2875
        %v2888 = vmul.f32 %v2848, %v2879
        %v2889 = vadd.f32 %v2809, %v2881
        %v2890 = vadd.f32 %v2810, %v2882
        %v2891 = vadd.f32 %v2811, %v2883
        %v2892 = vadd.f32 %v2812, %v2884
        %v2893 = vadd.f32 %v2813, %v2885
        %v2894 = vadd.f32 %v2814, %v2886
        %v2895 = vadd.f32 %v2815, %v2887
        %v2896 = vadd.f32 %v2816, %v2888
        %v2897 = vsub.f32 %v649, 28.0
        %v2898 = vsub.f32 %v650, 28.0
        %v2899 = vsub.f32 %v651, 28.0
        %v2900 = vsub.f32 %v652, 28.0
        %v2901 = vsub.f32 %v653, 28.0
        %v2902 = vsub.f32 %v654, 28.0
        %v2903 = vsub.f32 %v655, 28.0
        %v2904 = vsub.f32 %v656, 28.0
        %v2905 = vand.u32 2147483647, %v2897
        %v2906 = vand.u32 2147483647, %v2898
        %v2907 = vand.u32 2147483647, %v2899
        %v2908 = vand.u32 2147483647, %v2900
        %v2909 = vand.u32 2147483647, %v2901
        %v2910 = vand.u32 2147483647, %v2902
        %v2911 = vand.u32 2147483647, %v2903
        %v2912 = vand.u32 2147483647, %v2904
        %v2913 = vsub.f32 1.0, %v2905
        %v2914 = vsub.f32 1.0, %v2906
        %v2915 = vsub.f32 1.0, %v2907
        %v2916 = vsub.f32 1.0, %v2908
        %v2917 = vsub.f32 1.0, %v2909
        %v2918 = vsub.f32 1.0, %v2910
        %v2919 = vsub.f32 1.0, %v2911
        %v2920 = vsub.f32 1.0, %v2912
        %v2921 = vmax.f32 %v2913, 0.0
        %v2922 = vmax.f32 %v2914, 0.0
        %v2923 = vmax.f32 %v2915, 0.0
        %v2924 = vmax.f32 %v2916, 0.0
        %v2925 = vmax.f32 %v2917, 0.0
        %v2926 = vmax.f32 %v2918, 0.0
        %v2927 = vmax.f32 %v2919, 0.0
        %v2928 = vmax.f32 %v2920, 0.0
        %2929 = vset.pattern.permute.xlu0 28
        %2930 = vperm.xlu0 %2929, %v245
        %v2931 = vpop.permute.xlu0 %2930
        %2933 = vset.pattern.permute.xlu0 28
        %2934 = vperm.xlu0 %2933, %v246
        %v2935 = vpop.permute.xlu0 %2934
        %2937 = vset.pattern.permute.xlu0 28
        %2938 = vperm.xlu0 %2937, %v247
        %v2939 = vpop.permute.xlu0 %2938
        %2941 = vset.pattern.permute.xlu0 28
        %2942 = vperm.xlu0 %2941, %v248
        %v2943 = vpop.permute.xlu0 %2942
        %2945 = vset.pattern.permute.xlu0 28
        %2946 = vperm.xlu0 %2945, %v249
        %v2947 = vpop.permute.xlu0 %2946
        %2949 = vset.pattern.permute.xlu0 28
        %2950 = vperm.xlu0 %2949, %v250
        %v2951 = vpop.permute.xlu0 %2950
        %2953 = vset.pattern.permute.xlu0 28
        %2954 = vperm.xlu0 %2953, %v251
        %v2955 = vpop.permute.xlu0 %2954
        %2957 = vset.pattern.permute.xlu0 28
        %2958 = vperm.xlu0 %2957, %v252
        %v2959 = vpop.permute.xlu0 %2958
        %v2961 = vmul.f32 %v2921, %v2931
        %v2962 = vmul.f32 %v2922, %v2935
        %v2963 = vmul.f32 %v2923, %v2939
        %v2964 = vmul.f32 %v2924, %v2943
        %v2965 = vmul.f32 %v2925, %v2947
        %v2966 = vmul.f32 %v2926, %v2951
        %v2967 = vmul.f32 %v2927, %v2955
        %v2968 = vmul.f32 %v2928, %v2959
        %v2969 = vadd.f32 %v2889, %v2961
        %v2970 = vadd.f32 %v2890, %v2962
        %v2971 = vadd.f32 %v2891, %v2963
        %v2972 = vadd.f32 %v2892, %v2964
        %v2973 = vadd.f32 %v2893, %v2965
        %v2974 = vadd.f32 %v2894, %v2966
        %v2975 = vadd.f32 %v2895, %v2967
        %v2976 = vadd.f32 %v2896, %v2968
        %v2977 = vsub.f32 %v649, 29.0
        %v2978 = vsub.f32 %v650, 29.0
        %v2979 = vsub.f32 %v651, 29.0
        %v2980 = vsub.f32 %v652, 29.0
        %v2981 = vsub.f32 %v653, 29.0
        %v2982 = vsub.f32 %v654, 29.0
        %v2983 = vsub.f32 %v655, 29.0
        %v2984 = vsub.f32 %v656, 29.0
        %v2985 = vand.u32 2147483647, %v2977
        %v2986 = vand.u32 2147483647, %v2978
        %v2987 = vand.u32 2147483647, %v2979
        %v2988 = vand.u32 2147483647, %v2980
        %v2989 = vand.u32 2147483647, %v2981
        %v2990 = vand.u32 2147483647, %v2982
        %v2991 = vand.u32 2147483647, %v2983
        %v2992 = vand.u32 2147483647, %v2984
        %v2993 = vsub.f32 1.0, %v2985
        %v2994 = vsub.f32 1.0, %v2986
        %v2995 = vsub.f32 1.0, %v2987
        %v2996 = vsub.f32 1.0, %v2988
        %v2997 = vsub.f32 1.0, %v2989
        %v2998 = vsub.f32 1.0, %v2990
        %v2999 = vsub.f32 1.0, %v2991
        %v3000 = vsub.f32 1.0, %v2992
        %v3001 = vmax.f32 %v2993, 0.0
        %v3002 = vmax.f32 %v2994, 0.0
        %v3003 = vmax.f32 %v2995, 0.0
        %v3004 = vmax.f32 %v2996, 0.0
        %v3005 = vmax.f32 %v2997, 0.0
        %v3006 = vmax.f32 %v2998, 0.0
        %v3007 = vmax.f32 %v2999, 0.0
        %v3008 = vmax.f32 %v3000, 0.0
        %3009 = vset.pattern.permute.xlu0 29
        %3010 = vperm.xlu0 %3009, %v245
        %v3011 = vpop.permute.xlu0 %3010
        %3013 = vset.pattern.permute.xlu0 29
        %3014 = vperm.xlu0 %3013, %v246
        %v3015 = vpop.permute.xlu0 %3014
        %3017 = vset.pattern.permute.xlu0 29
        %3018 = vperm.xlu0 %3017, %v247
        %v3019 = vpop.permute.xlu0 %3018
        %3021 = vset.pattern.permute.xlu0 29
        %3022 = vperm.xlu0 %3021, %v248
        %v3023 = vpop.permute.xlu0 %3022
        %3025 = vset.pattern.permute.xlu0 29
        %3026 = vperm.xlu0 %3025, %v249
        %v3027 = vpop.permute.xlu0 %3026
        %3029 = vset.pattern.permute.xlu0 29
        %3030 = vperm.xlu0 %3029, %v250
        %v3031 = vpop.permute.xlu0 %3030
        %3033 = vset.pattern.permute.xlu0 29
        %3034 = vperm.xlu0 %3033, %v251
        %v3035 = vpop.permute.xlu0 %3034
        %3037 = vset.pattern.permute.xlu0 29
        %3038 = vperm.xlu0 %3037, %v252
        %v3039 = vpop.permute.xlu0 %3038
        %v3041 = vmul.f32 %v3001, %v3011
        %v3042 = vmul.f32 %v3002, %v3015
        %v3043 = vmul.f32 %v3003, %v3019
        %v3044 = vmul.f32 %v3004, %v3023
        %v3045 = vmul.f32 %v3005, %v3027
        %v3046 = vmul.f32 %v3006, %v3031
        %v3047 = vmul.f32 %v3007, %v3035
        %v3048 = vmul.f32 %v3008, %v3039
        %v3049 = vadd.f32 %v2969, %v3041
        %v3050 = vadd.f32 %v2970, %v3042
        %v3051 = vadd.f32 %v2971, %v3043
        %v3052 = vadd.f32 %v2972, %v3044
        %v3053 = vadd.f32 %v2973, %v3045
        %v3054 = vadd.f32 %v2974, %v3046
        %v3055 = vadd.f32 %v2975, %v3047
        %v3056 = vadd.f32 %v2976, %v3048
        %v3057 = vsub.f32 %v649, 30.0
        %v3058 = vsub.f32 %v650, 30.0
        %v3059 = vsub.f32 %v651, 30.0
        %v3060 = vsub.f32 %v652, 30.0
        %v3061 = vsub.f32 %v653, 30.0
        %v3062 = vsub.f32 %v654, 30.0
        %v3063 = vsub.f32 %v655, 30.0
        %v3064 = vsub.f32 %v656, 30.0
        %v3065 = vand.u32 2147483647, %v3057
        %v3066 = vand.u32 2147483647, %v3058
        %v3067 = vand.u32 2147483647, %v3059
        %v3068 = vand.u32 2147483647, %v3060
        %v3069 = vand.u32 2147483647, %v3061
        %v3070 = vand.u32 2147483647, %v3062
        %v3071 = vand.u32 2147483647, %v3063
        %v3072 = vand.u32 2147483647, %v3064
        %v3073 = vsub.f32 1.0, %v3065
        %v3074 = vsub.f32 1.0, %v3066
        %v3075 = vsub.f32 1.0, %v3067
        %v3076 = vsub.f32 1.0, %v3068
        %v3077 = vsub.f32 1.0, %v3069
        %v3078 = vsub.f32 1.0, %v3070
        %v3079 = vsub.f32 1.0, %v3071
        %v3080 = vsub.f32 1.0, %v3072
        %v3081 = vmax.f32 %v3073, 0.0
        %v3082 = vmax.f32 %v3074, 0.0
        %v3083 = vmax.f32 %v3075, 0.0
        %v3084 = vmax.f32 %v3076, 0.0
        %v3085 = vmax.f32 %v3077, 0.0
        %v3086 = vmax.f32 %v3078, 0.0
        %v3087 = vmax.f32 %v3079, 0.0
        %v3088 = vmax.f32 %v3080, 0.0
        %3089 = vset.pattern.permute.xlu0 30
        %3090 = vperm.xlu0 %3089, %v245
        %v3091 = vpop.permute.xlu0 %3090
        %3093 = vset.pattern.permute.xlu0 30
        %3094 = vperm.xlu0 %3093, %v246
        %v3095 = vpop.permute.xlu0 %3094
        %3097 = vset.pattern.permute.xlu0 30
        %3098 = vperm.xlu0 %3097, %v247
        %v3099 = vpop.permute.xlu0 %3098
        %3101 = vset.pattern.permute.xlu0 30
        %3102 = vperm.xlu0 %3101, %v248
        %v3103 = vpop.permute.xlu0 %3102
        %3105 = vset.pattern.permute.xlu0 30
        %3106 = vperm.xlu0 %3105, %v249
        %v3107 = vpop.permute.xlu0 %3106
        %3109 = vset.pattern.permute.xlu0 30
        %3110 = vperm.xlu0 %3109, %v250
        %v3111 = vpop.permute.xlu0 %3110
        %3113 = vset.pattern.permute.xlu0 30
        %3114 = vperm.xlu0 %3113, %v251
        %v3115 = vpop.permute.xlu0 %3114
        %3117 = vset.pattern.permute.xlu0 30
        %3118 = vperm.xlu0 %3117, %v252
        %v3119 = vpop.permute.xlu0 %3118
        %v3121 = vmul.f32 %v3081, %v3091
        %v3122 = vmul.f32 %v3082, %v3095
        %v3123 = vmul.f32 %v3083, %v3099
        %v3124 = vmul.f32 %v3084, %v3103
        %v3125 = vmul.f32 %v3085, %v3107
        %v3126 = vmul.f32 %v3086, %v3111
        %v3127 = vmul.f32 %v3087, %v3115
        %v3128 = vmul.f32 %v3088, %v3119
        %v3129 = vadd.f32 %v3049, %v3121
        %v3130 = vadd.f32 %v3050, %v3122
        %v3131 = vadd.f32 %v3051, %v3123
        %v3132 = vadd.f32 %v3052, %v3124
        %v3133 = vadd.f32 %v3053, %v3125
        %v3134 = vadd.f32 %v3054, %v3126
        %v3135 = vadd.f32 %v3055, %v3127
        %v3136 = vadd.f32 %v3056, %v3128
        %v3137 = vsub.f32 %v649, 31.0
        %v3138 = vsub.f32 %v650, 31.0
        %v3139 = vsub.f32 %v651, 31.0
        %v3140 = vsub.f32 %v652, 31.0
        %v3141 = vsub.f32 %v653, 31.0
        %v3142 = vsub.f32 %v654, 31.0
        %v3143 = vsub.f32 %v655, 31.0
        %v3144 = vsub.f32 %v656, 31.0
        %v3145 = vand.u32 2147483647, %v3137
        %v3146 = vand.u32 2147483647, %v3138
        %v3147 = vand.u32 2147483647, %v3139
        %v3148 = vand.u32 2147483647, %v3140
        %v3149 = vand.u32 2147483647, %v3141
        %v3150 = vand.u32 2147483647, %v3142
        %v3151 = vand.u32 2147483647, %v3143
        %v3152 = vand.u32 2147483647, %v3144
        %v3153 = vsub.f32 1.0, %v3145
        %v3154 = vsub.f32 1.0, %v3146
        %v3155 = vsub.f32 1.0, %v3147
        %v3156 = vsub.f32 1.0, %v3148
        %v3157 = vsub.f32 1.0, %v3149
        %v3158 = vsub.f32 1.0, %v3150
        %v3159 = vsub.f32 1.0, %v3151
        %v3160 = vsub.f32 1.0, %v3152
        %v3161 = vmax.f32 %v3153, 0.0
        %v3162 = vmax.f32 %v3154, 0.0
        %v3163 = vmax.f32 %v3155, 0.0
        %v3164 = vmax.f32 %v3156, 0.0
        %v3165 = vmax.f32 %v3157, 0.0
        %v3166 = vmax.f32 %v3158, 0.0
        %v3167 = vmax.f32 %v3159, 0.0
        %v3168 = vmax.f32 %v3160, 0.0
        %3169 = vset.pattern.permute.xlu0 31
        %3170 = vperm.xlu0 %3169, %v245
        %v3171 = vpop.permute.xlu0 %3170
        %3173 = vset.pattern.permute.xlu0 31
        %3174 = vperm.xlu0 %3173, %v246
        %v3175 = vpop.permute.xlu0 %3174
        %3177 = vset.pattern.permute.xlu0 31
        %3178 = vperm.xlu0 %3177, %v247
        %v3179 = vpop.permute.xlu0 %3178
        %3181 = vset.pattern.permute.xlu0 31
        %3182 = vperm.xlu0 %3181, %v248
        %v3183 = vpop.permute.xlu0 %3182
        %3185 = vset.pattern.permute.xlu0 31
        %3186 = vperm.xlu0 %3185, %v249
        %v3187 = vpop.permute.xlu0 %3186
        %3189 = vset.pattern.permute.xlu0 31
        %3190 = vperm.xlu0 %3189, %v250
        %v3191 = vpop.permute.xlu0 %3190
        %3193 = vset.pattern.permute.xlu0 31
        %3194 = vperm.xlu0 %3193, %v251
        %v3195 = vpop.permute.xlu0 %3194
        %3197 = vset.pattern.permute.xlu0 31
        %3198 = vperm.xlu0 %3197, %v252
        %v3199 = vpop.permute.xlu0 %3198
        %v3201 = vmul.f32 %v3161, %v3171
        %v3202 = vmul.f32 %v3162, %v3175
        %v3203 = vmul.f32 %v3163, %v3179
        %v3204 = vmul.f32 %v3164, %v3183
        %v3205 = vmul.f32 %v3165, %v3187
        %v3206 = vmul.f32 %v3166, %v3191
        %v3207 = vmul.f32 %v3167, %v3195
        %v3208 = vmul.f32 %v3168, %v3199
        %v3209 = vadd.f32 %v3129, %v3201
        %v3210 = vadd.f32 %v3130, %v3202
        %v3211 = vadd.f32 %v3131, %v3203
        %v3212 = vadd.f32 %v3132, %v3204
        %v3213 = vadd.f32 %v3133, %v3205
        %v3214 = vadd.f32 %v3134, %v3206
        %v3215 = vadd.f32 %v3135, %v3207
        %v3216 = vadd.f32 %v3136, %v3208
        %v3217 = vsub.f32 %v649, 32.0
        %v3218 = vsub.f32 %v650, 32.0
        %v3219 = vsub.f32 %v651, 32.0
        %v3220 = vsub.f32 %v652, 32.0
        %v3221 = vsub.f32 %v653, 32.0
        %v3222 = vsub.f32 %v654, 32.0
        %v3223 = vsub.f32 %v655, 32.0
        %v3224 = vsub.f32 %v656, 32.0
        %v3225 = vand.u32 2147483647, %v3217
        %v3226 = vand.u32 2147483647, %v3218
        %v3227 = vand.u32 2147483647, %v3219
        %v3228 = vand.u32 2147483647, %v3220
        %v3229 = vand.u32 2147483647, %v3221
        %v3230 = vand.u32 2147483647, %v3222
        %v3231 = vand.u32 2147483647, %v3223
        %v3232 = vand.u32 2147483647, %v3224
        %v3233 = vsub.f32 1.0, %v3225
        %v3234 = vsub.f32 1.0, %v3226
        %v3235 = vsub.f32 1.0, %v3227
        %v3236 = vsub.f32 1.0, %v3228
        %v3237 = vsub.f32 1.0, %v3229
        %v3238 = vsub.f32 1.0, %v3230
        %v3239 = vsub.f32 1.0, %v3231
        %v3240 = vsub.f32 1.0, %v3232
        %v3241 = vmax.f32 %v3233, 0.0
        %v3242 = vmax.f32 %v3234, 0.0
        %v3243 = vmax.f32 %v3235, 0.0
        %v3244 = vmax.f32 %v3236, 0.0
        %v3245 = vmax.f32 %v3237, 0.0
        %v3246 = vmax.f32 %v3238, 0.0
        %v3247 = vmax.f32 %v3239, 0.0
        %v3248 = vmax.f32 %v3240, 0.0
        %3249 = vset.pattern.permute.xlu0 32
        %3250 = vperm.xlu0 %3249, %v245
        %v3251 = vpop.permute.xlu0 %3250
        %3253 = vset.pattern.permute.xlu0 32
        %3254 = vperm.xlu0 %3253, %v246
        %v3255 = vpop.permute.xlu0 %3254
        %3257 = vset.pattern.permute.xlu0 32
        %3258 = vperm.xlu0 %3257, %v247
        %v3259 = vpop.permute.xlu0 %3258
        %3261 = vset.pattern.permute.xlu0 32
        %3262 = vperm.xlu0 %3261, %v248
        %v3263 = vpop.permute.xlu0 %3262
        %3265 = vset.pattern.permute.xlu0 32
        %3266 = vperm.xlu0 %3265, %v249
        %v3267 = vpop.permute.xlu0 %3266
        %3269 = vset.pattern.permute.xlu0 32
        %3270 = vperm.xlu0 %3269, %v250
        %v3271 = vpop.permute.xlu0 %3270
        %3273 = vset.pattern.permute.xlu0 32
        %3274 = vperm.xlu0 %3273, %v251
        %v3275 = vpop.permute.xlu0 %3274
        %3277 = vset.pattern.permute.xlu0 32
        %3278 = vperm.xlu0 %3277, %v252
        %v3279 = vpop.permute.xlu0 %3278
        %v3281 = vmul.f32 %v3241, %v3251
        %v3282 = vmul.f32 %v3242, %v3255
        %v3283 = vmul.f32 %v3243, %v3259
        %v3284 = vmul.f32 %v3244, %v3263
        %v3285 = vmul.f32 %v3245, %v3267
        %v3286 = vmul.f32 %v3246, %v3271
        %v3287 = vmul.f32 %v3247, %v3275
        %v3288 = vmul.f32 %v3248, %v3279
        %v3289 = vadd.f32 %v3209, %v3281
        %v3290 = vadd.f32 %v3210, %v3282
        %v3291 = vadd.f32 %v3211, %v3283
        %v3292 = vadd.f32 %v3212, %v3284
        %v3293 = vadd.f32 %v3213, %v3285
        %v3294 = vadd.f32 %v3214, %v3286
        %v3295 = vadd.f32 %v3215, %v3287
        %v3296 = vadd.f32 %v3216, %v3288
        %v3297 = vsub.f32 %v649, 33.0
        %v3298 = vsub.f32 %v650, 33.0
        %v3299 = vsub.f32 %v651, 33.0
        %v3300 = vsub.f32 %v652, 33.0
        %v3301 = vsub.f32 %v653, 33.0
        %v3302 = vsub.f32 %v654, 33.0
        %v3303 = vsub.f32 %v655, 33.0
        %v3304 = vsub.f32 %v656, 33.0
        %v3305 = vand.u32 2147483647, %v3297
        %v3306 = vand.u32 2147483647, %v3298
        %v3307 = vand.u32 2147483647, %v3299
        %v3308 = vand.u32 2147483647, %v3300
        %v3309 = vand.u32 2147483647, %v3301
        %v3310 = vand.u32 2147483647, %v3302
        %v3311 = vand.u32 2147483647, %v3303
        %v3312 = vand.u32 2147483647, %v3304
        %v3313 = vsub.f32 1.0, %v3305
        %v3314 = vsub.f32 1.0, %v3306
        %v3315 = vsub.f32 1.0, %v3307
        %v3316 = vsub.f32 1.0, %v3308
        %v3317 = vsub.f32 1.0, %v3309
        %v3318 = vsub.f32 1.0, %v3310
        %v3319 = vsub.f32 1.0, %v3311
        %v3320 = vsub.f32 1.0, %v3312
        %v3321 = vmax.f32 %v3313, 0.0
        %v3322 = vmax.f32 %v3314, 0.0
        %v3323 = vmax.f32 %v3315, 0.0
        %v3324 = vmax.f32 %v3316, 0.0
        %v3325 = vmax.f32 %v3317, 0.0
        %v3326 = vmax.f32 %v3318, 0.0
        %v3327 = vmax.f32 %v3319, 0.0
        %v3328 = vmax.f32 %v3320, 0.0
        %3329 = vset.pattern.permute.xlu0 33
        %3330 = vperm.xlu0 %3329, %v245
        %v3331 = vpop.permute.xlu0 %3330
        %3333 = vset.pattern.permute.xlu0 33
        %3334 = vperm.xlu0 %3333, %v246
        %v3335 = vpop.permute.xlu0 %3334
        %3337 = vset.pattern.permute.xlu0 33
        %3338 = vperm.xlu0 %3337, %v247
        %v3339 = vpop.permute.xlu0 %3338
        %3341 = vset.pattern.permute.xlu0 33
        %3342 = vperm.xlu0 %3341, %v248
        %v3343 = vpop.permute.xlu0 %3342
        %3345 = vset.pattern.permute.xlu0 33
        %3346 = vperm.xlu0 %3345, %v249
        %v3347 = vpop.permute.xlu0 %3346
        %3349 = vset.pattern.permute.xlu0 33
        %3350 = vperm.xlu0 %3349, %v250
        %v3351 = vpop.permute.xlu0 %3350
        %3353 = vset.pattern.permute.xlu0 33
        %3354 = vperm.xlu0 %3353, %v251
        %v3355 = vpop.permute.xlu0 %3354
        %3357 = vset.pattern.permute.xlu0 33
        %3358 = vperm.xlu0 %3357, %v252
        %v3359 = vpop.permute.xlu0 %3358
        %v3361 = vmul.f32 %v3321, %v3331
        %v3362 = vmul.f32 %v3322, %v3335
        %v3363 = vmul.f32 %v3323, %v3339
        %v3364 = vmul.f32 %v3324, %v3343
        %v3365 = vmul.f32 %v3325, %v3347
        %v3366 = vmul.f32 %v3326, %v3351
        %v3367 = vmul.f32 %v3327, %v3355
        %v3368 = vmul.f32 %v3328, %v3359
        %v3369 = vadd.f32 %v3289, %v3361
        %v3370 = vadd.f32 %v3290, %v3362
        %v3371 = vadd.f32 %v3291, %v3363
        %v3372 = vadd.f32 %v3292, %v3364
        %v3373 = vadd.f32 %v3293, %v3365
        %v3374 = vadd.f32 %v3294, %v3366
        %v3375 = vadd.f32 %v3295, %v3367
        %v3376 = vadd.f32 %v3296, %v3368
        %v3377 = vsub.f32 %v649, 34.0
        %v3378 = vsub.f32 %v650, 34.0
        %v3379 = vsub.f32 %v651, 34.0
        %v3380 = vsub.f32 %v652, 34.0
        %v3381 = vsub.f32 %v653, 34.0
        %v3382 = vsub.f32 %v654, 34.0
        %v3383 = vsub.f32 %v655, 34.0
        %v3384 = vsub.f32 %v656, 34.0
        %v3385 = vand.u32 2147483647, %v3377
        %v3386 = vand.u32 2147483647, %v3378
        %v3387 = vand.u32 2147483647, %v3379
        %v3388 = vand.u32 2147483647, %v3380
        %v3389 = vand.u32 2147483647, %v3381
        %v3390 = vand.u32 2147483647, %v3382
        %v3391 = vand.u32 2147483647, %v3383
        %v3392 = vand.u32 2147483647, %v3384
        %v3393 = vsub.f32 1.0, %v3385
        %v3394 = vsub.f32 1.0, %v3386
        %v3395 = vsub.f32 1.0, %v3387
        %v3396 = vsub.f32 1.0, %v3388
        %v3397 = vsub.f32 1.0, %v3389
        %v3398 = vsub.f32 1.0, %v3390
        %v3399 = vsub.f32 1.0, %v3391
        %v3400 = vsub.f32 1.0, %v3392
        %v3401 = vmax.f32 %v3393, 0.0
        %v3402 = vmax.f32 %v3394, 0.0
        %v3403 = vmax.f32 %v3395, 0.0
        %v3404 = vmax.f32 %v3396, 0.0
        %v3405 = vmax.f32 %v3397, 0.0
        %v3406 = vmax.f32 %v3398, 0.0
        %v3407 = vmax.f32 %v3399, 0.0
        %v3408 = vmax.f32 %v3400, 0.0
        %3409 = vset.pattern.permute.xlu0 34
        %3410 = vperm.xlu0 %3409, %v245
        %v3411 = vpop.permute.xlu0 %3410
        %3413 = vset.pattern.permute.xlu0 34
        %3414 = vperm.xlu0 %3413, %v246
        %v3415 = vpop.permute.xlu0 %3414
        %3417 = vset.pattern.permute.xlu0 34
        %3418 = vperm.xlu0 %3417, %v247
        %v3419 = vpop.permute.xlu0 %3418
        %3421 = vset.pattern.permute.xlu0 34
        %3422 = vperm.xlu0 %3421, %v248
        %v3423 = vpop.permute.xlu0 %3422
        %3425 = vset.pattern.permute.xlu0 34
        %3426 = vperm.xlu0 %3425, %v249
        %v3427 = vpop.permute.xlu0 %3426
        %3429 = vset.pattern.permute.xlu0 34
        %3430 = vperm.xlu0 %3429, %v250
        %v3431 = vpop.permute.xlu0 %3430
        %3433 = vset.pattern.permute.xlu0 34
        %3434 = vperm.xlu0 %3433, %v251
        %v3435 = vpop.permute.xlu0 %3434
        %3437 = vset.pattern.permute.xlu0 34
        %3438 = vperm.xlu0 %3437, %v252
        %v3439 = vpop.permute.xlu0 %3438
        %v3441 = vmul.f32 %v3401, %v3411
        %v3442 = vmul.f32 %v3402, %v3415
        %v3443 = vmul.f32 %v3403, %v3419
        %v3444 = vmul.f32 %v3404, %v3423
        %v3445 = vmul.f32 %v3405, %v3427
        %v3446 = vmul.f32 %v3406, %v3431
        %v3447 = vmul.f32 %v3407, %v3435
        %v3448 = vmul.f32 %v3408, %v3439
        %v3449 = vadd.f32 %v3369, %v3441
        %v3450 = vadd.f32 %v3370, %v3442
        %v3451 = vadd.f32 %v3371, %v3443
        %v3452 = vadd.f32 %v3372, %v3444
        %v3453 = vadd.f32 %v3373, %v3445
        %v3454 = vadd.f32 %v3374, %v3446
        %v3455 = vadd.f32 %v3375, %v3447
        %v3456 = vadd.f32 %v3376, %v3448
        %v3457 = vsub.f32 %v649, 35.0
        %v3458 = vsub.f32 %v650, 35.0
        %v3459 = vsub.f32 %v651, 35.0
        %v3460 = vsub.f32 %v652, 35.0
        %v3461 = vsub.f32 %v653, 35.0
        %v3462 = vsub.f32 %v654, 35.0
        %v3463 = vsub.f32 %v655, 35.0
        %v3464 = vsub.f32 %v656, 35.0
        %v3465 = vand.u32 2147483647, %v3457
        %v3466 = vand.u32 2147483647, %v3458
        %v3467 = vand.u32 2147483647, %v3459
        %v3468 = vand.u32 2147483647, %v3460
        %v3469 = vand.u32 2147483647, %v3461
        %v3470 = vand.u32 2147483647, %v3462
        %v3471 = vand.u32 2147483647, %v3463
        %v3472 = vand.u32 2147483647, %v3464
        %v3473 = vsub.f32 1.0, %v3465
        %v3474 = vsub.f32 1.0, %v3466
        %v3475 = vsub.f32 1.0, %v3467
        %v3476 = vsub.f32 1.0, %v3468
        %v3477 = vsub.f32 1.0, %v3469
        %v3478 = vsub.f32 1.0, %v3470
        %v3479 = vsub.f32 1.0, %v3471
        %v3480 = vsub.f32 1.0, %v3472
        %v3481 = vmax.f32 %v3473, 0.0
        %v3482 = vmax.f32 %v3474, 0.0
        %v3483 = vmax.f32 %v3475, 0.0
        %v3484 = vmax.f32 %v3476, 0.0
        %v3485 = vmax.f32 %v3477, 0.0
        %v3486 = vmax.f32 %v3478, 0.0
        %v3487 = vmax.f32 %v3479, 0.0
        %v3488 = vmax.f32 %v3480, 0.0
        %3489 = vset.pattern.permute.xlu0 35
        %3490 = vperm.xlu0 %3489, %v245
        %v3491 = vpop.permute.xlu0 %3490
        %3493 = vset.pattern.permute.xlu0 35
        %3494 = vperm.xlu0 %3493, %v246
        %v3495 = vpop.permute.xlu0 %3494
        %3497 = vset.pattern.permute.xlu0 35
        %3498 = vperm.xlu0 %3497, %v247
        %v3499 = vpop.permute.xlu0 %3498
        %3501 = vset.pattern.permute.xlu0 35
        %3502 = vperm.xlu0 %3501, %v248
        %v3503 = vpop.permute.xlu0 %3502
        %3505 = vset.pattern.permute.xlu0 35
        %3506 = vperm.xlu0 %3505, %v249
        %v3507 = vpop.permute.xlu0 %3506
        %3509 = vset.pattern.permute.xlu0 35
        %3510 = vperm.xlu0 %3509, %v250
        %v3511 = vpop.permute.xlu0 %3510
        %3513 = vset.pattern.permute.xlu0 35
        %3514 = vperm.xlu0 %3513, %v251
        %v3515 = vpop.permute.xlu0 %3514
        %3517 = vset.pattern.permute.xlu0 35
        %3518 = vperm.xlu0 %3517, %v252
        %v3519 = vpop.permute.xlu0 %3518
        %v3521 = vmul.f32 %v3481, %v3491
        %v3522 = vmul.f32 %v3482, %v3495
        %v3523 = vmul.f32 %v3483, %v3499
        %v3524 = vmul.f32 %v3484, %v3503
        %v3525 = vmul.f32 %v3485, %v3507
        %v3526 = vmul.f32 %v3486, %v3511
        %v3527 = vmul.f32 %v3487, %v3515
        %v3528 = vmul.f32 %v3488, %v3519
        %v3529 = vadd.f32 %v3449, %v3521
        %v3530 = vadd.f32 %v3450, %v3522
        %v3531 = vadd.f32 %v3451, %v3523
        %v3532 = vadd.f32 %v3452, %v3524
        %v3533 = vadd.f32 %v3453, %v3525
        %v3534 = vadd.f32 %v3454, %v3526
        %v3535 = vadd.f32 %v3455, %v3527
        %v3536 = vadd.f32 %v3456, %v3528
        %v3537 = vsub.f32 %v649, 36.0
        %v3538 = vsub.f32 %v650, 36.0
        %v3539 = vsub.f32 %v651, 36.0
        %v3540 = vsub.f32 %v652, 36.0
        %v3541 = vsub.f32 %v653, 36.0
        %v3542 = vsub.f32 %v654, 36.0
        %v3543 = vsub.f32 %v655, 36.0
        %v3544 = vsub.f32 %v656, 36.0
        %v3545 = vand.u32 2147483647, %v3537
        %v3546 = vand.u32 2147483647, %v3538
        %v3547 = vand.u32 2147483647, %v3539
        %v3548 = vand.u32 2147483647, %v3540
        %v3549 = vand.u32 2147483647, %v3541
        %v3550 = vand.u32 2147483647, %v3542
        %v3551 = vand.u32 2147483647, %v3543
        %v3552 = vand.u32 2147483647, %v3544
        %v3553 = vsub.f32 1.0, %v3545
        %v3554 = vsub.f32 1.0, %v3546
        %v3555 = vsub.f32 1.0, %v3547
        %v3556 = vsub.f32 1.0, %v3548
        %v3557 = vsub.f32 1.0, %v3549
        %v3558 = vsub.f32 1.0, %v3550
        %v3559 = vsub.f32 1.0, %v3551
        %v3560 = vsub.f32 1.0, %v3552
        %v3561 = vmax.f32 %v3553, 0.0
        %v3562 = vmax.f32 %v3554, 0.0
        %v3563 = vmax.f32 %v3555, 0.0
        %v3564 = vmax.f32 %v3556, 0.0
        %v3565 = vmax.f32 %v3557, 0.0
        %v3566 = vmax.f32 %v3558, 0.0
        %v3567 = vmax.f32 %v3559, 0.0
        %v3568 = vmax.f32 %v3560, 0.0
        %3569 = vset.pattern.permute.xlu0 36
        %3570 = vperm.xlu0 %3569, %v245
        %v3571 = vpop.permute.xlu0 %3570
        %3573 = vset.pattern.permute.xlu0 36
        %3574 = vperm.xlu0 %3573, %v246
        %v3575 = vpop.permute.xlu0 %3574
        %3577 = vset.pattern.permute.xlu0 36
        %3578 = vperm.xlu0 %3577, %v247
        %v3579 = vpop.permute.xlu0 %3578
        %3581 = vset.pattern.permute.xlu0 36
        %3582 = vperm.xlu0 %3581, %v248
        %v3583 = vpop.permute.xlu0 %3582
        %3585 = vset.pattern.permute.xlu0 36
        %3586 = vperm.xlu0 %3585, %v249
        %v3587 = vpop.permute.xlu0 %3586
        %3589 = vset.pattern.permute.xlu0 36
        %3590 = vperm.xlu0 %3589, %v250
        %v3591 = vpop.permute.xlu0 %3590
        %3593 = vset.pattern.permute.xlu0 36
        %3594 = vperm.xlu0 %3593, %v251
        %v3595 = vpop.permute.xlu0 %3594
        %3597 = vset.pattern.permute.xlu0 36
        %3598 = vperm.xlu0 %3597, %v252
        %v3599 = vpop.permute.xlu0 %3598
        %v3601 = vmul.f32 %v3561, %v3571
        %v3602 = vmul.f32 %v3562, %v3575
        %v3603 = vmul.f32 %v3563, %v3579
        %v3604 = vmul.f32 %v3564, %v3583
        %v3605 = vmul.f32 %v3565, %v3587
        %v3606 = vmul.f32 %v3566, %v3591
        %v3607 = vmul.f32 %v3567, %v3595
        %v3608 = vmul.f32 %v3568, %v3599
        %v3609 = vadd.f32 %v3529, %v3601
        %v3610 = vadd.f32 %v3530, %v3602
        %v3611 = vadd.f32 %v3531, %v3603
        %v3612 = vadd.f32 %v3532, %v3604
        %v3613 = vadd.f32 %v3533, %v3605
        %v3614 = vadd.f32 %v3534, %v3606
        %v3615 = vadd.f32 %v3535, %v3607
        %v3616 = vadd.f32 %v3536, %v3608
        %v3617 = vsub.f32 %v649, 37.0
        %v3618 = vsub.f32 %v650, 37.0
        %v3619 = vsub.f32 %v651, 37.0
        %v3620 = vsub.f32 %v652, 37.0
        %v3621 = vsub.f32 %v653, 37.0
        %v3622 = vsub.f32 %v654, 37.0
        %v3623 = vsub.f32 %v655, 37.0
        %v3624 = vsub.f32 %v656, 37.0
        %v3625 = vand.u32 2147483647, %v3617
        %v3626 = vand.u32 2147483647, %v3618
        %v3627 = vand.u32 2147483647, %v3619
        %v3628 = vand.u32 2147483647, %v3620
        %v3629 = vand.u32 2147483647, %v3621
        %v3630 = vand.u32 2147483647, %v3622
        %v3631 = vand.u32 2147483647, %v3623
        %v3632 = vand.u32 2147483647, %v3624
        %v3633 = vsub.f32 1.0, %v3625
        %v3634 = vsub.f32 1.0, %v3626
        %v3635 = vsub.f32 1.0, %v3627
        %v3636 = vsub.f32 1.0, %v3628
        %v3637 = vsub.f32 1.0, %v3629
        %v3638 = vsub.f32 1.0, %v3630
        %v3639 = vsub.f32 1.0, %v3631
        %v3640 = vsub.f32 1.0, %v3632
        %v3641 = vmax.f32 %v3633, 0.0
        %v3642 = vmax.f32 %v3634, 0.0
        %v3643 = vmax.f32 %v3635, 0.0
        %v3644 = vmax.f32 %v3636, 0.0
        %v3645 = vmax.f32 %v3637, 0.0
        %v3646 = vmax.f32 %v3638, 0.0
        %v3647 = vmax.f32 %v3639, 0.0
        %v3648 = vmax.f32 %v3640, 0.0
        %3649 = vset.pattern.permute.xlu0 37
        %3650 = vperm.xlu0 %3649, %v245
        %v3651 = vpop.permute.xlu0 %3650
        %3653 = vset.pattern.permute.xlu0 37
        %3654 = vperm.xlu0 %3653, %v246
        %v3655 = vpop.permute.xlu0 %3654
        %3657 = vset.pattern.permute.xlu0 37
        %3658 = vperm.xlu0 %3657, %v247
        %v3659 = vpop.permute.xlu0 %3658
        %3661 = vset.pattern.permute.xlu0 37
        %3662 = vperm.xlu0 %3661, %v248
        %v3663 = vpop.permute.xlu0 %3662
        %3665 = vset.pattern.permute.xlu0 37
        %3666 = vperm.xlu0 %3665, %v249
        %v3667 = vpop.permute.xlu0 %3666
        %3669 = vset.pattern.permute.xlu0 37
        %3670 = vperm.xlu0 %3669, %v250
        %v3671 = vpop.permute.xlu0 %3670
        %3673 = vset.pattern.permute.xlu0 37
        %3674 = vperm.xlu0 %3673, %v251
        %v3675 = vpop.permute.xlu0 %3674
        %3677 = vset.pattern.permute.xlu0 37
        %3678 = vperm.xlu0 %3677, %v252
        %v3679 = vpop.permute.xlu0 %3678
        %v3681 = vmul.f32 %v3641, %v3651
        %v3682 = vmul.f32 %v3642, %v3655
        %v3683 = vmul.f32 %v3643, %v3659
        %v3684 = vmul.f32 %v3644, %v3663
        %v3685 = vmul.f32 %v3645, %v3667
        %v3686 = vmul.f32 %v3646, %v3671
        %v3687 = vmul.f32 %v3647, %v3675
        %v3688 = vmul.f32 %v3648, %v3679
        %v3689 = vadd.f32 %v3609, %v3681
        %v3690 = vadd.f32 %v3610, %v3682
        %v3691 = vadd.f32 %v3611, %v3683
        %v3692 = vadd.f32 %v3612, %v3684
        %v3693 = vadd.f32 %v3613, %v3685
        %v3694 = vadd.f32 %v3614, %v3686
        %v3695 = vadd.f32 %v3615, %v3687
        %v3696 = vadd.f32 %v3616, %v3688
        %v3697 = vsub.f32 %v649, 38.0
        %v3698 = vsub.f32 %v650, 38.0
        %v3699 = vsub.f32 %v651, 38.0
        %v3700 = vsub.f32 %v652, 38.0
        %v3701 = vsub.f32 %v653, 38.0
        %v3702 = vsub.f32 %v654, 38.0
        %v3703 = vsub.f32 %v655, 38.0
        %v3704 = vsub.f32 %v656, 38.0
        %v3705 = vand.u32 2147483647, %v3697
        %v3706 = vand.u32 2147483647, %v3698
        %v3707 = vand.u32 2147483647, %v3699
        %v3708 = vand.u32 2147483647, %v3700
        %v3709 = vand.u32 2147483647, %v3701
        %v3710 = vand.u32 2147483647, %v3702
        %v3711 = vand.u32 2147483647, %v3703
        %v3712 = vand.u32 2147483647, %v3704
        %v3713 = vsub.f32 1.0, %v3705
        %v3714 = vsub.f32 1.0, %v3706
        %v3715 = vsub.f32 1.0, %v3707
        %v3716 = vsub.f32 1.0, %v3708
        %v3717 = vsub.f32 1.0, %v3709
        %v3718 = vsub.f32 1.0, %v3710
        %v3719 = vsub.f32 1.0, %v3711
        %v3720 = vsub.f32 1.0, %v3712
        %v3721 = vmax.f32 %v3713, 0.0
        %v3722 = vmax.f32 %v3714, 0.0
        %v3723 = vmax.f32 %v3715, 0.0
        %v3724 = vmax.f32 %v3716, 0.0
        %v3725 = vmax.f32 %v3717, 0.0
        %v3726 = vmax.f32 %v3718, 0.0
        %v3727 = vmax.f32 %v3719, 0.0
        %v3728 = vmax.f32 %v3720, 0.0
        %3729 = vset.pattern.permute.xlu0 38
        %3730 = vperm.xlu0 %3729, %v245
        %v3731 = vpop.permute.xlu0 %3730
        %3733 = vset.pattern.permute.xlu0 38
        %3734 = vperm.xlu0 %3733, %v246
        %v3735 = vpop.permute.xlu0 %3734
        %3737 = vset.pattern.permute.xlu0 38
        %3738 = vperm.xlu0 %3737, %v247
        %v3739 = vpop.permute.xlu0 %3738
        %3741 = vset.pattern.permute.xlu0 38
        %3742 = vperm.xlu0 %3741, %v248
        %v3743 = vpop.permute.xlu0 %3742
        %3745 = vset.pattern.permute.xlu0 38
        %3746 = vperm.xlu0 %3745, %v249
        %v3747 = vpop.permute.xlu0 %3746
        %3749 = vset.pattern.permute.xlu0 38
        %3750 = vperm.xlu0 %3749, %v250
        %v3751 = vpop.permute.xlu0 %3750
        %3753 = vset.pattern.permute.xlu0 38
        %3754 = vperm.xlu0 %3753, %v251
        %v3755 = vpop.permute.xlu0 %3754
        %3757 = vset.pattern.permute.xlu0 38
        %3758 = vperm.xlu0 %3757, %v252
        %v3759 = vpop.permute.xlu0 %3758
        %v3761 = vmul.f32 %v3721, %v3731
        %v3762 = vmul.f32 %v3722, %v3735
        %v3763 = vmul.f32 %v3723, %v3739
        %v3764 = vmul.f32 %v3724, %v3743
        %v3765 = vmul.f32 %v3725, %v3747
        %v3766 = vmul.f32 %v3726, %v3751
        %v3767 = vmul.f32 %v3727, %v3755
        %v3768 = vmul.f32 %v3728, %v3759
        %v3769 = vadd.f32 %v3689, %v3761
        %v3770 = vadd.f32 %v3690, %v3762
        %v3771 = vadd.f32 %v3691, %v3763
        %v3772 = vadd.f32 %v3692, %v3764
        %v3773 = vadd.f32 %v3693, %v3765
        %v3774 = vadd.f32 %v3694, %v3766
        %v3775 = vadd.f32 %v3695, %v3767
        %v3776 = vadd.f32 %v3696, %v3768
        %v3777 = vsub.f32 %v649, 39.0
        %v3778 = vsub.f32 %v650, 39.0
        %v3779 = vsub.f32 %v651, 39.0
        %v3780 = vsub.f32 %v652, 39.0
        %v3781 = vsub.f32 %v653, 39.0
        %v3782 = vsub.f32 %v654, 39.0
        %v3783 = vsub.f32 %v655, 39.0
        %v3784 = vsub.f32 %v656, 39.0
        %v3785 = vand.u32 2147483647, %v3777
        %v3786 = vand.u32 2147483647, %v3778
        %v3787 = vand.u32 2147483647, %v3779
        %v3788 = vand.u32 2147483647, %v3780
        %v3789 = vand.u32 2147483647, %v3781
        %v3790 = vand.u32 2147483647, %v3782
        %v3791 = vand.u32 2147483647, %v3783
        %v3792 = vand.u32 2147483647, %v3784
        %v3793 = vsub.f32 1.0, %v3785
        %v3794 = vsub.f32 1.0, %v3786
        %v3795 = vsub.f32 1.0, %v3787
        %v3796 = vsub.f32 1.0, %v3788
        %v3797 = vsub.f32 1.0, %v3789
        %v3798 = vsub.f32 1.0, %v3790
        %v3799 = vsub.f32 1.0, %v3791
        %v3800 = vsub.f32 1.0, %v3792
        %v3801 = vmax.f32 %v3793, 0.0
        %v3802 = vmax.f32 %v3794, 0.0
        %v3803 = vmax.f32 %v3795, 0.0
        %v3804 = vmax.f32 %v3796, 0.0
        %v3805 = vmax.f32 %v3797, 0.0
        %v3806 = vmax.f32 %v3798, 0.0
        %v3807 = vmax.f32 %v3799, 0.0
        %v3808 = vmax.f32 %v3800, 0.0
        %3809 = vset.pattern.permute.xlu0 39
        %3810 = vperm.xlu0 %3809, %v245
        %v3811 = vpop.permute.xlu0 %3810
        %3813 = vset.pattern.permute.xlu0 39
        %3814 = vperm.xlu0 %3813, %v246
        %v3815 = vpop.permute.xlu0 %3814
        %3817 = vset.pattern.permute.xlu0 39
        %3818 = vperm.xlu0 %3817, %v247
        %v3819 = vpop.permute.xlu0 %3818
        %3821 = vset.pattern.permute.xlu0 39
        %3822 = vperm.xlu0 %3821, %v248
        %v3823 = vpop.permute.xlu0 %3822
        %3825 = vset.pattern.permute.xlu0 39
        %3826 = vperm.xlu0 %3825, %v249
        %v3827 = vpop.permute.xlu0 %3826
        %3829 = vset.pattern.permute.xlu0 39
        %3830 = vperm.xlu0 %3829, %v250
        %v3831 = vpop.permute.xlu0 %3830
        %3833 = vset.pattern.permute.xlu0 39
        %3834 = vperm.xlu0 %3833, %v251
        %v3835 = vpop.permute.xlu0 %3834
        %3837 = vset.pattern.permute.xlu0 39
        %3838 = vperm.xlu0 %3837, %v252
        %v3839 = vpop.permute.xlu0 %3838
        %v3841 = vmul.f32 %v3801, %v3811
        %v3842 = vmul.f32 %v3802, %v3815
        %v3843 = vmul.f32 %v3803, %v3819
        %v3844 = vmul.f32 %v3804, %v3823
        %v3845 = vmul.f32 %v3805, %v3827
        %v3846 = vmul.f32 %v3806, %v3831
        %v3847 = vmul.f32 %v3807, %v3835
        %v3848 = vmul.f32 %v3808, %v3839
        %v3849 = vadd.f32 %v3769, %v3841
        %v3850 = vadd.f32 %v3770, %v3842
        %v3851 = vadd.f32 %v3771, %v3843
        %v3852 = vadd.f32 %v3772, %v3844
        %v3853 = vadd.f32 %v3773, %v3845
        %v3854 = vadd.f32 %v3774, %v3846
        %v3855 = vadd.f32 %v3775, %v3847
        %v3856 = vadd.f32 %v3776, %v3848
        %v3857 = vsub.f32 %v649, 40.0
        %v3858 = vsub.f32 %v650, 40.0
        %v3859 = vsub.f32 %v651, 40.0
        %v3860 = vsub.f32 %v652, 40.0
        %v3861 = vsub.f32 %v653, 40.0
        %v3862 = vsub.f32 %v654, 40.0
        %v3863 = vsub.f32 %v655, 40.0
        %v3864 = vsub.f32 %v656, 40.0
        %v3865 = vand.u32 2147483647, %v3857
        %v3866 = vand.u32 2147483647, %v3858
        %v3867 = vand.u32 2147483647, %v3859
        %v3868 = vand.u32 2147483647, %v3860
        %v3869 = vand.u32 2147483647, %v3861
        %v3870 = vand.u32 2147483647, %v3862
        %v3871 = vand.u32 2147483647, %v3863
        %v3872 = vand.u32 2147483647, %v3864
        %v3873 = vsub.f32 1.0, %v3865
        %v3874 = vsub.f32 1.0, %v3866
        %v3875 = vsub.f32 1.0, %v3867
        %v3876 = vsub.f32 1.0, %v3868
        %v3877 = vsub.f32 1.0, %v3869
        %v3878 = vsub.f32 1.0, %v3870
        %v3879 = vsub.f32 1.0, %v3871
        %v3880 = vsub.f32 1.0, %v3872
        %v3881 = vmax.f32 %v3873, 0.0
        %v3882 = vmax.f32 %v3874, 0.0
        %v3883 = vmax.f32 %v3875, 0.0
        %v3884 = vmax.f32 %v3876, 0.0
        %v3885 = vmax.f32 %v3877, 0.0
        %v3886 = vmax.f32 %v3878, 0.0
        %v3887 = vmax.f32 %v3879, 0.0
        %v3888 = vmax.f32 %v3880, 0.0
        %3889 = vset.pattern.permute.xlu0 40
        %3890 = vperm.xlu0 %3889, %v245
        %v3891 = vpop.permute.xlu0 %3890
        %3893 = vset.pattern.permute.xlu0 40
        %3894 = vperm.xlu0 %3893, %v246
        %v3895 = vpop.permute.xlu0 %3894
        %3897 = vset.pattern.permute.xlu0 40
        %3898 = vperm.xlu0 %3897, %v247
        %v3899 = vpop.permute.xlu0 %3898
        %3901 = vset.pattern.permute.xlu0 40
        %3902 = vperm.xlu0 %3901, %v248
        %v3903 = vpop.permute.xlu0 %3902
        %3905 = vset.pattern.permute.xlu0 40
        %3906 = vperm.xlu0 %3905, %v249
        %v3907 = vpop.permute.xlu0 %3906
        %3909 = vset.pattern.permute.xlu0 40
        %3910 = vperm.xlu0 %3909, %v250
        %v3911 = vpop.permute.xlu0 %3910
        %3913 = vset.pattern.permute.xlu0 40
        %3914 = vperm.xlu0 %3913, %v251
        %v3915 = vpop.permute.xlu0 %3914
        %3917 = vset.pattern.permute.xlu0 40
        %3918 = vperm.xlu0 %3917, %v252
        %v3919 = vpop.permute.xlu0 %3918
        %v3921 = vmul.f32 %v3881, %v3891
        %v3922 = vmul.f32 %v3882, %v3895
        %v3923 = vmul.f32 %v3883, %v3899
        %v3924 = vmul.f32 %v3884, %v3903
        %v3925 = vmul.f32 %v3885, %v3907
        %v3926 = vmul.f32 %v3886, %v3911
        %v3927 = vmul.f32 %v3887, %v3915
        %v3928 = vmul.f32 %v3888, %v3919
        %v3929 = vadd.f32 %v3849, %v3921
        %v3930 = vadd.f32 %v3850, %v3922
        %v3931 = vadd.f32 %v3851, %v3923
        %v3932 = vadd.f32 %v3852, %v3924
        %v3933 = vadd.f32 %v3853, %v3925
        %v3934 = vadd.f32 %v3854, %v3926
        %v3935 = vadd.f32 %v3855, %v3927
        %v3936 = vadd.f32 %v3856, %v3928
        %v3937 = vsub.f32 %v649, 41.0
        %v3938 = vsub.f32 %v650, 41.0
        %v3939 = vsub.f32 %v651, 41.0
        %v3940 = vsub.f32 %v652, 41.0
        %v3941 = vsub.f32 %v653, 41.0
        %v3942 = vsub.f32 %v654, 41.0
        %v3943 = vsub.f32 %v655, 41.0
        %v3944 = vsub.f32 %v656, 41.0
        %v3945 = vand.u32 2147483647, %v3937
        %v3946 = vand.u32 2147483647, %v3938
        %v3947 = vand.u32 2147483647, %v3939
        %v3948 = vand.u32 2147483647, %v3940
        %v3949 = vand.u32 2147483647, %v3941
        %v3950 = vand.u32 2147483647, %v3942
        %v3951 = vand.u32 2147483647, %v3943
        %v3952 = vand.u32 2147483647, %v3944
        %v3953 = vsub.f32 1.0, %v3945
        %v3954 = vsub.f32 1.0, %v3946
        %v3955 = vsub.f32 1.0, %v3947
        %v3956 = vsub.f32 1.0, %v3948
        %v3957 = vsub.f32 1.0, %v3949
        %v3958 = vsub.f32 1.0, %v3950
        %v3959 = vsub.f32 1.0, %v3951
        %v3960 = vsub.f32 1.0, %v3952
        %v3961 = vmax.f32 %v3953, 0.0
        %v3962 = vmax.f32 %v3954, 0.0
        %v3963 = vmax.f32 %v3955, 0.0
        %v3964 = vmax.f32 %v3956, 0.0
        %v3965 = vmax.f32 %v3957, 0.0
        %v3966 = vmax.f32 %v3958, 0.0
        %v3967 = vmax.f32 %v3959, 0.0
        %v3968 = vmax.f32 %v3960, 0.0
        %3969 = vset.pattern.permute.xlu0 41
        %3970 = vperm.xlu0 %3969, %v245
        %v3971 = vpop.permute.xlu0 %3970
        %3973 = vset.pattern.permute.xlu0 41
        %3974 = vperm.xlu0 %3973, %v246
        %v3975 = vpop.permute.xlu0 %3974
        %3977 = vset.pattern.permute.xlu0 41
        %3978 = vperm.xlu0 %3977, %v247
        %v3979 = vpop.permute.xlu0 %3978
        %3981 = vset.pattern.permute.xlu0 41
        %3982 = vperm.xlu0 %3981, %v248
        %v3983 = vpop.permute.xlu0 %3982
        %3985 = vset.pattern.permute.xlu0 41
        %3986 = vperm.xlu0 %3985, %v249
        %v3987 = vpop.permute.xlu0 %3986
        %3989 = vset.pattern.permute.xlu0 41
        %3990 = vperm.xlu0 %3989, %v250
        %v3991 = vpop.permute.xlu0 %3990
        %3993 = vset.pattern.permute.xlu0 41
        %3994 = vperm.xlu0 %3993, %v251
        %v3995 = vpop.permute.xlu0 %3994
        %3997 = vset.pattern.permute.xlu0 41
        %3998 = vperm.xlu0 %3997, %v252
        %v3999 = vpop.permute.xlu0 %3998
        %v4001 = vmul.f32 %v3961, %v3971
        %v4002 = vmul.f32 %v3962, %v3975
        %v4003 = vmul.f32 %v3963, %v3979
        %v4004 = vmul.f32 %v3964, %v3983
        %v4005 = vmul.f32 %v3965, %v3987
        %v4006 = vmul.f32 %v3966, %v3991
        %v4007 = vmul.f32 %v3967, %v3995
        %v4008 = vmul.f32 %v3968, %v3999
        %v4009 = vadd.f32 %v3929, %v4001
        %v4010 = vadd.f32 %v3930, %v4002
        %v4011 = vadd.f32 %v3931, %v4003
        %v4012 = vadd.f32 %v3932, %v4004
        %v4013 = vadd.f32 %v3933, %v4005
        %v4014 = vadd.f32 %v3934, %v4006
        %v4015 = vadd.f32 %v3935, %v4007
        %v4016 = vadd.f32 %v3936, %v4008
        %v4017 = vsub.f32 %v649, 42.0
        %v4018 = vsub.f32 %v650, 42.0
        %v4019 = vsub.f32 %v651, 42.0
        %v4020 = vsub.f32 %v652, 42.0
        %v4021 = vsub.f32 %v653, 42.0
        %v4022 = vsub.f32 %v654, 42.0
        %v4023 = vsub.f32 %v655, 42.0
        %v4024 = vsub.f32 %v656, 42.0
        %v4025 = vand.u32 2147483647, %v4017
        %v4026 = vand.u32 2147483647, %v4018
        %v4027 = vand.u32 2147483647, %v4019
        %v4028 = vand.u32 2147483647, %v4020
        %v4029 = vand.u32 2147483647, %v4021
        %v4030 = vand.u32 2147483647, %v4022
        %v4031 = vand.u32 2147483647, %v4023
        %v4032 = vand.u32 2147483647, %v4024
        %v4033 = vsub.f32 1.0, %v4025
        %v4034 = vsub.f32 1.0, %v4026
        %v4035 = vsub.f32 1.0, %v4027
        %v4036 = vsub.f32 1.0, %v4028
        %v4037 = vsub.f32 1.0, %v4029
        %v4038 = vsub.f32 1.0, %v4030
        %v4039 = vsub.f32 1.0, %v4031
        %v4040 = vsub.f32 1.0, %v4032
        %v4041 = vmax.f32 %v4033, 0.0
        %v4042 = vmax.f32 %v4034, 0.0
        %v4043 = vmax.f32 %v4035, 0.0
        %v4044 = vmax.f32 %v4036, 0.0
        %v4045 = vmax.f32 %v4037, 0.0
        %v4046 = vmax.f32 %v4038, 0.0
        %v4047 = vmax.f32 %v4039, 0.0
        %v4048 = vmax.f32 %v4040, 0.0
        %4049 = vset.pattern.permute.xlu0 42
        %4050 = vperm.xlu0 %4049, %v245
        %v4051 = vpop.permute.xlu0 %4050
        %4053 = vset.pattern.permute.xlu0 42
        %4054 = vperm.xlu0 %4053, %v246
        %v4055 = vpop.permute.xlu0 %4054
        %4057 = vset.pattern.permute.xlu0 42
        %4058 = vperm.xlu0 %4057, %v247
        %v4059 = vpop.permute.xlu0 %4058
        %4061 = vset.pattern.permute.xlu0 42
        %4062 = vperm.xlu0 %4061, %v248
        %v4063 = vpop.permute.xlu0 %4062
        %4065 = vset.pattern.permute.xlu0 42
        %4066 = vperm.xlu0 %4065, %v249
        %v4067 = vpop.permute.xlu0 %4066
        %4069 = vset.pattern.permute.xlu0 42
        %4070 = vperm.xlu0 %4069, %v250
        %v4071 = vpop.permute.xlu0 %4070
        %4073 = vset.pattern.permute.xlu0 42
        %4074 = vperm.xlu0 %4073, %v251
        %v4075 = vpop.permute.xlu0 %4074
        %4077 = vset.pattern.permute.xlu0 42
        %4078 = vperm.xlu0 %4077, %v252
        %v4079 = vpop.permute.xlu0 %4078
        %v4081 = vmul.f32 %v4041, %v4051
        %v4082 = vmul.f32 %v4042, %v4055
        %v4083 = vmul.f32 %v4043, %v4059
        %v4084 = vmul.f32 %v4044, %v4063
        %v4085 = vmul.f32 %v4045, %v4067
        %v4086 = vmul.f32 %v4046, %v4071
        %v4087 = vmul.f32 %v4047, %v4075
        %v4088 = vmul.f32 %v4048, %v4079
        %v4089 = vadd.f32 %v4009, %v4081
        %v4090 = vadd.f32 %v4010, %v4082
        %v4091 = vadd.f32 %v4011, %v4083
        %v4092 = vadd.f32 %v4012, %v4084
        %v4093 = vadd.f32 %v4013, %v4085
        %v4094 = vadd.f32 %v4014, %v4086
        %v4095 = vadd.f32 %v4015, %v4087
        %v4096 = vadd.f32 %v4016, %v4088
        %v4097 = vsub.f32 %v649, 43.0
        %v4098 = vsub.f32 %v650, 43.0
        %v4099 = vsub.f32 %v651, 43.0
        %v4100 = vsub.f32 %v652, 43.0
        %v4101 = vsub.f32 %v653, 43.0
        %v4102 = vsub.f32 %v654, 43.0
        %v4103 = vsub.f32 %v655, 43.0
        %v4104 = vsub.f32 %v656, 43.0
        %v4105 = vand.u32 2147483647, %v4097
        %v4106 = vand.u32 2147483647, %v4098
        %v4107 = vand.u32 2147483647, %v4099
        %v4108 = vand.u32 2147483647, %v4100
        %v4109 = vand.u32 2147483647, %v4101
        %v4110 = vand.u32 2147483647, %v4102
        %v4111 = vand.u32 2147483647, %v4103
        %v4112 = vand.u32 2147483647, %v4104
        %v4113 = vsub.f32 1.0, %v4105
        %v4114 = vsub.f32 1.0, %v4106
        %v4115 = vsub.f32 1.0, %v4107
        %v4116 = vsub.f32 1.0, %v4108
        %v4117 = vsub.f32 1.0, %v4109
        %v4118 = vsub.f32 1.0, %v4110
        %v4119 = vsub.f32 1.0, %v4111
        %v4120 = vsub.f32 1.0, %v4112
        %v4121 = vmax.f32 %v4113, 0.0
        %v4122 = vmax.f32 %v4114, 0.0
        %v4123 = vmax.f32 %v4115, 0.0
        %v4124 = vmax.f32 %v4116, 0.0
        %v4125 = vmax.f32 %v4117, 0.0
        %v4126 = vmax.f32 %v4118, 0.0
        %v4127 = vmax.f32 %v4119, 0.0
        %v4128 = vmax.f32 %v4120, 0.0
        %4129 = vset.pattern.permute.xlu0 43
        %4130 = vperm.xlu0 %4129, %v245
        %v4131 = vpop.permute.xlu0 %4130
        %4133 = vset.pattern.permute.xlu0 43
        %4134 = vperm.xlu0 %4133, %v246
        %v4135 = vpop.permute.xlu0 %4134
        %4137 = vset.pattern.permute.xlu0 43
        %4138 = vperm.xlu0 %4137, %v247
        %v4139 = vpop.permute.xlu0 %4138
        %4141 = vset.pattern.permute.xlu0 43
        %4142 = vperm.xlu0 %4141, %v248
        %v4143 = vpop.permute.xlu0 %4142
        %4145 = vset.pattern.permute.xlu0 43
        %4146 = vperm.xlu0 %4145, %v249
        %v4147 = vpop.permute.xlu0 %4146
        %4149 = vset.pattern.permute.xlu0 43
        %4150 = vperm.xlu0 %4149, %v250
        %v4151 = vpop.permute.xlu0 %4150
        %4153 = vset.pattern.permute.xlu0 43
        %4154 = vperm.xlu0 %4153, %v251
        %v4155 = vpop.permute.xlu0 %4154
        %4157 = vset.pattern.permute.xlu0 43
        %4158 = vperm.xlu0 %4157, %v252
        %v4159 = vpop.permute.xlu0 %4158
        %v4161 = vmul.f32 %v4121, %v4131
        %v4162 = vmul.f32 %v4122, %v4135
        %v4163 = vmul.f32 %v4123, %v4139
        %v4164 = vmul.f32 %v4124, %v4143
        %v4165 = vmul.f32 %v4125, %v4147
        %v4166 = vmul.f32 %v4126, %v4151
        %v4167 = vmul.f32 %v4127, %v4155
        %v4168 = vmul.f32 %v4128, %v4159
        %v4169 = vadd.f32 %v4089, %v4161
        %v4170 = vadd.f32 %v4090, %v4162
        %v4171 = vadd.f32 %v4091, %v4163
        %v4172 = vadd.f32 %v4092, %v4164
        %v4173 = vadd.f32 %v4093, %v4165
        %v4174 = vadd.f32 %v4094, %v4166
        %v4175 = vadd.f32 %v4095, %v4167
        %v4176 = vadd.f32 %v4096, %v4168
        %v4177 = vsub.f32 %v649, 44.0
        %v4178 = vsub.f32 %v650, 44.0
        %v4179 = vsub.f32 %v651, 44.0
        %v4180 = vsub.f32 %v652, 44.0
        %v4181 = vsub.f32 %v653, 44.0
        %v4182 = vsub.f32 %v654, 44.0
        %v4183 = vsub.f32 %v655, 44.0
        %v4184 = vsub.f32 %v656, 44.0
        %v4185 = vand.u32 2147483647, %v4177
        %v4186 = vand.u32 2147483647, %v4178
        %v4187 = vand.u32 2147483647, %v4179
        %v4188 = vand.u32 2147483647, %v4180
        %v4189 = vand.u32 2147483647, %v4181
        %v4190 = vand.u32 2147483647, %v4182
        %v4191 = vand.u32 2147483647, %v4183
        %v4192 = vand.u32 2147483647, %v4184
        %v4193 = vsub.f32 1.0, %v4185
        %v4194 = vsub.f32 1.0, %v4186
        %v4195 = vsub.f32 1.0, %v4187
        %v4196 = vsub.f32 1.0, %v4188
        %v4197 = vsub.f32 1.0, %v4189
        %v4198 = vsub.f32 1.0, %v4190
        %v4199 = vsub.f32 1.0, %v4191
        %v4200 = vsub.f32 1.0, %v4192
        %v4201 = vmax.f32 %v4193, 0.0
        %v4202 = vmax.f32 %v4194, 0.0
        %v4203 = vmax.f32 %v4195, 0.0
        %v4204 = vmax.f32 %v4196, 0.0
        %v4205 = vmax.f32 %v4197, 0.0
        %v4206 = vmax.f32 %v4198, 0.0
        %v4207 = vmax.f32 %v4199, 0.0
        %v4208 = vmax.f32 %v4200, 0.0
        %4209 = vset.pattern.permute.xlu0 44
        %4210 = vperm.xlu0 %4209, %v245
        %v4211 = vpop.permute.xlu0 %4210
        %4213 = vset.pattern.permute.xlu0 44
        %4214 = vperm.xlu0 %4213, %v246
        %v4215 = vpop.permute.xlu0 %4214
        %4217 = vset.pattern.permute.xlu0 44
        %4218 = vperm.xlu0 %4217, %v247
        %v4219 = vpop.permute.xlu0 %4218
        %4221 = vset.pattern.permute.xlu0 44
        %4222 = vperm.xlu0 %4221, %v248
        %v4223 = vpop.permute.xlu0 %4222
        %4225 = vset.pattern.permute.xlu0 44
        %4226 = vperm.xlu0 %4225, %v249
        %v4227 = vpop.permute.xlu0 %4226
        %4229 = vset.pattern.permute.xlu0 44
        %4230 = vperm.xlu0 %4229, %v250
        %v4231 = vpop.permute.xlu0 %4230
        %4233 = vset.pattern.permute.xlu0 44
        %4234 = vperm.xlu0 %4233, %v251
        %v4235 = vpop.permute.xlu0 %4234
        %4237 = vset.pattern.permute.xlu0 44
        %4238 = vperm.xlu0 %4237, %v252
        %v4239 = vpop.permute.xlu0 %4238
        %v4241 = vmul.f32 %v4201, %v4211
        %v4242 = vmul.f32 %v4202, %v4215
        %v4243 = vmul.f32 %v4203, %v4219
        %v4244 = vmul.f32 %v4204, %v4223
        %v4245 = vmul.f32 %v4205, %v4227
        %v4246 = vmul.f32 %v4206, %v4231
        %v4247 = vmul.f32 %v4207, %v4235
        %v4248 = vmul.f32 %v4208, %v4239
        %v4249 = vadd.f32 %v4169, %v4241
        %v4250 = vadd.f32 %v4170, %v4242
        %v4251 = vadd.f32 %v4171, %v4243
        %v4252 = vadd.f32 %v4172, %v4244
        %v4253 = vadd.f32 %v4173, %v4245
        %v4254 = vadd.f32 %v4174, %v4246
        %v4255 = vadd.f32 %v4175, %v4247
        %v4256 = vadd.f32 %v4176, %v4248
        %v4257 = vsub.f32 %v649, 45.0
        %v4258 = vsub.f32 %v650, 45.0
        %v4259 = vsub.f32 %v651, 45.0
        %v4260 = vsub.f32 %v652, 45.0
        %v4261 = vsub.f32 %v653, 45.0
        %v4262 = vsub.f32 %v654, 45.0
        %v4263 = vsub.f32 %v655, 45.0
        %v4264 = vsub.f32 %v656, 45.0
        %v4265 = vand.u32 2147483647, %v4257
        %v4266 = vand.u32 2147483647, %v4258
        %v4267 = vand.u32 2147483647, %v4259
        %v4268 = vand.u32 2147483647, %v4260
        %v4269 = vand.u32 2147483647, %v4261
        %v4270 = vand.u32 2147483647, %v4262
        %v4271 = vand.u32 2147483647, %v4263
        %v4272 = vand.u32 2147483647, %v4264
        %v4273 = vsub.f32 1.0, %v4265
        %v4274 = vsub.f32 1.0, %v4266
        %v4275 = vsub.f32 1.0, %v4267
        %v4276 = vsub.f32 1.0, %v4268
        %v4277 = vsub.f32 1.0, %v4269
        %v4278 = vsub.f32 1.0, %v4270
        %v4279 = vsub.f32 1.0, %v4271
        %v4280 = vsub.f32 1.0, %v4272
        %v4281 = vmax.f32 %v4273, 0.0
        %v4282 = vmax.f32 %v4274, 0.0
        %v4283 = vmax.f32 %v4275, 0.0
        %v4284 = vmax.f32 %v4276, 0.0
        %v4285 = vmax.f32 %v4277, 0.0
        %v4286 = vmax.f32 %v4278, 0.0
        %v4287 = vmax.f32 %v4279, 0.0
        %v4288 = vmax.f32 %v4280, 0.0
        %4289 = vset.pattern.permute.xlu0 45
        %4290 = vperm.xlu0 %4289, %v245
        %v4291 = vpop.permute.xlu0 %4290
        %4293 = vset.pattern.permute.xlu0 45
        %4294 = vperm.xlu0 %4293, %v246
        %v4295 = vpop.permute.xlu0 %4294
        %4297 = vset.pattern.permute.xlu0 45
        %4298 = vperm.xlu0 %4297, %v247
        %v4299 = vpop.permute.xlu0 %4298
        %4301 = vset.pattern.permute.xlu0 45
        %4302 = vperm.xlu0 %4301, %v248
        %v4303 = vpop.permute.xlu0 %4302
        %4305 = vset.pattern.permute.xlu0 45
        %4306 = vperm.xlu0 %4305, %v249
        %v4307 = vpop.permute.xlu0 %4306
        %4309 = vset.pattern.permute.xlu0 45
        %4310 = vperm.xlu0 %4309, %v250
        %v4311 = vpop.permute.xlu0 %4310
        %4313 = vset.pattern.permute.xlu0 45
        %4314 = vperm.xlu0 %4313, %v251
        %v4315 = vpop.permute.xlu0 %4314
        %4317 = vset.pattern.permute.xlu0 45
        %4318 = vperm.xlu0 %4317, %v252
        %v4319 = vpop.permute.xlu0 %4318
        %v4321 = vmul.f32 %v4281, %v4291
        %v4322 = vmul.f32 %v4282, %v4295
        %v4323 = vmul.f32 %v4283, %v4299
        %v4324 = vmul.f32 %v4284, %v4303
        %v4325 = vmul.f32 %v4285, %v4307
        %v4326 = vmul.f32 %v4286, %v4311
        %v4327 = vmul.f32 %v4287, %v4315
        %v4328 = vmul.f32 %v4288, %v4319
        %v4329 = vadd.f32 %v4249, %v4321
        %v4330 = vadd.f32 %v4250, %v4322
        %v4331 = vadd.f32 %v4251, %v4323
        %v4332 = vadd.f32 %v4252, %v4324
        %v4333 = vadd.f32 %v4253, %v4325
        %v4334 = vadd.f32 %v4254, %v4326
        %v4335 = vadd.f32 %v4255, %v4327
        %v4336 = vadd.f32 %v4256, %v4328
        %v4337 = vsub.f32 %v649, 46.0
        %v4338 = vsub.f32 %v650, 46.0
        %v4339 = vsub.f32 %v651, 46.0
        %v4340 = vsub.f32 %v652, 46.0
        %v4341 = vsub.f32 %v653, 46.0
        %v4342 = vsub.f32 %v654, 46.0
        %v4343 = vsub.f32 %v655, 46.0
        %v4344 = vsub.f32 %v656, 46.0
        %v4345 = vand.u32 2147483647, %v4337
        %v4346 = vand.u32 2147483647, %v4338
        %v4347 = vand.u32 2147483647, %v4339
        %v4348 = vand.u32 2147483647, %v4340
        %v4349 = vand.u32 2147483647, %v4341
        %v4350 = vand.u32 2147483647, %v4342
        %v4351 = vand.u32 2147483647, %v4343
        %v4352 = vand.u32 2147483647, %v4344
        %v4353 = vsub.f32 1.0, %v4345
        %v4354 = vsub.f32 1.0, %v4346
        %v4355 = vsub.f32 1.0, %v4347
        %v4356 = vsub.f32 1.0, %v4348
        %v4357 = vsub.f32 1.0, %v4349
        %v4358 = vsub.f32 1.0, %v4350
        %v4359 = vsub.f32 1.0, %v4351
        %v4360 = vsub.f32 1.0, %v4352
        %v4361 = vmax.f32 %v4353, 0.0
        %v4362 = vmax.f32 %v4354, 0.0
        %v4363 = vmax.f32 %v4355, 0.0
        %v4364 = vmax.f32 %v4356, 0.0
        %v4365 = vmax.f32 %v4357, 0.0
        %v4366 = vmax.f32 %v4358, 0.0
        %v4367 = vmax.f32 %v4359, 0.0
        %v4368 = vmax.f32 %v4360, 0.0
        %4369 = vset.pattern.permute.xlu0 46
        %4370 = vperm.xlu0 %4369, %v245
        %v4371 = vpop.permute.xlu0 %4370
        %4373 = vset.pattern.permute.xlu0 46
        %4374 = vperm.xlu0 %4373, %v246
        %v4375 = vpop.permute.xlu0 %4374
        %4377 = vset.pattern.permute.xlu0 46
        %4378 = vperm.xlu0 %4377, %v247
        %v4379 = vpop.permute.xlu0 %4378
        %4381 = vset.pattern.permute.xlu0 46
        %4382 = vperm.xlu0 %4381, %v248
        %v4383 = vpop.permute.xlu0 %4382
        %4385 = vset.pattern.permute.xlu0 46
        %4386 = vperm.xlu0 %4385, %v249
        %v4387 = vpop.permute.xlu0 %4386
        %4389 = vset.pattern.permute.xlu0 46
        %4390 = vperm.xlu0 %4389, %v250
        %v4391 = vpop.permute.xlu0 %4390
        %4393 = vset.pattern.permute.xlu0 46
        %4394 = vperm.xlu0 %4393, %v251
        %v4395 = vpop.permute.xlu0 %4394
        %4397 = vset.pattern.permute.xlu0 46
        %4398 = vperm.xlu0 %4397, %v252
        %v4399 = vpop.permute.xlu0 %4398
        %v4401 = vmul.f32 %v4361, %v4371
        %v4402 = vmul.f32 %v4362, %v4375
        %v4403 = vmul.f32 %v4363, %v4379
        %v4404 = vmul.f32 %v4364, %v4383
        %v4405 = vmul.f32 %v4365, %v4387
        %v4406 = vmul.f32 %v4366, %v4391
        %v4407 = vmul.f32 %v4367, %v4395
        %v4408 = vmul.f32 %v4368, %v4399
        %v4409 = vadd.f32 %v4329, %v4401
        %v4410 = vadd.f32 %v4330, %v4402
        %v4411 = vadd.f32 %v4331, %v4403
        %v4412 = vadd.f32 %v4332, %v4404
        %v4413 = vadd.f32 %v4333, %v4405
        %v4414 = vadd.f32 %v4334, %v4406
        %v4415 = vadd.f32 %v4335, %v4407
        %v4416 = vadd.f32 %v4336, %v4408
        %v4417 = vsub.f32 %v649, 47.0
        %v4418 = vsub.f32 %v650, 47.0
        %v4419 = vsub.f32 %v651, 47.0
        %v4420 = vsub.f32 %v652, 47.0
        %v4421 = vsub.f32 %v653, 47.0
        %v4422 = vsub.f32 %v654, 47.0
        %v4423 = vsub.f32 %v655, 47.0
        %v4424 = vsub.f32 %v656, 47.0
        %v4425 = vand.u32 2147483647, %v4417
        %v4426 = vand.u32 2147483647, %v4418
        %v4427 = vand.u32 2147483647, %v4419
        %v4428 = vand.u32 2147483647, %v4420
        %v4429 = vand.u32 2147483647, %v4421
        %v4430 = vand.u32 2147483647, %v4422
        %v4431 = vand.u32 2147483647, %v4423
        %v4432 = vand.u32 2147483647, %v4424
        %v4433 = vsub.f32 1.0, %v4425
        %v4434 = vsub.f32 1.0, %v4426
        %v4435 = vsub.f32 1.0, %v4427
        %v4436 = vsub.f32 1.0, %v4428
        %v4437 = vsub.f32 1.0, %v4429
        %v4438 = vsub.f32 1.0, %v4430
        %v4439 = vsub.f32 1.0, %v4431
        %v4440 = vsub.f32 1.0, %v4432
        %v4441 = vmax.f32 %v4433, 0.0
        %v4442 = vmax.f32 %v4434, 0.0
        %v4443 = vmax.f32 %v4435, 0.0
        %v4444 = vmax.f32 %v4436, 0.0
        %v4445 = vmax.f32 %v4437, 0.0
        %v4446 = vmax.f32 %v4438, 0.0
        %v4447 = vmax.f32 %v4439, 0.0
        %v4448 = vmax.f32 %v4440, 0.0
        %4449 = vset.pattern.permute.xlu0 47
        %4450 = vperm.xlu0 %4449, %v245
        %v4451 = vpop.permute.xlu0 %4450
        %4453 = vset.pattern.permute.xlu0 47
        %4454 = vperm.xlu0 %4453, %v246
        %v4455 = vpop.permute.xlu0 %4454
        %4457 = vset.pattern.permute.xlu0 47
        %4458 = vperm.xlu0 %4457, %v247
        %v4459 = vpop.permute.xlu0 %4458
        %4461 = vset.pattern.permute.xlu0 47
        %4462 = vperm.xlu0 %4461, %v248
        %v4463 = vpop.permute.xlu0 %4462
        %4465 = vset.pattern.permute.xlu0 47
        %4466 = vperm.xlu0 %4465, %v249
        %v4467 = vpop.permute.xlu0 %4466
        %4469 = vset.pattern.permute.xlu0 47
        %4470 = vperm.xlu0 %4469, %v250
        %v4471 = vpop.permute.xlu0 %4470
        %4473 = vset.pattern.permute.xlu0 47
        %4474 = vperm.xlu0 %4473, %v251
        %v4475 = vpop.permute.xlu0 %4474
        %4477 = vset.pattern.permute.xlu0 47
        %4478 = vperm.xlu0 %4477, %v252
        %v4479 = vpop.permute.xlu0 %4478
        %v4481 = vmul.f32 %v4441, %v4451
        %v4482 = vmul.f32 %v4442, %v4455
        %v4483 = vmul.f32 %v4443, %v4459
        %v4484 = vmul.f32 %v4444, %v4463
        %v4485 = vmul.f32 %v4445, %v4467
        %v4486 = vmul.f32 %v4446, %v4471
        %v4487 = vmul.f32 %v4447, %v4475
        %v4488 = vmul.f32 %v4448, %v4479
        %v4489 = vadd.f32 %v4409, %v4481
        %v4490 = vadd.f32 %v4410, %v4482
        %v4491 = vadd.f32 %v4411, %v4483
        %v4492 = vadd.f32 %v4412, %v4484
        %v4493 = vadd.f32 %v4413, %v4485
        %v4494 = vadd.f32 %v4414, %v4486
        %v4495 = vadd.f32 %v4415, %v4487
        %v4496 = vadd.f32 %v4416, %v4488
        %v4497 = vsub.f32 %v649, 48.0
        %v4498 = vsub.f32 %v650, 48.0
        %v4499 = vsub.f32 %v651, 48.0
        %v4500 = vsub.f32 %v652, 48.0
        %v4501 = vsub.f32 %v653, 48.0
        %v4502 = vsub.f32 %v654, 48.0
        %v4503 = vsub.f32 %v655, 48.0
        %v4504 = vsub.f32 %v656, 48.0
        %v4505 = vand.u32 2147483647, %v4497
        %v4506 = vand.u32 2147483647, %v4498
        %v4507 = vand.u32 2147483647, %v4499
        %v4508 = vand.u32 2147483647, %v4500
        %v4509 = vand.u32 2147483647, %v4501
        %v4510 = vand.u32 2147483647, %v4502
        %v4511 = vand.u32 2147483647, %v4503
        %v4512 = vand.u32 2147483647, %v4504
        %v4513 = vsub.f32 1.0, %v4505
        %v4514 = vsub.f32 1.0, %v4506
        %v4515 = vsub.f32 1.0, %v4507
        %v4516 = vsub.f32 1.0, %v4508
        %v4517 = vsub.f32 1.0, %v4509
        %v4518 = vsub.f32 1.0, %v4510
        %v4519 = vsub.f32 1.0, %v4511
        %v4520 = vsub.f32 1.0, %v4512
        %v4521 = vmax.f32 %v4513, 0.0
        %v4522 = vmax.f32 %v4514, 0.0
        %v4523 = vmax.f32 %v4515, 0.0
        %v4524 = vmax.f32 %v4516, 0.0
        %v4525 = vmax.f32 %v4517, 0.0
        %v4526 = vmax.f32 %v4518, 0.0
        %v4527 = vmax.f32 %v4519, 0.0
        %v4528 = vmax.f32 %v4520, 0.0
        %4529 = vset.pattern.permute.xlu0 48
        %4530 = vperm.xlu0 %4529, %v245
        %v4531 = vpop.permute.xlu0 %4530
        %4533 = vset.pattern.permute.xlu0 48
        %4534 = vperm.xlu0 %4533, %v246
        %v4535 = vpop.permute.xlu0 %4534
        %4537 = vset.pattern.permute.xlu0 48
        %4538 = vperm.xlu0 %4537, %v247
        %v4539 = vpop.permute.xlu0 %4538
        %4541 = vset.pattern.permute.xlu0 48
        %4542 = vperm.xlu0 %4541, %v248
        %v4543 = vpop.permute.xlu0 %4542
        %4545 = vset.pattern.permute.xlu0 48
        %4546 = vperm.xlu0 %4545, %v249
        %v4547 = vpop.permute.xlu0 %4546
        %4549 = vset.pattern.permute.xlu0 48
        %4550 = vperm.xlu0 %4549, %v250
        %v4551 = vpop.permute.xlu0 %4550
        %4553 = vset.pattern.permute.xlu0 48
        %4554 = vperm.xlu0 %4553, %v251
        %v4555 = vpop.permute.xlu0 %4554
        %4557 = vset.pattern.permute.xlu0 48
        %4558 = vperm.xlu0 %4557, %v252
        %v4559 = vpop.permute.xlu0 %4558
        %v4561 = vmul.f32 %v4521, %v4531
        %v4562 = vmul.f32 %v4522, %v4535
        %v4563 = vmul.f32 %v4523, %v4539
        %v4564 = vmul.f32 %v4524, %v4543
        %v4565 = vmul.f32 %v4525, %v4547
        %v4566 = vmul.f32 %v4526, %v4551
        %v4567 = vmul.f32 %v4527, %v4555
        %v4568 = vmul.f32 %v4528, %v4559
        %v4569 = vadd.f32 %v4489, %v4561
        %v4570 = vadd.f32 %v4490, %v4562
        %v4571 = vadd.f32 %v4491, %v4563
        %v4572 = vadd.f32 %v4492, %v4564
        %v4573 = vadd.f32 %v4493, %v4565
        %v4574 = vadd.f32 %v4494, %v4566
        %v4575 = vadd.f32 %v4495, %v4567
        %v4576 = vadd.f32 %v4496, %v4568
        %v4577 = vsub.f32 %v649, 49.0
        %v4578 = vsub.f32 %v650, 49.0
        %v4579 = vsub.f32 %v651, 49.0
        %v4580 = vsub.f32 %v652, 49.0
        %v4581 = vsub.f32 %v653, 49.0
        %v4582 = vsub.f32 %v654, 49.0
        %v4583 = vsub.f32 %v655, 49.0
        %v4584 = vsub.f32 %v656, 49.0
        %v4585 = vand.u32 2147483647, %v4577
        %v4586 = vand.u32 2147483647, %v4578
        %v4587 = vand.u32 2147483647, %v4579
        %v4588 = vand.u32 2147483647, %v4580
        %v4589 = vand.u32 2147483647, %v4581
        %v4590 = vand.u32 2147483647, %v4582
        %v4591 = vand.u32 2147483647, %v4583
        %v4592 = vand.u32 2147483647, %v4584
        %v4593 = vsub.f32 1.0, %v4585
        %v4594 = vsub.f32 1.0, %v4586
        %v4595 = vsub.f32 1.0, %v4587
        %v4596 = vsub.f32 1.0, %v4588
        %v4597 = vsub.f32 1.0, %v4589
        %v4598 = vsub.f32 1.0, %v4590
        %v4599 = vsub.f32 1.0, %v4591
        %v4600 = vsub.f32 1.0, %v4592
        %v4601 = vmax.f32 %v4593, 0.0
        %v4602 = vmax.f32 %v4594, 0.0
        %v4603 = vmax.f32 %v4595, 0.0
        %v4604 = vmax.f32 %v4596, 0.0
        %v4605 = vmax.f32 %v4597, 0.0
        %v4606 = vmax.f32 %v4598, 0.0
        %v4607 = vmax.f32 %v4599, 0.0
        %v4608 = vmax.f32 %v4600, 0.0
        %4609 = vset.pattern.permute.xlu0 49
        %4610 = vperm.xlu0 %4609, %v245
        %v4611 = vpop.permute.xlu0 %4610
        %4613 = vset.pattern.permute.xlu0 49
        %4614 = vperm.xlu0 %4613, %v246
        %v4615 = vpop.permute.xlu0 %4614
        %4617 = vset.pattern.permute.xlu0 49
        %4618 = vperm.xlu0 %4617, %v247
        %v4619 = vpop.permute.xlu0 %4618
        %4621 = vset.pattern.permute.xlu0 49
        %4622 = vperm.xlu0 %4621, %v248
        %v4623 = vpop.permute.xlu0 %4622
        %4625 = vset.pattern.permute.xlu0 49
        %4626 = vperm.xlu0 %4625, %v249
        %v4627 = vpop.permute.xlu0 %4626
        %4629 = vset.pattern.permute.xlu0 49
        %4630 = vperm.xlu0 %4629, %v250
        %v4631 = vpop.permute.xlu0 %4630
        %4633 = vset.pattern.permute.xlu0 49
        %4634 = vperm.xlu0 %4633, %v251
        %v4635 = vpop.permute.xlu0 %4634
        %4637 = vset.pattern.permute.xlu0 49
        %4638 = vperm.xlu0 %4637, %v252
        %v4639 = vpop.permute.xlu0 %4638
        %v4641 = vmul.f32 %v4601, %v4611
        %v4642 = vmul.f32 %v4602, %v4615
        %v4643 = vmul.f32 %v4603, %v4619
        %v4644 = vmul.f32 %v4604, %v4623
        %v4645 = vmul.f32 %v4605, %v4627
        %v4646 = vmul.f32 %v4606, %v4631
        %v4647 = vmul.f32 %v4607, %v4635
        %v4648 = vmul.f32 %v4608, %v4639
        %v4649 = vadd.f32 %v4569, %v4641
        %v4650 = vadd.f32 %v4570, %v4642
        %v4651 = vadd.f32 %v4571, %v4643
        %v4652 = vadd.f32 %v4572, %v4644
        %v4653 = vadd.f32 %v4573, %v4645
        %v4654 = vadd.f32 %v4574, %v4646
        %v4655 = vadd.f32 %v4575, %v4647
        %v4656 = vadd.f32 %v4576, %v4648
        %v4657 = vsub.f32 %v649, 50.0
        %v4658 = vsub.f32 %v650, 50.0
        %v4659 = vsub.f32 %v651, 50.0
        %v4660 = vsub.f32 %v652, 50.0
        %v4661 = vsub.f32 %v653, 50.0
        %v4662 = vsub.f32 %v654, 50.0
        %v4663 = vsub.f32 %v655, 50.0
        %v4664 = vsub.f32 %v656, 50.0
        %v4665 = vand.u32 2147483647, %v4657
        %v4666 = vand.u32 2147483647, %v4658
        %v4667 = vand.u32 2147483647, %v4659
        %v4668 = vand.u32 2147483647, %v4660
        %v4669 = vand.u32 2147483647, %v4661
        %v4670 = vand.u32 2147483647, %v4662
        %v4671 = vand.u32 2147483647, %v4663
        %v4672 = vand.u32 2147483647, %v4664
        %v4673 = vsub.f32 1.0, %v4665
        %v4674 = vsub.f32 1.0, %v4666
        %v4675 = vsub.f32 1.0, %v4667
        %v4676 = vsub.f32 1.0, %v4668
        %v4677 = vsub.f32 1.0, %v4669
        %v4678 = vsub.f32 1.0, %v4670
        %v4679 = vsub.f32 1.0, %v4671
        %v4680 = vsub.f32 1.0, %v4672
        %v4681 = vmax.f32 %v4673, 0.0
        %v4682 = vmax.f32 %v4674, 0.0
        %v4683 = vmax.f32 %v4675, 0.0
        %v4684 = vmax.f32 %v4676, 0.0
        %v4685 = vmax.f32 %v4677, 0.0
        %v4686 = vmax.f32 %v4678, 0.0
        %v4687 = vmax.f32 %v4679, 0.0
        %v4688 = vmax.f32 %v4680, 0.0
        %4689 = vset.pattern.permute.xlu0 50
        %4690 = vperm.xlu0 %4689, %v245
        %v4691 = vpop.permute.xlu0 %4690
        %4693 = vset.pattern.permute.xlu0 50
        %4694 = vperm.xlu0 %4693, %v246
        %v4695 = vpop.permute.xlu0 %4694
        %4697 = vset.pattern.permute.xlu0 50
        %4698 = vperm.xlu0 %4697, %v247
        %v4699 = vpop.permute.xlu0 %4698
        %4701 = vset.pattern.permute.xlu0 50
        %4702 = vperm.xlu0 %4701, %v248
        %v4703 = vpop.permute.xlu0 %4702
        %4705 = vset.pattern.permute.xlu0 50
        %4706 = vperm.xlu0 %4705, %v249
        %v4707 = vpop.permute.xlu0 %4706
        %4709 = vset.pattern.permute.xlu0 50
        %4710 = vperm.xlu0 %4709, %v250
        %v4711 = vpop.permute.xlu0 %4710
        %4713 = vset.pattern.permute.xlu0 50
        %4714 = vperm.xlu0 %4713, %v251
        %v4715 = vpop.permute.xlu0 %4714
        %4717 = vset.pattern.permute.xlu0 50
        %4718 = vperm.xlu0 %4717, %v252
        %v4719 = vpop.permute.xlu0 %4718
        %v4721 = vmul.f32 %v4681, %v4691
        %v4722 = vmul.f32 %v4682, %v4695
        %v4723 = vmul.f32 %v4683, %v4699
        %v4724 = vmul.f32 %v4684, %v4703
        %v4725 = vmul.f32 %v4685, %v4707
        %v4726 = vmul.f32 %v4686, %v4711
        %v4727 = vmul.f32 %v4687, %v4715
        %v4728 = vmul.f32 %v4688, %v4719
        %v4729 = vadd.f32 %v4649, %v4721
        %v4730 = vadd.f32 %v4650, %v4722
        %v4731 = vadd.f32 %v4651, %v4723
        %v4732 = vadd.f32 %v4652, %v4724
        %v4733 = vadd.f32 %v4653, %v4725
        %v4734 = vadd.f32 %v4654, %v4726
        %v4735 = vadd.f32 %v4655, %v4727
        %v4736 = vadd.f32 %v4656, %v4728
        %v4737 = vsub.f32 %v649, 51.0
        %v4738 = vsub.f32 %v650, 51.0
        %v4739 = vsub.f32 %v651, 51.0
        %v4740 = vsub.f32 %v652, 51.0
        %v4741 = vsub.f32 %v653, 51.0
        %v4742 = vsub.f32 %v654, 51.0
        %v4743 = vsub.f32 %v655, 51.0
        %v4744 = vsub.f32 %v656, 51.0
        %v4745 = vand.u32 2147483647, %v4737
        %v4746 = vand.u32 2147483647, %v4738
        %v4747 = vand.u32 2147483647, %v4739
        %v4748 = vand.u32 2147483647, %v4740
        %v4749 = vand.u32 2147483647, %v4741
        %v4750 = vand.u32 2147483647, %v4742
        %v4751 = vand.u32 2147483647, %v4743
        %v4752 = vand.u32 2147483647, %v4744
        %v4753 = vsub.f32 1.0, %v4745
        %v4754 = vsub.f32 1.0, %v4746
        %v4755 = vsub.f32 1.0, %v4747
        %v4756 = vsub.f32 1.0, %v4748
        %v4757 = vsub.f32 1.0, %v4749
        %v4758 = vsub.f32 1.0, %v4750
        %v4759 = vsub.f32 1.0, %v4751
        %v4760 = vsub.f32 1.0, %v4752
        %v4761 = vmax.f32 %v4753, 0.0
        %v4762 = vmax.f32 %v4754, 0.0
        %v4763 = vmax.f32 %v4755, 0.0
        %v4764 = vmax.f32 %v4756, 0.0
        %v4765 = vmax.f32 %v4757, 0.0
        %v4766 = vmax.f32 %v4758, 0.0
        %v4767 = vmax.f32 %v4759, 0.0
        %v4768 = vmax.f32 %v4760, 0.0
        %4769 = vset.pattern.permute.xlu0 51
        %4770 = vperm.xlu0 %4769, %v245
        %v4771 = vpop.permute.xlu0 %4770
        %4773 = vset.pattern.permute.xlu0 51
        %4774 = vperm.xlu0 %4773, %v246
        %v4775 = vpop.permute.xlu0 %4774
        %4777 = vset.pattern.permute.xlu0 51
        %4778 = vperm.xlu0 %4777, %v247
        %v4779 = vpop.permute.xlu0 %4778
        %4781 = vset.pattern.permute.xlu0 51
        %4782 = vperm.xlu0 %4781, %v248
        %v4783 = vpop.permute.xlu0 %4782
        %4785 = vset.pattern.permute.xlu0 51
        %4786 = vperm.xlu0 %4785, %v249
        %v4787 = vpop.permute.xlu0 %4786
        %4789 = vset.pattern.permute.xlu0 51
        %4790 = vperm.xlu0 %4789, %v250
        %v4791 = vpop.permute.xlu0 %4790
        %4793 = vset.pattern.permute.xlu0 51
        %4794 = vperm.xlu0 %4793, %v251
        %v4795 = vpop.permute.xlu0 %4794
        %4797 = vset.pattern.permute.xlu0 51
        %4798 = vperm.xlu0 %4797, %v252
        %v4799 = vpop.permute.xlu0 %4798
        %v4801 = vmul.f32 %v4761, %v4771
        %v4802 = vmul.f32 %v4762, %v4775
        %v4803 = vmul.f32 %v4763, %v4779
        %v4804 = vmul.f32 %v4764, %v4783
        %v4805 = vmul.f32 %v4765, %v4787
        %v4806 = vmul.f32 %v4766, %v4791
        %v4807 = vmul.f32 %v4767, %v4795
        %v4808 = vmul.f32 %v4768, %v4799
        %v4809 = vadd.f32 %v4729, %v4801
        %v4810 = vadd.f32 %v4730, %v4802
        %v4811 = vadd.f32 %v4731, %v4803
        %v4812 = vadd.f32 %v4732, %v4804
        %v4813 = vadd.f32 %v4733, %v4805
        %v4814 = vadd.f32 %v4734, %v4806
        %v4815 = vadd.f32 %v4735, %v4807
        %v4816 = vadd.f32 %v4736, %v4808
        %v4817 = vsub.f32 %v649, 52.0
        %v4818 = vsub.f32 %v650, 52.0
        %v4819 = vsub.f32 %v651, 52.0
        %v4820 = vsub.f32 %v652, 52.0
        %v4821 = vsub.f32 %v653, 52.0
        %v4822 = vsub.f32 %v654, 52.0
        %v4823 = vsub.f32 %v655, 52.0
        %v4824 = vsub.f32 %v656, 52.0
        %v4825 = vand.u32 2147483647, %v4817
        %v4826 = vand.u32 2147483647, %v4818
        %v4827 = vand.u32 2147483647, %v4819
        %v4828 = vand.u32 2147483647, %v4820
        %v4829 = vand.u32 2147483647, %v4821
        %v4830 = vand.u32 2147483647, %v4822
        %v4831 = vand.u32 2147483647, %v4823
        %v4832 = vand.u32 2147483647, %v4824
        %v4833 = vsub.f32 1.0, %v4825
        %v4834 = vsub.f32 1.0, %v4826
        %v4835 = vsub.f32 1.0, %v4827
        %v4836 = vsub.f32 1.0, %v4828
        %v4837 = vsub.f32 1.0, %v4829
        %v4838 = vsub.f32 1.0, %v4830
        %v4839 = vsub.f32 1.0, %v4831
        %v4840 = vsub.f32 1.0, %v4832
        %v4841 = vmax.f32 %v4833, 0.0
        %v4842 = vmax.f32 %v4834, 0.0
        %v4843 = vmax.f32 %v4835, 0.0
        %v4844 = vmax.f32 %v4836, 0.0
        %v4845 = vmax.f32 %v4837, 0.0
        %v4846 = vmax.f32 %v4838, 0.0
        %v4847 = vmax.f32 %v4839, 0.0
        %v4848 = vmax.f32 %v4840, 0.0
        %4849 = vset.pattern.permute.xlu0 52
        %4850 = vperm.xlu0 %4849, %v245
        %v4851 = vpop.permute.xlu0 %4850
        %4853 = vset.pattern.permute.xlu0 52
        %4854 = vperm.xlu0 %4853, %v246
        %v4855 = vpop.permute.xlu0 %4854
        %4857 = vset.pattern.permute.xlu0 52
        %4858 = vperm.xlu0 %4857, %v247
        %v4859 = vpop.permute.xlu0 %4858
        %4861 = vset.pattern.permute.xlu0 52
        %4862 = vperm.xlu0 %4861, %v248
        %v4863 = vpop.permute.xlu0 %4862
        %4865 = vset.pattern.permute.xlu0 52
        %4866 = vperm.xlu0 %4865, %v249
        %v4867 = vpop.permute.xlu0 %4866
        %4869 = vset.pattern.permute.xlu0 52
        %4870 = vperm.xlu0 %4869, %v250
        %v4871 = vpop.permute.xlu0 %4870
        %4873 = vset.pattern.permute.xlu0 52
        %4874 = vperm.xlu0 %4873, %v251
        %v4875 = vpop.permute.xlu0 %4874
        %4877 = vset.pattern.permute.xlu0 52
        %4878 = vperm.xlu0 %4877, %v252
        %v4879 = vpop.permute.xlu0 %4878
        %v4881 = vmul.f32 %v4841, %v4851
        %v4882 = vmul.f32 %v4842, %v4855
        %v4883 = vmul.f32 %v4843, %v4859
        %v4884 = vmul.f32 %v4844, %v4863
        %v4885 = vmul.f32 %v4845, %v4867
        %v4886 = vmul.f32 %v4846, %v4871
        %v4887 = vmul.f32 %v4847, %v4875
        %v4888 = vmul.f32 %v4848, %v4879
        %v4889 = vadd.f32 %v4809, %v4881
        %v4890 = vadd.f32 %v4810, %v4882
        %v4891 = vadd.f32 %v4811, %v4883
        %v4892 = vadd.f32 %v4812, %v4884
        %v4893 = vadd.f32 %v4813, %v4885
        %v4894 = vadd.f32 %v4814, %v4886
        %v4895 = vadd.f32 %v4815, %v4887
        %v4896 = vadd.f32 %v4816, %v4888
        %v4897 = vsub.f32 %v649, 53.0
        %v4898 = vsub.f32 %v650, 53.0
        %v4899 = vsub.f32 %v651, 53.0
        %v4900 = vsub.f32 %v652, 53.0
        %v4901 = vsub.f32 %v653, 53.0
        %v4902 = vsub.f32 %v654, 53.0
        %v4903 = vsub.f32 %v655, 53.0
        %v4904 = vsub.f32 %v656, 53.0
        %v4905 = vand.u32 2147483647, %v4897
        %v4906 = vand.u32 2147483647, %v4898
        %v4907 = vand.u32 2147483647, %v4899
        %v4908 = vand.u32 2147483647, %v4900
        %v4909 = vand.u32 2147483647, %v4901
        %v4910 = vand.u32 2147483647, %v4902
        %v4911 = vand.u32 2147483647, %v4903
        %v4912 = vand.u32 2147483647, %v4904
        %v4913 = vsub.f32 1.0, %v4905
        %v4914 = vsub.f32 1.0, %v4906
        %v4915 = vsub.f32 1.0, %v4907
        %v4916 = vsub.f32 1.0, %v4908
        %v4917 = vsub.f32 1.0, %v4909
        %v4918 = vsub.f32 1.0, %v4910
        %v4919 = vsub.f32 1.0, %v4911
        %v4920 = vsub.f32 1.0, %v4912
        %v4921 = vmax.f32 %v4913, 0.0
        %v4922 = vmax.f32 %v4914, 0.0
        %v4923 = vmax.f32 %v4915, 0.0
        %v4924 = vmax.f32 %v4916, 0.0
        %v4925 = vmax.f32 %v4917, 0.0
        %v4926 = vmax.f32 %v4918, 0.0
        %v4927 = vmax.f32 %v4919, 0.0
        %v4928 = vmax.f32 %v4920, 0.0
        %4929 = vset.pattern.permute.xlu0 53
        %4930 = vperm.xlu0 %4929, %v245
        %v4931 = vpop.permute.xlu0 %4930
        %4933 = vset.pattern.permute.xlu0 53
        %4934 = vperm.xlu0 %4933, %v246
        %v4935 = vpop.permute.xlu0 %4934
        %4937 = vset.pattern.permute.xlu0 53
        %4938 = vperm.xlu0 %4937, %v247
        %v4939 = vpop.permute.xlu0 %4938
        %4941 = vset.pattern.permute.xlu0 53
        %4942 = vperm.xlu0 %4941, %v248
        %v4943 = vpop.permute.xlu0 %4942
        %4945 = vset.pattern.permute.xlu0 53
        %4946 = vperm.xlu0 %4945, %v249
        %v4947 = vpop.permute.xlu0 %4946
        %4949 = vset.pattern.permute.xlu0 53
        %4950 = vperm.xlu0 %4949, %v250
        %v4951 = vpop.permute.xlu0 %4950
        %4953 = vset.pattern.permute.xlu0 53
        %4954 = vperm.xlu0 %4953, %v251
        %v4955 = vpop.permute.xlu0 %4954
        %4957 = vset.pattern.permute.xlu0 53
        %4958 = vperm.xlu0 %4957, %v252
        %v4959 = vpop.permute.xlu0 %4958
        %v4961 = vmul.f32 %v4921, %v4931
        %v4962 = vmul.f32 %v4922, %v4935
        %v4963 = vmul.f32 %v4923, %v4939
        %v4964 = vmul.f32 %v4924, %v4943
        %v4965 = vmul.f32 %v4925, %v4947
        %v4966 = vmul.f32 %v4926, %v4951
        %v4967 = vmul.f32 %v4927, %v4955
        %v4968 = vmul.f32 %v4928, %v4959
        %v4969 = vadd.f32 %v4889, %v4961
        %v4970 = vadd.f32 %v4890, %v4962
        %v4971 = vadd.f32 %v4891, %v4963
        %v4972 = vadd.f32 %v4892, %v4964
        %v4973 = vadd.f32 %v4893, %v4965
        %v4974 = vadd.f32 %v4894, %v4966
        %v4975 = vadd.f32 %v4895, %v4967
        %v4976 = vadd.f32 %v4896, %v4968
        %v4977 = vsub.f32 %v649, 54.0
        %v4978 = vsub.f32 %v650, 54.0
        %v4979 = vsub.f32 %v651, 54.0
        %v4980 = vsub.f32 %v652, 54.0
        %v4981 = vsub.f32 %v653, 54.0
        %v4982 = vsub.f32 %v654, 54.0
        %v4983 = vsub.f32 %v655, 54.0
        %v4984 = vsub.f32 %v656, 54.0
        %v4985 = vand.u32 2147483647, %v4977
        %v4986 = vand.u32 2147483647, %v4978
        %v4987 = vand.u32 2147483647, %v4979
        %v4988 = vand.u32 2147483647, %v4980
        %v4989 = vand.u32 2147483647, %v4981
        %v4990 = vand.u32 2147483647, %v4982
        %v4991 = vand.u32 2147483647, %v4983
        %v4992 = vand.u32 2147483647, %v4984
        %v4993 = vsub.f32 1.0, %v4985
        %v4994 = vsub.f32 1.0, %v4986
        %v4995 = vsub.f32 1.0, %v4987
        %v4996 = vsub.f32 1.0, %v4988
        %v4997 = vsub.f32 1.0, %v4989
        %v4998 = vsub.f32 1.0, %v4990
        %v4999 = vsub.f32 1.0, %v4991
        %v5000 = vsub.f32 1.0, %v4992
        %v5001 = vmax.f32 %v4993, 0.0
        %v5002 = vmax.f32 %v4994, 0.0
        %v5003 = vmax.f32 %v4995, 0.0
        %v5004 = vmax.f32 %v4996, 0.0
        %v5005 = vmax.f32 %v4997, 0.0
        %v5006 = vmax.f32 %v4998, 0.0
        %v5007 = vmax.f32 %v4999, 0.0
        %v5008 = vmax.f32 %v5000, 0.0
        %5009 = vset.pattern.permute.xlu0 54
        %5010 = vperm.xlu0 %5009, %v245
        %v5011 = vpop.permute.xlu0 %5010
        %5013 = vset.pattern.permute.xlu0 54
        %5014 = vperm.xlu0 %5013, %v246
        %v5015 = vpop.permute.xlu0 %5014
        %5017 = vset.pattern.permute.xlu0 54
        %5018 = vperm.xlu0 %5017, %v247
        %v5019 = vpop.permute.xlu0 %5018
        %5021 = vset.pattern.permute.xlu0 54
        %5022 = vperm.xlu0 %5021, %v248
        %v5023 = vpop.permute.xlu0 %5022
        %5025 = vset.pattern.permute.xlu0 54
        %5026 = vperm.xlu0 %5025, %v249
        %v5027 = vpop.permute.xlu0 %5026
        %5029 = vset.pattern.permute.xlu0 54
        %5030 = vperm.xlu0 %5029, %v250
        %v5031 = vpop.permute.xlu0 %5030
        %5033 = vset.pattern.permute.xlu0 54
        %5034 = vperm.xlu0 %5033, %v251
        %v5035 = vpop.permute.xlu0 %5034
        %5037 = vset.pattern.permute.xlu0 54
        %5038 = vperm.xlu0 %5037, %v252
        %v5039 = vpop.permute.xlu0 %5038
        %v5041 = vmul.f32 %v5001, %v5011
        %v5042 = vmul.f32 %v5002, %v5015
        %v5043 = vmul.f32 %v5003, %v5019
        %v5044 = vmul.f32 %v5004, %v5023
        %v5045 = vmul.f32 %v5005, %v5027
        %v5046 = vmul.f32 %v5006, %v5031
        %v5047 = vmul.f32 %v5007, %v5035
        %v5048 = vmul.f32 %v5008, %v5039
        %v5049 = vadd.f32 %v4969, %v5041
        %v5050 = vadd.f32 %v4970, %v5042
        %v5051 = vadd.f32 %v4971, %v5043
        %v5052 = vadd.f32 %v4972, %v5044
        %v5053 = vadd.f32 %v4973, %v5045
        %v5054 = vadd.f32 %v4974, %v5046
        %v5055 = vadd.f32 %v4975, %v5047
        %v5056 = vadd.f32 %v4976, %v5048
        %v5057 = vsub.f32 %v649, 55.0
        %v5058 = vsub.f32 %v650, 55.0
        %v5059 = vsub.f32 %v651, 55.0
        %v5060 = vsub.f32 %v652, 55.0
        %v5061 = vsub.f32 %v653, 55.0
        %v5062 = vsub.f32 %v654, 55.0
        %v5063 = vsub.f32 %v655, 55.0
        %v5064 = vsub.f32 %v656, 55.0
        %v5065 = vand.u32 2147483647, %v5057
        %v5066 = vand.u32 2147483647, %v5058
        %v5067 = vand.u32 2147483647, %v5059
        %v5068 = vand.u32 2147483647, %v5060
        %v5069 = vand.u32 2147483647, %v5061
        %v5070 = vand.u32 2147483647, %v5062
        %v5071 = vand.u32 2147483647, %v5063
        %v5072 = vand.u32 2147483647, %v5064
        %v5073 = vsub.f32 1.0, %v5065
        %v5074 = vsub.f32 1.0, %v5066
        %v5075 = vsub.f32 1.0, %v5067
        %v5076 = vsub.f32 1.0, %v5068
        %v5077 = vsub.f32 1.0, %v5069
        %v5078 = vsub.f32 1.0, %v5070
        %v5079 = vsub.f32 1.0, %v5071
        %v5080 = vsub.f32 1.0, %v5072
        %v5081 = vmax.f32 %v5073, 0.0
        %v5082 = vmax.f32 %v5074, 0.0
        %v5083 = vmax.f32 %v5075, 0.0
        %v5084 = vmax.f32 %v5076, 0.0
        %v5085 = vmax.f32 %v5077, 0.0
        %v5086 = vmax.f32 %v5078, 0.0
        %v5087 = vmax.f32 %v5079, 0.0
        %v5088 = vmax.f32 %v5080, 0.0
        %5089 = vset.pattern.permute.xlu0 55
        %5090 = vperm.xlu0 %5089, %v245
        %v5091 = vpop.permute.xlu0 %5090
        %5093 = vset.pattern.permute.xlu0 55
        %5094 = vperm.xlu0 %5093, %v246
        %v5095 = vpop.permute.xlu0 %5094
        %5097 = vset.pattern.permute.xlu0 55
        %5098 = vperm.xlu0 %5097, %v247
        %v5099 = vpop.permute.xlu0 %5098
        %5101 = vset.pattern.permute.xlu0 55
        %5102 = vperm.xlu0 %5101, %v248
        %v5103 = vpop.permute.xlu0 %5102
        %5105 = vset.pattern.permute.xlu0 55
        %5106 = vperm.xlu0 %5105, %v249
        %v5107 = vpop.permute.xlu0 %5106
        %5109 = vset.pattern.permute.xlu0 55
        %5110 = vperm.xlu0 %5109, %v250
        %v5111 = vpop.permute.xlu0 %5110
        %5113 = vset.pattern.permute.xlu0 55
        %5114 = vperm.xlu0 %5113, %v251
        %v5115 = vpop.permute.xlu0 %5114
        %5117 = vset.pattern.permute.xlu0 55
        %5118 = vperm.xlu0 %5117, %v252
        %v5119 = vpop.permute.xlu0 %5118
        %v5121 = vmul.f32 %v5081, %v5091
        %v5122 = vmul.f32 %v5082, %v5095
        %v5123 = vmul.f32 %v5083, %v5099
        %v5124 = vmul.f32 %v5084, %v5103
        %v5125 = vmul.f32 %v5085, %v5107
        %v5126 = vmul.f32 %v5086, %v5111
        %v5127 = vmul.f32 %v5087, %v5115
        %v5128 = vmul.f32 %v5088, %v5119
        %v5129 = vadd.f32 %v5049, %v5121
        %v5130 = vadd.f32 %v5050, %v5122
        %v5131 = vadd.f32 %v5051, %v5123
        %v5132 = vadd.f32 %v5052, %v5124
        %v5133 = vadd.f32 %v5053, %v5125
        %v5134 = vadd.f32 %v5054, %v5126
        %v5135 = vadd.f32 %v5055, %v5127
        %v5136 = vadd.f32 %v5056, %v5128
        %v5137 = vsub.f32 %v649, 56.0
        %v5138 = vsub.f32 %v650, 56.0
        %v5139 = vsub.f32 %v651, 56.0
        %v5140 = vsub.f32 %v652, 56.0
        %v5141 = vsub.f32 %v653, 56.0
        %v5142 = vsub.f32 %v654, 56.0
        %v5143 = vsub.f32 %v655, 56.0
        %v5144 = vsub.f32 %v656, 56.0
        %v5145 = vand.u32 2147483647, %v5137
        %v5146 = vand.u32 2147483647, %v5138
        %v5147 = vand.u32 2147483647, %v5139
        %v5148 = vand.u32 2147483647, %v5140
        %v5149 = vand.u32 2147483647, %v5141
        %v5150 = vand.u32 2147483647, %v5142
        %v5151 = vand.u32 2147483647, %v5143
        %v5152 = vand.u32 2147483647, %v5144
        %v5153 = vsub.f32 1.0, %v5145
        %v5154 = vsub.f32 1.0, %v5146
        %v5155 = vsub.f32 1.0, %v5147
        %v5156 = vsub.f32 1.0, %v5148
        %v5157 = vsub.f32 1.0, %v5149
        %v5158 = vsub.f32 1.0, %v5150
        %v5159 = vsub.f32 1.0, %v5151
        %v5160 = vsub.f32 1.0, %v5152
        %v5161 = vmax.f32 %v5153, 0.0
        %v5162 = vmax.f32 %v5154, 0.0
        %v5163 = vmax.f32 %v5155, 0.0
        %v5164 = vmax.f32 %v5156, 0.0
        %v5165 = vmax.f32 %v5157, 0.0
        %v5166 = vmax.f32 %v5158, 0.0
        %v5167 = vmax.f32 %v5159, 0.0
        %v5168 = vmax.f32 %v5160, 0.0
        %5169 = vset.pattern.permute.xlu0 56
        %5170 = vperm.xlu0 %5169, %v245
        %v5171 = vpop.permute.xlu0 %5170
        %5173 = vset.pattern.permute.xlu0 56
        %5174 = vperm.xlu0 %5173, %v246
        %v5175 = vpop.permute.xlu0 %5174
        %5177 = vset.pattern.permute.xlu0 56
        %5178 = vperm.xlu0 %5177, %v247
        %v5179 = vpop.permute.xlu0 %5178
        %5181 = vset.pattern.permute.xlu0 56
        %5182 = vperm.xlu0 %5181, %v248
        %v5183 = vpop.permute.xlu0 %5182
        %5185 = vset.pattern.permute.xlu0 56
        %5186 = vperm.xlu0 %5185, %v249
        %v5187 = vpop.permute.xlu0 %5186
        %5189 = vset.pattern.permute.xlu0 56
        %5190 = vperm.xlu0 %5189, %v250
        %v5191 = vpop.permute.xlu0 %5190
        %5193 = vset.pattern.permute.xlu0 56
        %5194 = vperm.xlu0 %5193, %v251
        %v5195 = vpop.permute.xlu0 %5194
        %5197 = vset.pattern.permute.xlu0 56
        %5198 = vperm.xlu0 %5197, %v252
        %v5199 = vpop.permute.xlu0 %5198
        %v5201 = vmul.f32 %v5161, %v5171
        %v5202 = vmul.f32 %v5162, %v5175
        %v5203 = vmul.f32 %v5163, %v5179
        %v5204 = vmul.f32 %v5164, %v5183
        %v5205 = vmul.f32 %v5165, %v5187
        %v5206 = vmul.f32 %v5166, %v5191
        %v5207 = vmul.f32 %v5167, %v5195
        %v5208 = vmul.f32 %v5168, %v5199
        %v5209 = vadd.f32 %v5129, %v5201
        %v5210 = vadd.f32 %v5130, %v5202
        %v5211 = vadd.f32 %v5131, %v5203
        %v5212 = vadd.f32 %v5132, %v5204
        %v5213 = vadd.f32 %v5133, %v5205
        %v5214 = vadd.f32 %v5134, %v5206
        %v5215 = vadd.f32 %v5135, %v5207
        %v5216 = vadd.f32 %v5136, %v5208
        %v5217 = vsub.f32 %v649, 57.0
        %v5218 = vsub.f32 %v650, 57.0
        %v5219 = vsub.f32 %v651, 57.0
        %v5220 = vsub.f32 %v652, 57.0
        %v5221 = vsub.f32 %v653, 57.0
        %v5222 = vsub.f32 %v654, 57.0
        %v5223 = vsub.f32 %v655, 57.0
        %v5224 = vsub.f32 %v656, 57.0
        %v5225 = vand.u32 2147483647, %v5217
        %v5226 = vand.u32 2147483647, %v5218
        %v5227 = vand.u32 2147483647, %v5219
        %v5228 = vand.u32 2147483647, %v5220
        %v5229 = vand.u32 2147483647, %v5221
        %v5230 = vand.u32 2147483647, %v5222
        %v5231 = vand.u32 2147483647, %v5223
        %v5232 = vand.u32 2147483647, %v5224
        %v5233 = vsub.f32 1.0, %v5225
        %v5234 = vsub.f32 1.0, %v5226
        %v5235 = vsub.f32 1.0, %v5227
        %v5236 = vsub.f32 1.0, %v5228
        %v5237 = vsub.f32 1.0, %v5229
        %v5238 = vsub.f32 1.0, %v5230
        %v5239 = vsub.f32 1.0, %v5231
        %v5240 = vsub.f32 1.0, %v5232
        %v5241 = vmax.f32 %v5233, 0.0
        %v5242 = vmax.f32 %v5234, 0.0
        %v5243 = vmax.f32 %v5235, 0.0
        %v5244 = vmax.f32 %v5236, 0.0
        %v5245 = vmax.f32 %v5237, 0.0
        %v5246 = vmax.f32 %v5238, 0.0
        %v5247 = vmax.f32 %v5239, 0.0
        %v5248 = vmax.f32 %v5240, 0.0
        %5249 = vset.pattern.permute.xlu0 57
        %5250 = vperm.xlu0 %5249, %v245
        %v5251 = vpop.permute.xlu0 %5250
        %5253 = vset.pattern.permute.xlu0 57
        %5254 = vperm.xlu0 %5253, %v246
        %v5255 = vpop.permute.xlu0 %5254
        %5257 = vset.pattern.permute.xlu0 57
        %5258 = vperm.xlu0 %5257, %v247
        %v5259 = vpop.permute.xlu0 %5258
        %5261 = vset.pattern.permute.xlu0 57
        %5262 = vperm.xlu0 %5261, %v248
        %v5263 = vpop.permute.xlu0 %5262
        %5265 = vset.pattern.permute.xlu0 57
        %5266 = vperm.xlu0 %5265, %v249
        %v5267 = vpop.permute.xlu0 %5266
        %5269 = vset.pattern.permute.xlu0 57
        %5270 = vperm.xlu0 %5269, %v250
        %v5271 = vpop.permute.xlu0 %5270
        %5273 = vset.pattern.permute.xlu0 57
        %5274 = vperm.xlu0 %5273, %v251
        %v5275 = vpop.permute.xlu0 %5274
        %5277 = vset.pattern.permute.xlu0 57
        %5278 = vperm.xlu0 %5277, %v252
        %v5279 = vpop.permute.xlu0 %5278
        %v5281 = vmul.f32 %v5241, %v5251
        %v5282 = vmul.f32 %v5242, %v5255
        %v5283 = vmul.f32 %v5243, %v5259
        %v5284 = vmul.f32 %v5244, %v5263
        %v5285 = vmul.f32 %v5245, %v5267
        %v5286 = vmul.f32 %v5246, %v5271
        %v5287 = vmul.f32 %v5247, %v5275
        %v5288 = vmul.f32 %v5248, %v5279
        %v5289 = vadd.f32 %v5209, %v5281
        %v5290 = vadd.f32 %v5210, %v5282
        %v5291 = vadd.f32 %v5211, %v5283
        %v5292 = vadd.f32 %v5212, %v5284
        %v5293 = vadd.f32 %v5213, %v5285
        %v5294 = vadd.f32 %v5214, %v5286
        %v5295 = vadd.f32 %v5215, %v5287
        %v5296 = vadd.f32 %v5216, %v5288
        %v5297 = vsub.f32 %v649, 58.0
        %v5298 = vsub.f32 %v650, 58.0
        %v5299 = vsub.f32 %v651, 58.0
        %v5300 = vsub.f32 %v652, 58.0
        %v5301 = vsub.f32 %v653, 58.0
        %v5302 = vsub.f32 %v654, 58.0
        %v5303 = vsub.f32 %v655, 58.0
        %v5304 = vsub.f32 %v656, 58.0
        %v5305 = vand.u32 2147483647, %v5297
        %v5306 = vand.u32 2147483647, %v5298
        %v5307 = vand.u32 2147483647, %v5299
        %v5308 = vand.u32 2147483647, %v5300
        %v5309 = vand.u32 2147483647, %v5301
        %v5310 = vand.u32 2147483647, %v5302
        %v5311 = vand.u32 2147483647, %v5303
        %v5312 = vand.u32 2147483647, %v5304
        %v5313 = vsub.f32 1.0, %v5305
        %v5314 = vsub.f32 1.0, %v5306
        %v5315 = vsub.f32 1.0, %v5307
        %v5316 = vsub.f32 1.0, %v5308
        %v5317 = vsub.f32 1.0, %v5309
        %v5318 = vsub.f32 1.0, %v5310
        %v5319 = vsub.f32 1.0, %v5311
        %v5320 = vsub.f32 1.0, %v5312
        %v5321 = vmax.f32 %v5313, 0.0
        %v5322 = vmax.f32 %v5314, 0.0
        %v5323 = vmax.f32 %v5315, 0.0
        %v5324 = vmax.f32 %v5316, 0.0
        %v5325 = vmax.f32 %v5317, 0.0
        %v5326 = vmax.f32 %v5318, 0.0
        %v5327 = vmax.f32 %v5319, 0.0
        %v5328 = vmax.f32 %v5320, 0.0
        %5329 = vset.pattern.permute.xlu0 58
        %5330 = vperm.xlu0 %5329, %v245
        %v5331 = vpop.permute.xlu0 %5330
        %5333 = vset.pattern.permute.xlu0 58
        %5334 = vperm.xlu0 %5333, %v246
        %v5335 = vpop.permute.xlu0 %5334
        %5337 = vset.pattern.permute.xlu0 58
        %5338 = vperm.xlu0 %5337, %v247
        %v5339 = vpop.permute.xlu0 %5338
        %5341 = vset.pattern.permute.xlu0 58
        %5342 = vperm.xlu0 %5341, %v248
        %v5343 = vpop.permute.xlu0 %5342
        %5345 = vset.pattern.permute.xlu0 58
        %5346 = vperm.xlu0 %5345, %v249
        %v5347 = vpop.permute.xlu0 %5346
        %5349 = vset.pattern.permute.xlu0 58
        %5350 = vperm.xlu0 %5349, %v250
        %v5351 = vpop.permute.xlu0 %5350
        %5353 = vset.pattern.permute.xlu0 58
        %5354 = vperm.xlu0 %5353, %v251
        %v5355 = vpop.permute.xlu0 %5354
        %5357 = vset.pattern.permute.xlu0 58
        %5358 = vperm.xlu0 %5357, %v252
        %v5359 = vpop.permute.xlu0 %5358
        %v5361 = vmul.f32 %v5321, %v5331
        %v5362 = vmul.f32 %v5322, %v5335
        %v5363 = vmul.f32 %v5323, %v5339
        %v5364 = vmul.f32 %v5324, %v5343
        %v5365 = vmul.f32 %v5325, %v5347
        %v5366 = vmul.f32 %v5326, %v5351
        %v5367 = vmul.f32 %v5327, %v5355
        %v5368 = vmul.f32 %v5328, %v5359
        %v5369 = vadd.f32 %v5289, %v5361
        %v5370 = vadd.f32 %v5290, %v5362
        %v5371 = vadd.f32 %v5291, %v5363
        %v5372 = vadd.f32 %v5292, %v5364
        %v5373 = vadd.f32 %v5293, %v5365
        %v5374 = vadd.f32 %v5294, %v5366
        %v5375 = vadd.f32 %v5295, %v5367
        %v5376 = vadd.f32 %v5296, %v5368
        %v5377 = vsub.f32 %v649, 59.0
        %v5378 = vsub.f32 %v650, 59.0
        %v5379 = vsub.f32 %v651, 59.0
        %v5380 = vsub.f32 %v652, 59.0
        %v5381 = vsub.f32 %v653, 59.0
        %v5382 = vsub.f32 %v654, 59.0
        %v5383 = vsub.f32 %v655, 59.0
        %v5384 = vsub.f32 %v656, 59.0
        %v5385 = vand.u32 2147483647, %v5377
        %v5386 = vand.u32 2147483647, %v5378
        %v5387 = vand.u32 2147483647, %v5379
        %v5388 = vand.u32 2147483647, %v5380
        %v5389 = vand.u32 2147483647, %v5381
        %v5390 = vand.u32 2147483647, %v5382
        %v5391 = vand.u32 2147483647, %v5383
        %v5392 = vand.u32 2147483647, %v5384
        %v5393 = vsub.f32 1.0, %v5385
        %v5394 = vsub.f32 1.0, %v5386
        %v5395 = vsub.f32 1.0, %v5387
        %v5396 = vsub.f32 1.0, %v5388
        %v5397 = vsub.f32 1.0, %v5389
        %v5398 = vsub.f32 1.0, %v5390
        %v5399 = vsub.f32 1.0, %v5391
        %v5400 = vsub.f32 1.0, %v5392
        %v5401 = vmax.f32 %v5393, 0.0
        %v5402 = vmax.f32 %v5394, 0.0
        %v5403 = vmax.f32 %v5395, 0.0
        %v5404 = vmax.f32 %v5396, 0.0
        %v5405 = vmax.f32 %v5397, 0.0
        %v5406 = vmax.f32 %v5398, 0.0
        %v5407 = vmax.f32 %v5399, 0.0
        %v5408 = vmax.f32 %v5400, 0.0
        %5409 = vset.pattern.permute.xlu0 59
        %5410 = vperm.xlu0 %5409, %v245
        %v5411 = vpop.permute.xlu0 %5410
        %5413 = vset.pattern.permute.xlu0 59
        %5414 = vperm.xlu0 %5413, %v246
        %v5415 = vpop.permute.xlu0 %5414
        %5417 = vset.pattern.permute.xlu0 59
        %5418 = vperm.xlu0 %5417, %v247
        %v5419 = vpop.permute.xlu0 %5418
        %5421 = vset.pattern.permute.xlu0 59
        %5422 = vperm.xlu0 %5421, %v248
        %v5423 = vpop.permute.xlu0 %5422
        %5425 = vset.pattern.permute.xlu0 59
        %5426 = vperm.xlu0 %5425, %v249
        %v5427 = vpop.permute.xlu0 %5426
        %5429 = vset.pattern.permute.xlu0 59
        %5430 = vperm.xlu0 %5429, %v250
        %v5431 = vpop.permute.xlu0 %5430
        %5433 = vset.pattern.permute.xlu0 59
        %5434 = vperm.xlu0 %5433, %v251
        %v5435 = vpop.permute.xlu0 %5434
        %5437 = vset.pattern.permute.xlu0 59
        %5438 = vperm.xlu0 %5437, %v252
        %v5439 = vpop.permute.xlu0 %5438
        %v5441 = vmul.f32 %v5401, %v5411
        %v5442 = vmul.f32 %v5402, %v5415
        %v5443 = vmul.f32 %v5403, %v5419
        %v5444 = vmul.f32 %v5404, %v5423
        %v5445 = vmul.f32 %v5405, %v5427
        %v5446 = vmul.f32 %v5406, %v5431
        %v5447 = vmul.f32 %v5407, %v5435
        %v5448 = vmul.f32 %v5408, %v5439
        %v5449 = vadd.f32 %v5369, %v5441
        %v5450 = vadd.f32 %v5370, %v5442
        %v5451 = vadd.f32 %v5371, %v5443
        %v5452 = vadd.f32 %v5372, %v5444
        %v5453 = vadd.f32 %v5373, %v5445
        %v5454 = vadd.f32 %v5374, %v5446
        %v5455 = vadd.f32 %v5375, %v5447
        %v5456 = vadd.f32 %v5376, %v5448
        %v5457 = vsub.f32 %v649, 60.0
        %v5458 = vsub.f32 %v650, 60.0
        %v5459 = vsub.f32 %v651, 60.0
        %v5460 = vsub.f32 %v652, 60.0
        %v5461 = vsub.f32 %v653, 60.0
        %v5462 = vsub.f32 %v654, 60.0
        %v5463 = vsub.f32 %v655, 60.0
        %v5464 = vsub.f32 %v656, 60.0
        %v5465 = vand.u32 2147483647, %v5457
        %v5466 = vand.u32 2147483647, %v5458
        %v5467 = vand.u32 2147483647, %v5459
        %v5468 = vand.u32 2147483647, %v5460
        %v5469 = vand.u32 2147483647, %v5461
        %v5470 = vand.u32 2147483647, %v5462
        %v5471 = vand.u32 2147483647, %v5463
        %v5472 = vand.u32 2147483647, %v5464
        %v5473 = vsub.f32 1.0, %v5465
        %v5474 = vsub.f32 1.0, %v5466
        %v5475 = vsub.f32 1.0, %v5467
        %v5476 = vsub.f32 1.0, %v5468
        %v5477 = vsub.f32 1.0, %v5469
        %v5478 = vsub.f32 1.0, %v5470
        %v5479 = vsub.f32 1.0, %v5471
        %v5480 = vsub.f32 1.0, %v5472
        %v5481 = vmax.f32 %v5473, 0.0
        %v5482 = vmax.f32 %v5474, 0.0
        %v5483 = vmax.f32 %v5475, 0.0
        %v5484 = vmax.f32 %v5476, 0.0
        %v5485 = vmax.f32 %v5477, 0.0
        %v5486 = vmax.f32 %v5478, 0.0
        %v5487 = vmax.f32 %v5479, 0.0
        %v5488 = vmax.f32 %v5480, 0.0
        %5489 = vset.pattern.permute.xlu0 60
        %5490 = vperm.xlu0 %5489, %v245
        %v5491 = vpop.permute.xlu0 %5490
        %5493 = vset.pattern.permute.xlu0 60
        %5494 = vperm.xlu0 %5493, %v246
        %v5495 = vpop.permute.xlu0 %5494
        %5497 = vset.pattern.permute.xlu0 60
        %5498 = vperm.xlu0 %5497, %v247
        %v5499 = vpop.permute.xlu0 %5498
        %5501 = vset.pattern.permute.xlu0 60
        %5502 = vperm.xlu0 %5501, %v248
        %v5503 = vpop.permute.xlu0 %5502
        %5505 = vset.pattern.permute.xlu0 60
        %5506 = vperm.xlu0 %5505, %v249
        %v5507 = vpop.permute.xlu0 %5506
        %5509 = vset.pattern.permute.xlu0 60
        %5510 = vperm.xlu0 %5509, %v250
        %v5511 = vpop.permute.xlu0 %5510
        %5513 = vset.pattern.permute.xlu0 60
        %5514 = vperm.xlu0 %5513, %v251
        %v5515 = vpop.permute.xlu0 %5514
        %5517 = vset.pattern.permute.xlu0 60
        %5518 = vperm.xlu0 %5517, %v252
        %v5519 = vpop.permute.xlu0 %5518
        %v5521 = vmul.f32 %v5481, %v5491
        %v5522 = vmul.f32 %v5482, %v5495
        %v5523 = vmul.f32 %v5483, %v5499
        %v5524 = vmul.f32 %v5484, %v5503
        %v5525 = vmul.f32 %v5485, %v5507
        %v5526 = vmul.f32 %v5486, %v5511
        %v5527 = vmul.f32 %v5487, %v5515
        %v5528 = vmul.f32 %v5488, %v5519
        %v5529 = vadd.f32 %v5449, %v5521
        %v5530 = vadd.f32 %v5450, %v5522
        %v5531 = vadd.f32 %v5451, %v5523
        %v5532 = vadd.f32 %v5452, %v5524
        %v5533 = vadd.f32 %v5453, %v5525
        %v5534 = vadd.f32 %v5454, %v5526
        %v5535 = vadd.f32 %v5455, %v5527
        %v5536 = vadd.f32 %v5456, %v5528
        %v5537 = vsub.f32 %v649, 61.0
        %v5538 = vsub.f32 %v650, 61.0
        %v5539 = vsub.f32 %v651, 61.0
        %v5540 = vsub.f32 %v652, 61.0
        %v5541 = vsub.f32 %v653, 61.0
        %v5542 = vsub.f32 %v654, 61.0
        %v5543 = vsub.f32 %v655, 61.0
        %v5544 = vsub.f32 %v656, 61.0
        %v5545 = vand.u32 2147483647, %v5537
        %v5546 = vand.u32 2147483647, %v5538
        %v5547 = vand.u32 2147483647, %v5539
        %v5548 = vand.u32 2147483647, %v5540
        %v5549 = vand.u32 2147483647, %v5541
        %v5550 = vand.u32 2147483647, %v5542
        %v5551 = vand.u32 2147483647, %v5543
        %v5552 = vand.u32 2147483647, %v5544
        %v5553 = vsub.f32 1.0, %v5545
        %v5554 = vsub.f32 1.0, %v5546
        %v5555 = vsub.f32 1.0, %v5547
        %v5556 = vsub.f32 1.0, %v5548
        %v5557 = vsub.f32 1.0, %v5549
        %v5558 = vsub.f32 1.0, %v5550
        %v5559 = vsub.f32 1.0, %v5551
        %v5560 = vsub.f32 1.0, %v5552
        %v5561 = vmax.f32 %v5553, 0.0
        %v5562 = vmax.f32 %v5554, 0.0
        %v5563 = vmax.f32 %v5555, 0.0
        %v5564 = vmax.f32 %v5556, 0.0
        %v5565 = vmax.f32 %v5557, 0.0
        %v5566 = vmax.f32 %v5558, 0.0
        %v5567 = vmax.f32 %v5559, 0.0
        %v5568 = vmax.f32 %v5560, 0.0
        %5569 = vset.pattern.permute.xlu0 61
        %5570 = vperm.xlu0 %5569, %v245
        %v5571 = vpop.permute.xlu0 %5570
        %5573 = vset.pattern.permute.xlu0 61
        %5574 = vperm.xlu0 %5573, %v246
        %v5575 = vpop.permute.xlu0 %5574
        %5577 = vset.pattern.permute.xlu0 61
        %5578 = vperm.xlu0 %5577, %v247
        %v5579 = vpop.permute.xlu0 %5578
        %5581 = vset.pattern.permute.xlu0 61
        %5582 = vperm.xlu0 %5581, %v248
        %v5583 = vpop.permute.xlu0 %5582
        %5585 = vset.pattern.permute.xlu0 61
        %5586 = vperm.xlu0 %5585, %v249
        %v5587 = vpop.permute.xlu0 %5586
        %5589 = vset.pattern.permute.xlu0 61
        %5590 = vperm.xlu0 %5589, %v250
        %v5591 = vpop.permute.xlu0 %5590
        %5593 = vset.pattern.permute.xlu0 61
        %5594 = vperm.xlu0 %5593, %v251
        %v5595 = vpop.permute.xlu0 %5594
        %5597 = vset.pattern.permute.xlu0 61
        %5598 = vperm.xlu0 %5597, %v252
        %v5599 = vpop.permute.xlu0 %5598
        %v5601 = vmul.f32 %v5561, %v5571
        %v5602 = vmul.f32 %v5562, %v5575
        %v5603 = vmul.f32 %v5563, %v5579
        %v5604 = vmul.f32 %v5564, %v5583
        %v5605 = vmul.f32 %v5565, %v5587
        %v5606 = vmul.f32 %v5566, %v5591
        %v5607 = vmul.f32 %v5567, %v5595
        %v5608 = vmul.f32 %v5568, %v5599
        %v5609 = vadd.f32 %v5529, %v5601
        %v5610 = vadd.f32 %v5530, %v5602
        %v5611 = vadd.f32 %v5531, %v5603
        %v5612 = vadd.f32 %v5532, %v5604
        %v5613 = vadd.f32 %v5533, %v5605
        %v5614 = vadd.f32 %v5534, %v5606
        %v5615 = vadd.f32 %v5535, %v5607
        %v5616 = vadd.f32 %v5536, %v5608
        %v5617 = vsub.f32 %v649, 62.0
        %v5618 = vsub.f32 %v650, 62.0
        %v5619 = vsub.f32 %v651, 62.0
        %v5620 = vsub.f32 %v652, 62.0
        %v5621 = vsub.f32 %v653, 62.0
        %v5622 = vsub.f32 %v654, 62.0
        %v5623 = vsub.f32 %v655, 62.0
        %v5624 = vsub.f32 %v656, 62.0
        %v5625 = vand.u32 2147483647, %v5617
        %v5626 = vand.u32 2147483647, %v5618
        %v5627 = vand.u32 2147483647, %v5619
        %v5628 = vand.u32 2147483647, %v5620
        %v5629 = vand.u32 2147483647, %v5621
        %v5630 = vand.u32 2147483647, %v5622
        %v5631 = vand.u32 2147483647, %v5623
        %v5632 = vand.u32 2147483647, %v5624
        %v5633 = vsub.f32 1.0, %v5625
        %v5634 = vsub.f32 1.0, %v5626
        %v5635 = vsub.f32 1.0, %v5627
        %v5636 = vsub.f32 1.0, %v5628
        %v5637 = vsub.f32 1.0, %v5629
        %v5638 = vsub.f32 1.0, %v5630
        %v5639 = vsub.f32 1.0, %v5631
        %v5640 = vsub.f32 1.0, %v5632
        %v5641 = vmax.f32 %v5633, 0.0
        %v5642 = vmax.f32 %v5634, 0.0
        %v5643 = vmax.f32 %v5635, 0.0
        %v5644 = vmax.f32 %v5636, 0.0
        %v5645 = vmax.f32 %v5637, 0.0
        %v5646 = vmax.f32 %v5638, 0.0
        %v5647 = vmax.f32 %v5639, 0.0
        %v5648 = vmax.f32 %v5640, 0.0
        %5649 = vset.pattern.permute.xlu0 62
        %5650 = vperm.xlu0 %5649, %v245
        %v5651 = vpop.permute.xlu0 %5650
        %5653 = vset.pattern.permute.xlu0 62
        %5654 = vperm.xlu0 %5653, %v246
        %v5655 = vpop.permute.xlu0 %5654
        %5657 = vset.pattern.permute.xlu0 62
        %5658 = vperm.xlu0 %5657, %v247
        %v5659 = vpop.permute.xlu0 %5658
        %5661 = vset.pattern.permute.xlu0 62
        %5662 = vperm.xlu0 %5661, %v248
        %v5663 = vpop.permute.xlu0 %5662
        %5665 = vset.pattern.permute.xlu0 62
        %5666 = vperm.xlu0 %5665, %v249
        %v5667 = vpop.permute.xlu0 %5666
        %5669 = vset.pattern.permute.xlu0 62
        %5670 = vperm.xlu0 %5669, %v250
        %v5671 = vpop.permute.xlu0 %5670
        %5673 = vset.pattern.permute.xlu0 62
        %5674 = vperm.xlu0 %5673, %v251
        %v5675 = vpop.permute.xlu0 %5674
        %5677 = vset.pattern.permute.xlu0 62
        %5678 = vperm.xlu0 %5677, %v252
        %v5679 = vpop.permute.xlu0 %5678
        %v5681 = vmul.f32 %v5641, %v5651
        %v5682 = vmul.f32 %v5642, %v5655
        %v5683 = vmul.f32 %v5643, %v5659
        %v5684 = vmul.f32 %v5644, %v5663
        %v5685 = vmul.f32 %v5645, %v5667
        %v5686 = vmul.f32 %v5646, %v5671
        %v5687 = vmul.f32 %v5647, %v5675
        %v5688 = vmul.f32 %v5648, %v5679
        %v5689 = vadd.f32 %v5609, %v5681
        %v5690 = vadd.f32 %v5610, %v5682
        %v5691 = vadd.f32 %v5611, %v5683
        %v5692 = vadd.f32 %v5612, %v5684
        %v5693 = vadd.f32 %v5613, %v5685
        %v5694 = vadd.f32 %v5614, %v5686
        %v5695 = vadd.f32 %v5615, %v5687
        %v5696 = vadd.f32 %v5616, %v5688
        %v5697 = vsub.f32 %v649, 63.0
        %v5698 = vsub.f32 %v650, 63.0
        %v5699 = vsub.f32 %v651, 63.0
        %v5700 = vsub.f32 %v652, 63.0
        %v5701 = vsub.f32 %v653, 63.0
        %v5702 = vsub.f32 %v654, 63.0
        %v5703 = vsub.f32 %v655, 63.0
        %v5704 = vsub.f32 %v656, 63.0
        %v5705 = vand.u32 2147483647, %v5697
        %v5706 = vand.u32 2147483647, %v5698
        %v5707 = vand.u32 2147483647, %v5699
        %v5708 = vand.u32 2147483647, %v5700
        %v5709 = vand.u32 2147483647, %v5701
        %v5710 = vand.u32 2147483647, %v5702
        %v5711 = vand.u32 2147483647, %v5703
        %v5712 = vand.u32 2147483647, %v5704
        %v5713 = vsub.f32 1.0, %v5705
        %v5714 = vsub.f32 1.0, %v5706
        %v5715 = vsub.f32 1.0, %v5707
        %v5716 = vsub.f32 1.0, %v5708
        %v5717 = vsub.f32 1.0, %v5709
        %v5718 = vsub.f32 1.0, %v5710
        %v5719 = vsub.f32 1.0, %v5711
        %v5720 = vsub.f32 1.0, %v5712
        %v5721 = vmax.f32 %v5713, 0.0
        %v5722 = vmax.f32 %v5714, 0.0
        %v5723 = vmax.f32 %v5715, 0.0
        %v5724 = vmax.f32 %v5716, 0.0
        %v5725 = vmax.f32 %v5717, 0.0
        %v5726 = vmax.f32 %v5718, 0.0
        %v5727 = vmax.f32 %v5719, 0.0
        %v5728 = vmax.f32 %v5720, 0.0
        %5729 = vset.pattern.permute.xlu0 63
        %5730 = vperm.xlu0 %5729, %v245
        %v5731 = vpop.permute.xlu0 %5730
        %5733 = vset.pattern.permute.xlu0 63
        %5734 = vperm.xlu0 %5733, %v246
        %v5735 = vpop.permute.xlu0 %5734
        %5737 = vset.pattern.permute.xlu0 63
        %5738 = vperm.xlu0 %5737, %v247
        %v5739 = vpop.permute.xlu0 %5738
        %5741 = vset.pattern.permute.xlu0 63
        %5742 = vperm.xlu0 %5741, %v248
        %v5743 = vpop.permute.xlu0 %5742
        %5745 = vset.pattern.permute.xlu0 63
        %5746 = vperm.xlu0 %5745, %v249
        %v5747 = vpop.permute.xlu0 %5746
        %5749 = vset.pattern.permute.xlu0 63
        %5750 = vperm.xlu0 %5749, %v250
        %v5751 = vpop.permute.xlu0 %5750
        %5753 = vset.pattern.permute.xlu0 63
        %5754 = vperm.xlu0 %5753, %v251
        %v5755 = vpop.permute.xlu0 %5754
        %5757 = vset.pattern.permute.xlu0 63
        %5758 = vperm.xlu0 %5757, %v252
        %v5759 = vpop.permute.xlu0 %5758
        %v5761 = vmul.f32 %v5721, %v5731
        %v5762 = vmul.f32 %v5722, %v5735
        %v5763 = vmul.f32 %v5723, %v5739
        %v5764 = vmul.f32 %v5724, %v5743
        %v5765 = vmul.f32 %v5725, %v5747
        %v5766 = vmul.f32 %v5726, %v5751
        %v5767 = vmul.f32 %v5727, %v5755
        %v5768 = vmul.f32 %v5728, %v5759
        %v5769 = vadd.f32 %v5689, %v5761
        %v5770 = vadd.f32 %v5690, %v5762
        %v5771 = vadd.f32 %v5691, %v5763
        %v5772 = vadd.f32 %v5692, %v5764
        %v5773 = vadd.f32 %v5693, %v5765
        %v5774 = vadd.f32 %v5694, %v5766
        %v5775 = vadd.f32 %v5695, %v5767
        %v5776 = vadd.f32 %v5696, %v5768
        %v5777 = vadd.f32 %v237, %v5769
        %v5778 = vadd.f32 %v238, %v5770
        %v5779 = vadd.f32 %v239, %v5771
        %v5780 = vadd.f32 %v240, %v5772
        %v5781 = vadd.f32 %v241, %v5773
        %v5782 = vadd.f32 %v242, %v5774
        %v5783 = vadd.f32 %v243, %v5775
        %v5784 = vadd.f32 %v244, %v5776
        %5785 = vst [vmem:[%s214] sm:$0xff] %v5777
        %5786 = vst [vmem:[%s214 + $0x8] sm:$0xff] %v5778
        %5787 = vst [vmem:[%s214 + $0x10] sm:$0xff] %v5779
        %5788 = vst [vmem:[%s214 + $0x18] sm:$0xff] %v5780
        %5789 = vst [vmem:[%s214 + $0x20] sm:$0xff] %v5781
        %5790 = vst [vmem:[%s214 + $0x28] sm:$0xff] %v5782
        %5791 = vst [vmem:[%s214 + $0x30] sm:$0xff] %v5783
        %5792 = vst [vmem:[%s214 + $0x38] sm:$0xff] %v5784
        %s5793 = sand.u32 %s116, 1
        %s5794 = scalar_lea.sflag [#allocation3], %s5793
        %s5795 = sand.u32 %s116, 1
        %s5796 = smul.addr %s5795, 64
        %s5797 = scalar_lea.vmem [#allocation2], %s5796
        // Predicated region
        $region33: #{tpu_custom_call.1} parent=31 // pred_check
          %p5798 = pneg %p126
        $region34: #{tpu_custom_call.1} parent=31 // pred_check_branch
          %5800 = sbr.rel (%p5798) target = $region36
        $region35: #{tpu_custom_call.1} parent=31 // pred_region
          %s5801 = smul.u32 8, %s22
          %s5803 = ssub.s32 1024, 1024
          %5804 = vsyncadd %s5794, %s5803
          %s5805 = smul.addr %s21, 16
          %s5806 = sadd.s32 %s5801, %s5805
          %s5807 = smul.addr %s5806, 128
          %s5808 = scalar_lea.hbm %s3, %s5807
          %s5809 = sshll.u32 %s5797, 4
          %s5810 = int_to_ptr.vmem [resolvable:$true] %s5809
          %5815 = dma.vmem_to_hbm [thread:$0]  %s5810, 1024, %s5808, %s5794, 128, 128, 8
        $region36: #{tpu_custom_call.1} parent=31 // pred_fallthru
          _
      $region32: #{tpu_custom_call.1} parent=5 // pred_fallthru
        _
      %p5816 = scmp.le.s32.totalorder 2, %s12
      // Predicated region
      $region37: #{tpu_custom_call.1} parent=5 // pred_check
        %p5817 = pneg %p5816
      $region38: #{tpu_custom_call.1} parent=5 // pred_check_branch
        %5819 = sbr.rel (%p5817) target = $region40
      $region39: #{tpu_custom_call.1} parent=5 // pred_region
        %s5820 = ssub.s32 %s12, 2
        // Predicated region
        $region41: #{tpu_custom_call.1} parent=39 // pred_check
          %p5821 = pneg %p132
        $region42: #{tpu_custom_call.1} parent=39 // pred_check_branch
          %5823 = sbr.rel (%p5821) target = $region44
        $region43: #{tpu_custom_call.1} parent=39 // pred_region
          %s5824 = sand.u32 %s117, 1
          %s5825 = scalar_lea.sflag [#allocation3], %s5824
          %s5826 = sand.u32 %s117, 1
          %s5827 = smul.addr %s5826, 64
          %s5828 = scalar_lea.vmem [#allocation2], %s5827
          %5829 = dma.done %s5825, 1024
        $region44: #{tpu_custom_call.1} parent=39 // pred_fallthru
          _
      $region40: #{tpu_custom_call.1} parent=5 // pred_fallthru
        _
    $region6: #{tpu_custom_call.1} parent=1 // loop_footer
      %s16 = sadd.s32 1, %s12
    $region7: #{tpu_custom_call.1} parent=1 // loop_footer_branch
      %11 = sbr.rel target = $region3
    $region8: #{tpu_custom_call.1} parent=1 // loop_exit
      _
    %5830 = vsyncpa [#allocation3], 1
    %s5831 = scalar_lea.sflag [#allocation3], 1
    %5832 = vsyncpa %s5831, 1

</llo_original>
